<compile_context>
chip_gen: v7x
topology: tpu7x:2x2x1
jax: 0.10.0
libtpu: 0.0.40
codegen_flags: <defaults>
</compile_context>

<pallas_src>
import functools
import math

import jax
import jax.numpy as jnp
from jax.experimental import pallas as pl
from jax.experimental.pallas import tpu as pltpu


# ------------------------------ helpers ------------------------------

def _round_up(x, m):
    return (x + m - 1) // m * m


def _pad_channels(x, c_target):
    pad = c_target - x.shape[-1]
    if pad == 0:
        return x
    cfg = [(0, 0)] * (x.ndim - 1) + [(0, pad)]
    return jnp.pad(x, cfg)


def _apply_act(y, act):
    if act == "relu":
        return jnp.maximum(y, 0.0)
    return y


@functools.lru_cache(maxsize=None)
def _vmem_limit_bytes():
    # ~3/4 of physical VMEM: ~48 MiB on v7x (64 MiB), ~96 MiB on v5e/v6e (128 MiB).
    try:
        cap = int(getattr(pltpu.get_tpu_info(), "vmem_capacity_bytes", 0))
        if cap > 0:
            return min(max((cap * 3) // 4, 32 << 20), 100 << 20)
    except Exception:
        pass
    return 48 << 20   # safe fallback (fits v7x)


def _choose_tm(m):
    # Largest tile that still yields >= 2 M tiles (keeps both v7x TCs busy and
    # amortizes per-grid-step overhead).  Ragged last blocks are fine (pl.cdiv grid).
    for t in (1024, 512, 256, 128):
        if m >= 2 * t:
            return t
    return min(128, _round_up(max(m, 8), 8))


def _choose_tk(k):
    for t in (512, 256):
        if k % t == 0:
            return t
    return 128


def _choose_tn(np_):
    return 256 if (np_ % 256 == 0 and np_ >= 256) else 128


def _choose_th(h_out, w_out, row_cap=512):
    """Row-tile height for the 3x3 conv: divisor of h_out, tile <= row_cap rows,
    prefer >=2 tiles (megacore) when the tile is still reasonably sized."""
    cap = max(1, row_cap // max(w_out, 1))
    divs = [t for t in range(1, h_out + 1) if h_out % t == 0 and t <= cap]
    if not divs:
        return 1
    multi = [t for t in divs if h_out // t >= 2 and t * w_out >= 64]
    return max(multi) if multi else max(divs)


# ------------------------- fused matmul (1x1 convs) -------------------------

def _mm_bias_kernel(a_ref, b_ref, bias_ref, o_ref, acc_ref, *, act):
    k = pl.program_id(2)

    @pl.when(k == 0)
    def _():
        acc_ref[...] = jnp.zeros_like(acc_ref)

    acc_ref[...] += jnp.dot(a_ref[...], b_ref[...],
                            preferred_element_type=jnp.float32)

    @pl.when(k == pl.num_programs(2) - 1)
    def _():
        y = acc_ref[...] + bias_ref[...]
        o_ref[...] = _apply_act(y, act).astype(o_ref.dtype)


def _mm_bias_res_kernel(a_ref, b_ref, bias_ref, r_ref, o_ref, acc_ref, *, act):
    k = pl.program_id(2)

    @pl.when(k == 0)
    def _():
        acc_ref[...] = jnp.zeros_like(acc_ref)

    acc_ref[...] += jnp.dot(a_ref[...], b_ref[...],
                            preferred_element_type=jnp.float32)

    @pl.when(k == pl.num_programs(2) - 1)
    def _():
        y = acc_ref[...] + bias_ref[...] + r_ref[...].astype(jnp.float32)
        o_ref[...] = _apply_act(y, act).astype(o_ref.dtype)


def fused_matmul(a, b, bias, residual=None, act="none", out_dtype=jnp.bfloat16):
    """out = act(a @ b + bias [+ residual]); K, N channel-padded to 128-multiples."""
    M, K = a.shape
    K2, Np = b.shape
    assert K == K2 and K % 128 == 0 and Np % 128 == 0

    tm = _choose_tm(M)
    tn = _choose_tn(Np)
    tk = _choose_tk(K)

    a = a.astype(jnp.bfloat16)
    b = b.astype(jnp.bfloat16)
    bias = bias.reshape(1, Np).astype(jnp.float32)

    grid = (pl.cdiv(M, tm), Np // tn, K // tk)   # ragged last M block handled by Pallas
    in_specs = [
        pl.BlockSpec((tm, tk), lambda i, j, k: (i, k)),
        pl.BlockSpec((tk, tn), lambda i, j, k: (k, j)),
        pl.BlockSpec((1, tn), lambda i, j, k: (0, j)),
    ]
    args = [a, b, bias]
    if residual is None:
        kernel = functools.partial(_mm_bias_kernel, act=act)
    else:
        in_specs.append(pl.BlockSpec((tm, tn), lambda i, j, k: (i, j)))
        args.append(residual.astype(jnp.bfloat16))
        kernel = functools.partial(_mm_bias_res_kernel, act=act)

    return pl.pallas_call(
        kernel,
        out_shape=jax.ShapeDtypeStruct((M, Np), out_dtype),
        grid=grid,
        in_specs=in_specs,
        out_specs=pl.BlockSpec((tm, tn), lambda i, j, k: (i, j)),
        scratch_shapes=[pltpu.VMEM((tm, tn), jnp.float32)],
        compiler_params=pltpu.CompilerParams(
            dimension_semantics=("parallel", "parallel", "arbitrary"),
            vmem_limit_bytes=_vmem_limit_bytes()),
    )(*args)


def conv1x1_bn(x, w, bias, *, act="none", residual=None, out_dtype=jnp.bfloat16):
    """1x1 conv + folded BN (+ residual + act).  x: (N,H,W,Cp) channel-padded NHWC."""
    N, H, W, C = x.shape
    coutp = w.shape[1]
    a = x.reshape(N * H * W, C)
    r = None if residual is None else residual.reshape(N * H * W, coutp)
    out = fused_matmul(a, w, bias, residual=r, act=act, out_dtype=out_dtype)
    return out.reshape(N, H, W, coutp)


# --------------- fused conv1 (relu) + downsample (linear), shared A read ---------------

def _mm_dual_kernel(a_ref, w1_ref, b1_ref, wd_ref, bd_ref, o1_ref, od_ref,
                    acc1_ref, acc2_ref):
    k = pl.program_id(1)

    @pl.when(k == 0)
    def _():
        acc1_ref[...] = jnp.zeros_like(acc1_ref)
        acc2_ref[...] = jnp.zeros_like(acc2_ref)

    a = a_ref[...]
    acc1_ref[...] += jnp.dot(a, w1_ref[...], preferred_element_type=jnp.float32)
    acc2_ref[...] += jnp.dot(a, wd_ref[...], preferred_element_type=jnp.float32)

    @pl.when(k == pl.num_programs(1) - 1)
    def _():
        o1_ref[...] = jnp.maximum(acc1_ref[...] + b1_ref[...], 0.0).astype(o1_ref.dtype)
        od_ref[...] = (acc2_ref[...] + bd_ref[...]).astype(od_ref.dtype)


def conv1_and_downsample(x, w1, b1, wd, bd):
    """relu(x@w1+b1) and (x@wd+bd) in one kernel sharing the x read (stride==1)."""
    N, H, W, C = x.shape
    n1, n2 = w1.shape[1], wd.shape[1]
    M, K = N * H * W, C
    a = x.reshape(M, K).astype(jnp.bfloat16)

    tm = _choose_tm(M)
    while tm > 128 and tm * (n1 + n2) * 4 > (6 << 20):   # bound the two f32 accumulators
        tm //= 2
    tk = _choose_tk(K)
    grid = (pl.cdiv(M, tm), K // tk)

    out1, outd = pl.pallas_call(
        _mm_dual_kernel,
        out_shape=(jax.ShapeDtypeStruct((M, n1), jnp.bfloat16),
                   jax.ShapeDtypeStruct((M, n2), jnp.bfloat16)),
        grid=grid,
        in_specs=[
            pl.BlockSpec((tm, tk), lambda i, k: (i, k)),
            pl.BlockSpec((tk, n1), lambda i, k: (k, 0)),
            pl.BlockSpec((1, n1), lambda i, k: (0, 0)),
            pl.BlockSpec((tk, n2), lambda i, k: (k, 0)),
            pl.BlockSpec((1, n2), lambda i, k: (0, 0)),
        ],
        out_specs=[pl.BlockSpec((tm, n1), lambda i, k: (i, 0)),
                   pl.BlockSpec((tm, n2), lambda i, k: (i, 0))],
        scratch_shapes=[pltpu.VMEM((tm, n1), jnp.float32),
                        pltpu.VMEM((tm, n2), jnp.float32)],
        compiler_params=pltpu.CompilerParams(
            dimension_semantics=("parallel", "arbitrary"),
            vmem_limit_bytes=_vmem_limit_bytes()),
    )(a, w1.astype(jnp.bfloat16), b1.reshape(1, n1).astype(jnp.float32),
      wd.astype(jnp.bfloat16), bd.reshape(1, n2).astype(jnp.float32))
    return out1.reshape(N, H, W, n1), outd.reshape(N, H, W, n2)


# --------------------------- 3x3 conv kernel ---------------------------

def _conv3x3_kernel(xp_ref, w_ref, bias_ref, o_ref, acc_ref, *, th, w_out, stride, act):
    # xp_ref : (1, H+2, W+2, Cinp) padded image, resident across (co, h) steps.
    # w_ref  : (3, 3*Cinp, tco) per-ky weight slabs (kx folded into the contraction).
    # acc_ref: (th*w_out, tco) f32 VMEM scratch.
    s = stride
    h_idx = pl.program_id(2)
    m = th * w_out
    cin3 = w_ref.shape[1]
    row_span = s * (th - 1) + 1

    for ky in range(3):
        rows = xp_ref[0, pl.ds(h_idx * th * s + ky, row_span), :, :]   # (row_span, W+2, Cin)
        if s > 1:
            rows = rows[::s]                                           # (th, W+2, Cin)
        taps = []
        for kx in range(3):
            if s == 1:
                taps.append(rows[:, kx:kx + w_out, :])
            else:
                taps.append(rows[:, kx:kx + s * (w_out - 1) + 1:s, :])
        patch = jnp.concatenate(taps, axis=-1).reshape(m, cin3)        # (m, 3*Cin)
        contrib = jnp.dot(patch, w_ref[ky], preferred_element_type=jnp.float32)
        if ky == 0:
            acc_ref[...] = contrib
        else:
            acc_ref[...] += contrib

    y = _apply_act(acc_ref[...] + bias_ref[...], act)
    o_ref[...] = y.reshape(1, th, w_out, o_ref.shape[-1]).astype(o_ref.dtype)


def conv3x3_bn(x, w, bias, *, stride=1, act="relu", out_dtype=jnp.bfloat16):
    """3x3 conv (padding=1, stride s) + folded BN + act.  x: (N,H,W,Cinp) NHWC."""
    N, H, W, C = x.shape
    coutp = w.shape[-1]
    s = stride
    h_out = (H - 1) // s + 1
    w_out = (W - 1) // s + 1

    # TODO(synk): halo still comes from an XLA jnp.pad (one extra bf16 activation
    # roundtrip through HBM); in-kernel halo masking would remove it.
    xp = jnp.pad(x.astype(jnp.bfloat16), ((0, 0), (1, 1), (1, 1), (0, 0)))
    wk = w.reshape(3, 3 * C, coutp).astype(jnp.bfloat16)    # (ky, kx*cin, cout)
    bias2 = bias.reshape(1, coutp).astype(jnp.float32)

    tco = _choose_tn(coutp)
    th = _choose_th(h_out, w_out)
    grid = (N, coutp // tco, h_out // th)

    kernel = functools.partial(_conv3x3_kernel, th=th, w_out=w_out, stride=s, act=act)
    return pl.pallas_call(
        kernel,
        out_shape=jax.ShapeDtypeStruct((N, h_out, w_out, coutp), out_dtype),
        grid=grid,
        in_specs=[
            pl.BlockSpec((1, H + 2, W + 2, C), lambda n, co, h: (n, 0, 0, 0)),
            pl.BlockSpec((3, 3 * C, tco), lambda n, co, h: (0, 0, co)),
            pl.BlockSpec((1, tco), lambda n, co, h: (0, co)),
        ],
        out_specs=pl.BlockSpec((1, th, w_out, tco), lambda n, co, h: (n, h, 0, co)),
        scratch_shapes=[pltpu.VMEM((th * w_out, tco), jnp.float32)],
        compiler_params=pltpu.CompilerParams(
            dimension_semantics=("parallel", "parallel", "parallel"),
            vmem_limit_bytes=_vmem_limit_bytes()),
    )(xp, wk, bias2)


# ------------------------ parameters (raw + BN-folded/padded) ------------------------

def _rand_bn(key, c):
    k1, k2, k3, k4 = jax.random.split(key, 4)
    return {
        "gamma": jax.random.uniform(k1, (c,), jnp.float32, 0.5, 1.5),
        "beta": jax.random.normal(k2, (c,), jnp.float32) * 0.1,
        "mean": jax.random.normal(k3, (c,), jnp.float32) * 0.1,
        "var": jax.random.uniform(k4, (c,), jnp.float32, 0.5, 1.5),
    }


def _fold_bn(w_hwio, bn, eps=1e-5):
    scale = bn["gamma"] * jax.lax.rsqrt(bn["var"] + eps)
    return w_hwio * scale, bn["beta"] - bn["mean"] * scale


def init_raw_params(key, inplanes, planes, stride=1, expansion=4):
    cout = planes * expansion
    ks = jax.random.split(key, 8)

    def conv_w(k, kh, kw, cin, co):                # ResNet-style kaiming init, HWIO
        n = kh * kw * co
        return jax.random.normal(k, (kh, kw, cin, co), jnp.float32) * math.sqrt(2.0 / n)

    raw = {
        "stride": stride, "inplanes": inplanes, "planes": planes, "cout": cout,
        "w1": conv_w(ks[0], 1, 1, inplanes, planes), "bn1": _rand_bn(ks[1], planes),
        "w2": conv_w(ks[2], 3, 3, planes, planes),   "bn2": _rand_bn(ks[3], planes),
        "w3": conv_w(ks[4], 1, 1, planes, cout),     "bn3": _rand_bn(ks[5], cout),
    }
    if stride != 1 or inplanes != cout:
        raw["wd"] = conv_w(ks[6], 1, 1, inplanes, cout)
        raw["bnd"] = _rand_bn(ks[7], cout)
    return raw


def fold_params(raw):
    inplanes, planes, cout = raw["inplanes"], raw["planes"], raw["cout"]
    cinp = _round_up(inplanes, 128)
    pp = _round_up(planes, 128)
    coutp = _round_up(cout, 128)
    p = {"stride": raw["stride"], "cinp": cinp, "cout": cout, "coutp": coutp}

    w1, b1 = _fold_bn(raw["w1"], raw["bn1"])
    p["w1"] = jnp.pad(w1[0, 0], ((0, cinp - inplanes), (0, pp - planes)))
    p["b1"] = jnp.pad(b1, (0, pp - planes))

    w2, b2 = _fold_bn(raw["w2"], raw["bn2"])
    p["w2"] = jnp.pad(w2, ((0, 0), (0, 0), (0, pp - planes), (0, pp - planes)))
    p["b2"] = jnp.pad(b2, (0, pp - planes))

    w3, b3 = _fold_bn(raw["w3"], raw["bn3"])
    p["w3"] = jnp.pad(w3[0, 0], ((0, pp - planes), (0, coutp - cout)))
    p["b3"] = jnp.pad(b3, (0, coutp - cout))

    if "wd" in raw:
        wd, bd = _fold_bn(raw["wd"], raw["bnd"])
        p["ds_w"] = jnp.pad(wd[0, 0], ((0, cinp - inplanes), (0, coutp - cout)))
        p["ds_b"] = jnp.pad(bd, (0, coutp - cout))
    return p


# ------------------------------ forward pass ------------------------------

def bottleneck_forward(params, x_nchw):
    s = params["stride"]
    x = jnp.transpose(x_nchw, (0, 2, 3, 1))                         # NCHW -> NHWC
    x = _pad_channels(x, params["cinp"]).astype(jnp.bfloat16)

    if "ds_w" in params:
        if s == 1:
            out1, identity = conv1_and_downsample(
                x, params["w1"], params["b1"], params["ds_w"], params["ds_b"])
        else:
            # TODO(synk): stride>1 downsample uses an XLA strided slice (extra HBM
            # gather); an in-kernel strided index_map would avoid it.
            identity = conv1x1_bn(x[:, ::s, ::s, :], params["ds_w"], params["ds_b"],
                                  act="none")
            out1 = conv1x1_bn(x, params["w1"], params["b1"], act="relu")
    else:
        identity = x
        out1 = conv1x1_bn(x, params["w1"], params["b1"], act="relu")

    out = conv3x3_bn(out1, params["w2"], params["b2"], stride=s, act="relu")
    out = conv1x1_bn(out, params["w3"], params["b3"], act="relu",
                     residual=identity, out_dtype=jnp.bfloat16)     # fused add + relu

    out = out[..., :params["cout"]]                                 # drop channel padding (bf16)
    out = jnp.transpose(out, (0, 3, 1, 2))                          # NHWC -> NCHW (bf16)
    return out.astype(jnp.float32)


def bottleneck_reference(raw, x_nchw, eps=1e-5):
    """Independent unfused f32 reference from raw (unfolded, unpadded) params."""
    s = raw["stride"]
    hp = jax.lax.Precision.HIGHEST

    def bn(x, p):
        scale = p["gamma"] * jax.lax.rsqrt(p["var"] + eps)
        return (x - p["mean"]) * scale + p["beta"]

    x = jnp.transpose(x_nchw, (0, 2, 3, 1)).astype(jnp.float32)
    y = jnp.einsum("nhwc,cd->nhwd", x, raw["w1"][0, 0], precision=hp)
    y = jnp.maximum(bn(y, raw["bn1"]), 0.0)
    y = jax.lax.conv_general_dilated(
        y, raw["w2"], (s, s), [(1, 1), (1, 1)],
        dimension_numbers=("NHWC", "HWIO", "NHWC"), precision=hp)
    y = jnp.maximum(bn(y, raw["bn2"]), 0.0)
    y = jnp.einsum("nhwc,cd->nhwd", y, raw["w3"][0, 0], precision=hp)
    y = bn(y, raw["bn3"])
    if "wd" in raw:
        r = jnp.einsum("nhwc,cd->nhwd", x[:, ::s, ::s, :], raw["wd"][0, 0], precision=hp)
        r = bn(r, raw["bnd"])
    else:
        r = x
    y = jnp.maximum(y + r, 0.0)
    return jnp.transpose(y, (0, 3, 1, 2))


# ------------------------------ demo / test ------------------------------

if __name__ == "__main__":
    key = jax.random.PRNGKey(0)
    pkey, xkey = jax.random.split(key)

    # Small Bottleneck: inplanes=32, planes=16 -> out channels 64, stride=1,
    # downsample present (32 != 64).  Spatial 16x16, batch 2.
    inplanes, planes, stride = 32, 16, 1
    raw = init_raw_params(pkey, inplanes, planes, stride=stride)
    params = fold_params(raw)
    x = jax.random.normal(xkey, (2, inplanes, 16, 16), jnp.float32)

    fwd = jax.jit(functools.partial(bottleneck_forward, params))
    out = fwd(x)
    jax.block_until_ready(out)

    assert out.shape == (2, planes * 4, 16, 16)
    assert bool(jnp.all(jnp.isfinite(out)))
    assert bool(jnp.all(out >= 0.0))              # final ReLU

    # Compare against an unfused f32 reference built from the raw params
    # (validates BN folding, channel padding and the bf16 MXU pipeline).
    ref = bottleneck_reference(raw, x)
    rel_err = float(jnp.mean(jnp.abs(out - ref)) / (jnp.mean(jnp.abs(ref)) + 1e-6))
    assert rel_err < 0.05, f"relative error too large: {rel_err}"

    print("KERNEL_OK")
</pallas_src>

<mosaic_0001>
module attributes {stable_mosaic.version = 11 : i64} {
  func.func @_mm_dual_kernel(%arg0: i32, %arg1: i32, %arg2: memref<256x128xbf16, #tpu.memory_space<vmem>>, %arg3: memref<128x128xbf16, #tpu.memory_space<vmem>>, %arg4: memref<1x128xf32, #tpu.memory_space<vmem>>, %arg5: memref<128x128xbf16, #tpu.memory_space<vmem>>, %arg6: memref<1x128xf32, #tpu.memory_space<vmem>>, %arg7: memref<256x128xbf16, #tpu.memory_space<vmem>>, %arg8: memref<256x128xbf16, #tpu.memory_space<vmem>>, %arg9: memref<256x128xf32, #tpu.memory_space<vmem>>, %arg10: memref<256x128xf32, #tpu.memory_space<vmem>>) attributes {dimension_semantics = [#tpu.dimension_semantics<parallel>, #tpu.dimension_semantics<arbitrary>], iteration_bounds = array<i64: 2, 1>, scalar_prefetch = 0 : i64, scratch_operands = 2 : i64, tpu.core_type = #tpu.core_type<tc>, window_params = [{transform_indices = @transform_0, window_bounds = array<i64: 256, 128>}, {transform_indices = @transform_1, window_bounds = array<i64: 128, 128>}, {pipeline_mode = #tpu.pipeline_mode<synchronous>, transform_indices = @transform_2, window_bounds = array<i64: 1, 128>}, {transform_indices = @transform_3, window_bounds = array<i64: 128, 128>}, {pipeline_mode = #tpu.pipeline_mode<synchronous>, transform_indices = @transform_4, window_bounds = array<i64: 1, 128>}, {transform_indices = @transform_5, window_bounds = array<i64: 256, 128>}, {transform_indices = @transform_6, window_bounds = array<i64: 256, 128>}]} {
    %c0_i32 = arith.constant 0 : i32
    %0 = arith.cmpi eq, %arg1, %c0_i32 : i32
    %1 = arith.extui %0 : i1 to i32
    %c0_i32_0 = arith.constant 0 : i32
    %2 = arith.cmpi ne, %1, %c0_i32_0 : i32
    scf.if %2 {
      %cst_17 = arith.constant 0.000000e+00 : f32
      %17 = vector.broadcast %cst_17 : f32 to vector<256x128xf32>
      %c0_18 = arith.constant 0 : index
      %c0_19 = arith.constant 0 : index
      %18 = vector.load %arg9[%c0_18, %c0_19] : memref<256x128xf32, #tpu.memory_space<vmem>>, vector<256x128xf32>
      tpu.vector_store %arg9[%c0_18, %c0_19], %17 {strides = array<i32>} : memref<256x128xf32, #tpu.memory_space<vmem>>, vector<256x128xf32>,
      %cst_20 = arith.constant 0.000000e+00 : f32
      %19 = vector.broadcast %cst_20 : f32 to vector<256x128xf32>
      %c0_21 = arith.constant 0 : index
      %c0_22 = arith.constant 0 : index
      %20 = vector.load %arg10[%c0_21, %c0_22] : memref<256x128xf32, #tpu.memory_space<vmem>>, vector<256x128xf32>
      tpu.vector_store %arg10[%c0_21, %c0_22], %19 {strides = array<i32>} : memref<256x128xf32, #tpu.memory_space<vmem>>, vector<256x128xf32>,
    } else {
    }
    %c0 = arith.constant 0 : index
    %c0_1 = arith.constant 0 : index
    %3 = vector.load %arg2[%c0, %c0_1] : memref<256x128xbf16, #tpu.memory_space<vmem>>, vector<256x128xbf16>
    %c0_2 = arith.constant 0 : index
    %c0_3 = arith.constant 0 : index
    %4 = vector.load %arg9[%c0_2, %c0_3] : memref<256x128xf32, #tpu.memory_space<vmem>>, vector<256x128xf32>
    %c0_4 = arith.constant 0 : index
    %c0_5 = arith.constant 0 : index
    %5 = vector.load %arg3[%c0_4, %c0_5] : memref<128x128xbf16, #tpu.memory_space<vmem>>, vector<128x128xbf16>
    %cst = arith.constant dense<0.000000e+00> : vector<256x128xf32>
    %6 = tpu.matmul %3, %5, %cst {dimension_numbers = #tpu.dot_dimension_numbers<[1], [0], [0], [1], [0, 0, 1, 1], [], []>} : vector<256x128xbf16>, vector<128x128xbf16>, vector<256x128xf32> -> vector<256x128xf32>
    %7 = arith.addf %4, %6 : vector<256x128xf32>
    %c0_6 = arith.constant 0 : index
    %c0_7 = arith.constant 0 : index
    %8 = vector.load %arg9[%c0_6, %c0_7] : memref<256x128xf32, #tpu.memory_space<vmem>>, vector<256x128xf32>
    tpu.vector_store %arg9[%c0_6, %c0_7], %7 {strides = array<i32>} : memref<256x128xf32, #tpu.memory_space<vmem>>, vector<256x128xf32>,
    %c0_8 = arith.constant 0 : index
    %c0_9 = arith.constant 0 : index
    %9 = vector.load %arg10[%c0_8, %c0_9] : memref<256x128xf32, #tpu.memory_space<vmem>>, vector<256x128xf32>
    %c0_10 = arith.constant 0 : index
    %c0_11 = arith.constant 0 : index
    %10 = vector.load %arg5[%c0_10, %c0_11] : memref<128x128xbf16, #tpu.memory_space<vmem>>, vector<128x128xbf16>
    %cst_12 = arith.constant dense<0.000000e+00> : vector<256x128xf32>
    %11 = tpu.matmul %3, %10, %cst_12 {dimension_numbers = #tpu.dot_dimension_numbers<[1], [0], [0], [1], [0, 0, 1, 1], [], []>} : vector<256x128xbf16>, vector<128x128xbf16>, vector<256x128xf32> -> vector<256x128xf32>
    %12 = arith.addf %9, %11 : vector<256x128xf32>
    %c0_13 = arith.constant 0 : index
    %c0_14 = arith.constant 0 : index
    %13 = vector.load %arg10[%c0_13, %c0_14] : memref<256x128xf32, #tpu.memory_space<vmem>>, vector<256x128xf32>
    tpu.vector_store %arg10[%c0_13, %c0_14], %12 {strides = array<i32>} : memref<256x128xf32, #tpu.memory_space<vmem>>, vector<256x128xf32>,
    %c0_i32_15 = arith.constant 0 : i32
    %14 = arith.cmpi eq, %arg1, %c0_i32_15 : i32
    %15 = arith.extui %14 : i1 to i32
    %c0_i32_16 = arith.constant 0 : i32
    %16 = arith.cmpi ne, %15, %c0_i32_16 : i32
    scf.if %16 {
      %c0_17 = arith.constant 0 : index
      %c0_18 = arith.constant 0 : index
      %17 = vector.load %arg9[%c0_17, %c0_18] : memref<256x128xf32, #tpu.memory_space<vmem>>, vector<256x128xf32>
      %c0_19 = arith.constant 0 : index
      %c0_20 = arith.constant 0 : index
      %18 = vector.load %arg4[%c0_19, %c0_20] : memref<1x128xf32, #tpu.memory_space<vmem>>, vector<1x128xf32>
      %19 = vector.broadcast %18 : vector<1x128xf32> to vector<256x128xf32>
      %20 = arith.addf %17, %19 : vector<256x128xf32>
      %cst_21 = arith.constant 0.000000e+00 : f32
      %21 = vector.broadcast %cst_21 : f32 to vector<256x128xf32>
      %22 = arith.maximumf %20, %21 : vector<256x128xf32>
      %23 = arith.truncf %22 : vector<256x128xf32> to vector<256x128xbf16>
      %c0_22 = arith.constant 0 : index
      %c0_23 = arith.constant 0 : index
      %24 = vector.load %arg7[%c0_22, %c0_23] : memref<256x128xbf16, #tpu.memory_space<vmem>>, vector<256x128xbf16>
      tpu.vector_store %arg7[%c0_22, %c0_23], %23 {strides = array<i32>} : memref<256x128xbf16, #tpu.memory_space<vmem>>, vector<256x128xbf16>,
      %c0_24 = arith.constant 0 : index
      %c0_25 = arith.constant 0 : index
      %25 = vector.load %arg10[%c0_24, %c0_25] : memref<256x128xf32, #tpu.memory_space<vmem>>, vector<256x128xf32>
      %c0_26 = arith.constant 0 : index
      %c0_27 = arith.constant 0 : index
      %26 = vector.load %arg6[%c0_26, %c0_27] : memref<1x128xf32, #tpu.memory_space<vmem>>, vector<1x128xf32>
      %27 = vector.broadcast %26 : vector<1x128xf32> to vector<256x128xf32>
      %28 = arith.addf %25, %27 : vector<256x128xf32>
      %29 = arith.truncf %28 : vector<256x128xf32> to vector<256x128xbf16>
      %c0_28 = arith.constant 0 : index
      %c0_29 = arith.constant 0 : index
      %30 = vector.load %arg8[%c0_28, %c0_29] : memref<256x128xbf16, #tpu.memory_space<vmem>>, vector<256x128xbf16>
      tpu.vector_store %arg8[%c0_28, %c0_29], %29 {strides = array<i32>} : memref<256x128xbf16, #tpu.memory_space<vmem>>, vector<256x128xbf16>,
    } else {
    }
    return
  }
  func.func @transform_0(%arg0: i32, %arg1: i32) -> (i32, i32) {
    %c0_i32 = arith.constant 0 : i32
    return %arg0, %arg1 : i32, i32
  }
  func.func @transform_1(%arg0: i32, %arg1: i32) -> (i32, i32) {
    %c0_i32 = arith.constant 0 : i32
    %c0_i32_0 = arith.constant 0 : i32
    return %arg1, %c0_i32 : i32, i32
  }
  func.func @transform_2(%arg0: i32, %arg1: i32) -> (i32, i32) {
    %c0_i32 = arith.constant 0 : i32
    %c0_i32_0 = arith.constant 0 : i32
    %c0_i32_1 = arith.constant 0 : i32
    return %c0_i32, %c0_i32_0 : i32, i32
  }
  func.func @transform_3(%arg0: i32, %arg1: i32) -> (i32, i32) {
    %c0_i32 = arith.constant 0 : i32
    %c0_i32_0 = arith.constant 0 : i32
    return %arg1, %c0_i32 : i32, i32
  }
  func.func @transform_4(%arg0: i32, %arg1: i32) -> (i32, i32) {
    %c0_i32 = arith.constant 0 : i32
    %c0_i32_0 = arith.constant 0 : i32
    %c0_i32_1 = arith.constant 0 : i32
    return %c0_i32, %c0_i32_0 : i32, i32
  }
  func.func @transform_5(%arg0: i32, %arg1: i32) -> (i32, i32) {
    %c0_i32 = arith.constant 0 : i32
    %c0_i32_0 = arith.constant 0 : i32
    return %arg0, %c0_i32 : i32, i32
  }
  func.func @transform_6(%arg0: i32, %arg1: i32) -> (i32, i32) {
    %c0_i32 = arith.constant 0 : i32
    %c0_i32_0 = arith.constant 0 : i32
    return %arg0, %c0_i32 : i32, i32
  }
}

module attributes {stable_mosaic.version = 11 : i64} {
  func.func @_mm_bias_res_kernel(%arg0: i32, %arg1: i32, %arg2: i32, %arg3: memref<256x128xbf16, #tpu.memory_space<vmem>>, %arg4: memref<128x128xbf16, #tpu.memory_space<vmem>>, %arg5: memref<1x128xf32, #tpu.memory_space<vmem>>, %arg6: memref<256x128xbf16, #tpu.memory_space<vmem>>, %arg7: memref<256x128xbf16, #tpu.memory_space<vmem>>, %arg8: memref<256x128xf32, #tpu.memory_space<vmem>>) attributes {dimension_semantics = [#tpu.dimension_semantics<parallel>, #tpu.dimension_semantics<parallel>, #tpu.dimension_semantics<arbitrary>], iteration_bounds = array<i64: 2, 1, 1>, scalar_prefetch = 0 : i64, scratch_operands = 1 : i64, tpu.core_type = #tpu.core_type<tc>, window_params = [{transform_indices = @transform_0, window_bounds = array<i64: 256, 128>}, {transform_indices = @transform_1, window_bounds = array<i64: 128, 128>}, {transform_indices = @transform_2, window_bounds = array<i64: 1, 128>}, {transform_indices = @transform_3, window_bounds = array<i64: 256, 128>}, {transform_indices = @transform_4, window_bounds = array<i64: 256, 128>}]} {
    %c0_i32 = arith.constant 0 : i32
    %0 = arith.cmpi eq, %arg2, %c0_i32 : i32
    %1 = arith.extui %0 : i1 to i32
    %c0_i32_0 = arith.constant 0 : i32
    %2 = arith.cmpi ne, %1, %c0_i32_0 : i32
    scf.if %2 {
      %cst_10 = arith.constant 0.000000e+00 : f32
      %12 = vector.broadcast %cst_10 : f32 to vector<256x128xf32>
      %c0_11 = arith.constant 0 : index
      %c0_12 = arith.constant 0 : index
      %13 = vector.load %arg8[%c0_11, %c0_12] : memref<256x128xf32, #tpu.memory_space<vmem>>, vector<256x128xf32>
      tpu.vector_store %arg8[%c0_11, %c0_12], %12 {strides = array<i32>} : memref<256x128xf32, #tpu.memory_space<vmem>>, vector<256x128xf32>,
    } else {
    }
    %c0 = arith.constant 0 : index
    %c0_1 = arith.constant 0 : index
    %3 = vector.load %arg8[%c0, %c0_1] : memref<256x128xf32, #tpu.memory_space<vmem>>, vector<256x128xf32>
    %c0_2 = arith.constant 0 : index
    %c0_3 = arith.constant 0 : index
    %4 = vector.load %arg3[%c0_2, %c0_3] : memref<256x128xbf16, #tpu.memory_space<vmem>>, vector<256x128xbf16>
    %c0_4 = arith.constant 0 : index
    %c0_5 = arith.constant 0 : index
    %5 = vector.load %arg4[%c0_4, %c0_5] : memref<128x128xbf16, #tpu.memory_space<vmem>>, vector<128x128xbf16>
    %cst = arith.constant dense<0.000000e+00> : vector<256x128xf32>
    %6 = tpu.matmul %4, %5, %cst {dimension_numbers = #tpu.dot_dimension_numbers<[1], [0], [0], [1], [0, 0, 1, 1], [], []>} : vector<256x128xbf16>, vector<128x128xbf16>, vector<256x128xf32> -> vector<256x128xf32>
    %7 = arith.addf %3, %6 : vector<256x128xf32>
    %c0_6 = arith.constant 0 : index
    %c0_7 = arith.constant 0 : index
    %8 = vector.load %arg8[%c0_6, %c0_7] : memref<256x128xf32, #tpu.memory_space<vmem>>, vector<256x128xf32>
    tpu.vector_store %arg8[%c0_6, %c0_7], %7 {strides = array<i32>} : memref<256x128xf32, #tpu.memory_space<vmem>>, vector<256x128xf32>,
    %c0_i32_8 = arith.constant 0 : i32
    %9 = arith.cmpi eq, %arg2, %c0_i32_8 : i32
    %10 = arith.extui %9 : i1 to i32
    %c0_i32_9 = arith.constant 0 : i32
    %11 = arith.cmpi ne, %10, %c0_i32_9 : i32
    scf.if %11 {
      %c0_10 = arith.constant 0 : index
      %c0_11 = arith.constant 0 : index
      %12 = vector.load %arg8[%c0_10, %c0_11] : memref<256x128xf32, #tpu.memory_space<vmem>>, vector<256x128xf32>
      %c0_12 = arith.constant 0 : index
      %c0_13 = arith.constant 0 : index
      %13 = vector.load %arg5[%c0_12, %c0_13] : memref<1x128xf32, #tpu.memory_space<vmem>>, vector<1x128xf32>
      %14 = vector.broadcast %13 : vector<1x128xf32> to vector<256x128xf32>
      %15 = arith.addf %12, %14 : vector<256x128xf32>
      %c0_14 = arith.constant 0 : index
      %c0_15 = arith.constant 0 : index
      %16 = vector.load %arg6[%c0_14, %c0_15] : memref<256x128xbf16, #tpu.memory_space<vmem>>, vector<256x128xbf16>
      %17 = arith.extf %16 : vector<256x128xbf16> to vector<256x128xf32>
      %18 = arith.addf %15, %17 : vector<256x128xf32>
      %cst_16 = arith.constant 0.000000e+00 : f32
      %19 = vector.broadcast %cst_16 : f32 to vector<256x128xf32>
      %20 = arith.maximumf %18, %19 : vector<256x128xf32>
      %21 = arith.truncf %20 : vector<256x128xf32> to vector<256x128xbf16>
      %c0_17 = arith.constant 0 : index
      %c0_18 = arith.constant 0 : index
      %22 = vector.load %arg7[%c0_17, %c0_18] : memref<256x128xbf16, #tpu.memory_space<vmem>>, vector<256x128xbf16>
      tpu.vector_store %arg7[%c0_17, %c0_18], %21 {strides = array<i32>} : memref<256x128xbf16, #tpu.memory_space<vmem>>, vector<256x128xbf16>,
    } else {
    }
    return
  }
  func.func @transform_0(%arg0: i32, %arg1: i32, %arg2: i32) -> (i32, i32) {
    %c0_i32 = arith.constant 0 : i32
    return %arg0, %arg2 : i32, i32
  }
  func.func @transform_1(%arg0: i32, %arg1: i32, %arg2: i32) -> (i32, i32) {
    %c0_i32 = arith.constant 0 : i32
    return %arg2, %arg1 : i32, i32
  }
  func.func @transform_2(%arg0: i32, %arg1: i32, %arg2: i32) -> (i32, i32) {
    %c0_i32 = arith.constant 0 : i32
    %c0_i32_0 = arith.constant 0 : i32
    return %c0_i32, %arg1 : i32, i32
  }
  func.func @transform_3(%arg0: i32, %arg1: i32, %arg2: i32) -> (i32, i32) {
    %c0_i32 = arith.constant 0 : i32
    return %arg0, %arg1 : i32, i32
  }
  func.func @transform_4(%arg0: i32, %arg1: i32, %arg2: i32) -> (i32, i32) {
    %c0_i32 = arith.constant 0 : i32
    return %arg0, %arg1 : i32, i32
  }
}

module attributes {stable_mosaic.version = 11 : i64} {
  func.func @_conv3x3_kernel(%arg0: i32, %arg1: i32, %arg2: i32, %arg3: memref<1x18x18x128xbf16, #tpu.memory_space<vmem>>, %arg4: memref<3x384x128xbf16, #tpu.memory_space<vmem>>, %arg5: memref<1x128xf32, #tpu.memory_space<vmem>>, %arg6: memref<1x8x16x128xbf16, #tpu.memory_space<vmem>>, %arg7: memref<128x128xf32, #tpu.memory_space<vmem>>) attributes {dimension_semantics = [#tpu.dimension_semantics<parallel>, #tpu.dimension_semantics<parallel>, #tpu.dimension_semantics<parallel>], iteration_bounds = array<i64: 2, 1, 2>, scalar_prefetch = 0 : i64, scratch_operands = 1 : i64, tpu.core_type = #tpu.core_type<tc>, window_params = [{transform_indices = @transform_0, window_bounds = array<i64: 1, 18, 18, 128>}, {transform_indices = @transform_1, window_bounds = array<i64: 3, 384, 128>}, {transform_indices = @transform_2, window_bounds = array<i64: 1, 128>}, {transform_indices = @transform_3, window_bounds = array<i64: 1, 8, 16, 128>}]} {
    %c8_i32 = arith.constant 8 : i32
    %0 = arith.muli %arg2, %c8_i32 : i32
    %c1_i32 = arith.constant 1 : i32
    %1 = arith.muli %0, %c1_i32 : i32
    %c0_i32 = arith.constant 0 : i32
    %2 = arith.addi %1, %c0_i32 : i32
    %c0 = arith.constant 0 : index
    %3 = arith.index_cast %2 : i32 to index
    %c0_0 = arith.constant 0 : index
    %c0_1 = arith.constant 0 : index
    %4 = vector.load %arg3[%c0, %3, %c0_0, %c0_1] : memref<1x18x18x128xbf16, #tpu.memory_space<vmem>>, vector<1x8x18x128xbf16>
    %5 = vector.shape_cast %4 : vector<1x8x18x128xbf16> to vector<8x18x128xbf16>
    %6 = vector.extract_strided_slice %5 {offsets = [0, 0, 0], sizes = [8, 16, 128], strides = [1, 1, 1]} : vector<8x18x128xbf16> to vector<8x16x128xbf16>
    %7 = vector.extract_strided_slice %5 {offsets = [0, 1, 0], sizes = [8, 16, 128], strides = [1, 1, 1]} : vector<8x18x128xbf16> to vector<8x16x128xbf16>
    %8 = vector.extract_strided_slice %5 {offsets = [0, 2, 0], sizes = [8, 16, 128], strides = [1, 1, 1]} : vector<8x18x128xbf16> to vector<8x16x128xbf16>
    %9 = tpu.concatenate %6, %7, %8 in 2 : vector<8x16x128xbf16>, vector<8x16x128xbf16>, vector<8x16x128xbf16> -> vector<8x16x384xbf16>
    %10 = vector.shape_cast %9 : vector<8x16x384xbf16> to vector<128x384xbf16>
    %c0_2 = arith.constant 0 : index
    %c0_3 = arith.constant 0 : index
    %c0_4 = arith.constant 0 : index
    %11 = vector.load %arg4[%c0_2, %c0_3, %c0_4] : memref<3x384x128xbf16, #tpu.memory_space<vmem>>, vector<1x384x128xbf16>
    %12 = vector.shape_cast %11 : vector<1x384x128xbf16> to vector<384x128xbf16>
    %cst = arith.constant dense<0.000000e+00> : vector<128x128xf32>
    %13 = tpu.matmul %10, %12, %cst {dimension_numbers = #tpu.dot_dimension_numbers<[1], [0], [0], [1], [0, 0, 1, 1], [], []>} : vector<128x384xbf16>, vector<384x128xbf16>, vector<128x128xf32> -> vector<128x128xf32>
    %c0_5 = arith.constant 0 : index
    %c0_6 = arith.constant 0 : index
    %14 = vector.load %arg7[%c0_5, %c0_6] : memref<128x128xf32, #tpu.memory_space<vmem>>, vector<128x128xf32>
    tpu.vector_store %arg7[%c0_5, %c0_6], %13 {strides = array<i32>} : memref<128x128xf32, #tpu.memory_space<vmem>>, vector<128x128xf32>,
    %c8_i32_7 = arith.constant 8 : i32
    %15 = arith.muli %arg2, %c8_i32_7 : i32
    %c1_i32_8 = arith.constant 1 : i32
    %16 = arith.muli %15, %c1_i32_8 : i32
    %c1_i32_9 = arith.constant 1 : i32
    %17 = arith.addi %16, %c1_i32_9 : i32
    %c0_10 = arith.constant 0 : index
    %18 = arith.index_cast %17 : i32 to index
    %c0_11 = arith.constant 0 : index
    %c0_12 = arith.constant 0 : index
    %19 = vector.load %arg3[%c0_10, %18, %c0_11, %c0_12] : memref<1x18x18x128xbf16, #tpu.memory_space<vmem>>, vector<1x8x18x128xbf16>
    %20 = vector.shape_cast %19 : vector<1x8x18x128xbf16> to vector<8x18x128xbf16>
    %21 = vector.extract_strided_slice %20 {offsets = [0, 0, 0], sizes = [8, 16, 128], strides = [1, 1, 1]} : vector<8x18x128xbf16> to vector<8x16x128xbf16>
    %22 = vector.extract_strided_slice %20 {offsets = [0, 1, 0], sizes = [8, 16, 128], strides = [1, 1, 1]} : vector<8x18x128xbf16> to vector<8x16x128xbf16>
    %23 = vector.extract_strided_slice %20 {offsets = [0, 2, 0], sizes = [8, 16, 128], strides = [1, 1, 1]} : vector<8x18x128xbf16> to vector<8x16x128xbf16>
    %24 = tpu.concatenate %21, %22, %23 in 2 : vector<8x16x128xbf16>, vector<8x16x128xbf16>, vector<8x16x128xbf16> -> vector<8x16x384xbf16>
    %25 = vector.shape_cast %24 : vector<8x16x384xbf16> to vector<128x384xbf16>
    %c1 = arith.constant 1 : index
    %c0_13 = arith.constant 0 : index
    %c0_14 = arith.constant 0 : index
    %26 = vector.load %arg4[%c1, %c0_13, %c0_14] : memref<3x384x128xbf16, #tpu.memory_space<vmem>>, vector<1x384x128xbf16>
    %27 = vector.shape_cast %26 : vector<1x384x128xbf16> to vector<384x128xbf16>
    %cst_15 = arith.constant dense<0.000000e+00> : vector<128x128xf32>
    %28 = tpu.matmul %25, %27, %cst_15 {dimension_numbers = #tpu.dot_dimension_numbers<[1], [0], [0], [1], [0, 0, 1, 1], [], []>} : vector<128x384xbf16>, vector<384x128xbf16>, vector<128x128xf32> -> vector<128x128xf32>
    %c0_16 = arith.constant 0 : index
    %c0_17 = arith.constant 0 : index
    %29 = vector.load %arg7[%c0_16, %c0_17] : memref<128x128xf32, #tpu.memory_space<vmem>>, vector<128x128xf32>
    %30 = arith.addf %29, %28 : vector<128x128xf32>
    %c0_18 = arith.constant 0 : index
    %c0_19 = arith.constant 0 : index
    %31 = vector.load %arg7[%c0_18, %c0_19] : memref<128x128xf32, #tpu.memory_space<vmem>>, vector<128x128xf32>
    tpu.vector_store %arg7[%c0_18, %c0_19], %30 {strides = array<i32>} : memref<128x128xf32, #tpu.memory_space<vmem>>, vector<128x128xf32>,
    %c8_i32_20 = arith.constant 8 : i32
    %32 = arith.muli %arg2, %c8_i32_20 : i32
    %c1_i32_21 = arith.constant 1 : i32
    %33 = arith.muli %32, %c1_i32_21 : i32
    %c2_i32 = arith.constant 2 : i32
    %34 = arith.addi %33, %c2_i32 : i32
    %c0_22 = arith.constant 0 : index
    %35 = arith.index_cast %34 : i32 to index
    %c0_23 = arith.constant 0 : index
    %c0_24 = arith.constant 0 : index
    %36 = vector.load %arg3[%c0_22, %35, %c0_23, %c0_24] : memref<1x18x18x128xbf16, #tpu.memory_space<vmem>>, vector<1x8x18x128xbf16>
    %37 = vector.shape_cast %36 : vector<1x8x18x128xbf16> to vector<8x18x128xbf16>
    %38 = vector.extract_strided_slice %37 {offsets = [0, 0, 0], sizes = [8, 16, 128], strides = [1, 1, 1]} : vector<8x18x128xbf16> to vector<8x16x128xbf16>
    %39 = vector.extract_strided_slice %37 {offsets = [0, 1, 0], sizes = [8, 16, 128], strides = [1, 1, 1]} : vector<8x18x128xbf16> to vector<8x16x128xbf16>
    %40 = vector.extract_strided_slice %37 {offsets = [0, 2, 0], sizes = [8, 16, 128], strides = [1, 1, 1]} : vector<8x18x128xbf16> to vector<8x16x128xbf16>
    %41 = tpu.concatenate %38, %39, %40 in 2 : vector<8x16x128xbf16>, vector<8x16x128xbf16>, vector<8x16x128xbf16> -> vector<8x16x384xbf16>
    %42 = vector.shape_cast %41 : vector<8x16x384xbf16> to vector<128x384xbf16>
    %c2 = arith.constant 2 : index
    %c0_25 = arith.constant 0 : index
    %c0_26 = arith.constant 0 : index
    %43 = vector.load %arg4[%c2, %c0_25, %c0_26] : memref<3x384x128xbf16, #tpu.memory_space<vmem>>, vector<1x384x128xbf16>
    %44 = vector.shape_cast %43 : vector<1x384x128xbf16> to vector<384x128xbf16>
    %cst_27 = arith.constant dense<0.000000e+00> : vector<128x128xf32>
    %45 = tpu.matmul %42, %44, %cst_27 {dimension_numbers = #tpu.dot_dimension_numbers<[1], [0], [0], [1], [0, 0, 1, 1], [], []>} : vector<128x384xbf16>, vector<384x128xbf16>, vector<128x128xf32> -> vector<128x128xf32>
    %c0_28 = arith.constant 0 : index
    %c0_29 = arith.constant 0 : index
    %46 = vector.load %arg7[%c0_28, %c0_29] : memref<128x128xf32, #tpu.memory_space<vmem>>, vector<128x128xf32>
    %47 = arith.addf %46, %45 : vector<128x128xf32>
    %c0_30 = arith.constant 0 : index
    %c0_31 = arith.constant 0 : index
    %48 = vector.load %arg7[%c0_30, %c0_31] : memref<128x128xf32, #tpu.memory_space<vmem>>, vector<128x128xf32>
    tpu.vector_store %arg7[%c0_30, %c0_31], %47 {strides = array<i32>} : memref<128x128xf32, #tpu.memory_space<vmem>>, vector<128x128xf32>,
    %c0_32 = arith.constant 0 : index
    %c0_33 = arith.constant 0 : index
    %49 = vector.load %arg7[%c0_32, %c0_33] : memref<128x128xf32, #tpu.memory_space<vmem>>, vector<128x128xf32>
    %c0_34 = arith.constant 0 : index
    %c0_35 = arith.constant 0 : index
    %50 = vector.load %arg5[%c0_34, %c0_35] : memref<1x128xf32, #tpu.memory_space<vmem>>, vector<1x128xf32>
    %51 = vector.broadcast %50 : vector<1x128xf32> to vector<128x128xf32>
    %52 = arith.addf %49, %51 : vector<128x128xf32>
    %cst_36 = arith.constant 0.000000e+00 : f32
    %53 = vector.broadcast %cst_36 : f32 to vector<128x128xf32>
    %54 = arith.maximumf %52, %53 : vector<128x128xf32>
    %55 = vector.shape_cast %54 : vector<128x128xf32> to vector<1x8x16x128xf32>
    %56 = arith.truncf %55 : vector<1x8x16x128xf32> to vector<1x8x16x128xbf16>
    %c0_37 = arith.constant 0 : index
    %c0_38 = arith.constant 0 : index
    %c0_39 = arith.constant 0 : index
    %c0_40 = arith.constant 0 : index
    %57 = vector.load %arg6[%c0_37, %c0_38, %c0_39, %c0_40] : memref<1x8x16x128xbf16, #tpu.memory_space<vmem>>, vector<1x8x16x128xbf16>
    tpu.vector_store %arg6[%c0_37, %c0_38, %c0_39, %c0_40], %56 {strides = array<i32>} : memref<1x8x16x128xbf16, #tpu.memory_space<vmem>>, vector<1x8x16x128xbf16>,
    return
  }
  func.func @transform_0(%arg0: i32, %arg1: i32, %arg2: i32) -> (i32, i32, i32, i32) {
    %c0_i32 = arith.constant 0 : i32
    %c0_i32_0 = arith.constant 0 : i32
    %c0_i32_1 = arith.constant 0 : i32
    %c0_i32_2 = arith.constant 0 : i32
    return %arg0, %c0_i32, %c0_i32_0, %c0_i32_1 : i32, i32, i32, i32
  }
  func.func @transform_1(%arg0: i32, %arg1: i32, %arg2: i32) -> (i32, i32, i32) {
    %c0_i32 = arith.constant 0 : i32
    %c0_i32_0 = arith.constant 0 : i32
    %c0_i32_1 = arith.constant 0 : i32
    return %c0_i32, %c0_i32_0, %arg1 : i32, i32, i32
  }
  func.func @transform_2(%arg0: i32, %arg1: i32, %arg2: i32) -> (i32, i32) {
    %c0_i32 = arith.constant 0 : i32
    %c0_i32_0 = arith.constant 0 : i32
    return %c0_i32, %arg1 : i32, i32
  }
  func.func @transform_3(%arg0: i32, %arg1: i32, %arg2: i32) -> (i32, i32, i32, i32) {
    %c0_i32 = arith.constant 0 : i32
    %c0_i32_0 = arith.constant 0 : i32
    return %arg0, %arg2, %c0_i32, %arg1 : i32, i32, i32, i32
  }
}

</mosaic_0001>

<llo_original>
// kernel: bottleneck_forward.3
$region0: #{bottleneck_forward.3}
  #allocation0 [shape = 'u32[]', space=smem, size = 0x4, offset = 0x4, fixed_abs, tag = 'smem constant byte address 0x4 - core index']
  #allocation1 [shape = 'u32[144,128]{1,0:T(1,128)}', space=vmem, size = 0x12000, scoped, tag = 'internal scratch']
  #allocation2 [shape = 'f32[256,128]{1,0:T(8,128)}', space=vmem, size = 0x20000, scoped, tag = 'scratch operand']
  #allocation3 [shape = 'f32[256,128]{1,0:T(8,128)}', space=vmem, size = 0x20000, scoped, tag = 'scratch operand']
  %s0 = inlined_call_operand.vmem [shape: bf16[512,128], index: 0, kind: input, shape index: {}]
  %s1 = inlined_call_operand.vmem [shape: bf16[128,128], index: 1, kind: input, shape index: {}]
  %s2 = inlined_call_operand.vmem [shape: f32[1,128], index: 2, kind: input, shape index: {}]
  %s3 = inlined_call_operand.vmem [shape: bf16[128,128], index: 3, kind: input, shape index: {}]
  %s4 = inlined_call_operand.vmem [shape: f32[1,128], index: 4, kind: input, shape index: {}]
  %s5 = inlined_call_operand.vmem [shape: bf16[512,128], index: 5, kind: output, shape index: {0}]
  %s6 = inlined_call_operand.vmem [shape: bf16[512,128], index: 6, kind: output, shape index: {1}]
  %7 = xla_tuple %s5, %s6
  %s8 = sld [smem:[#allocation0]]
  $region69: #{bottleneck_forward.3} parent=0
    _
  %s10 = ssub.s32 1, %s8
  %s11 = scalar_select 0, %s10, %s8
  loop: start=0, step=1, limit=4
  $region2: #{bottleneck_forward.3} parent=0 // loop_pre_header
    _
  $region3: #{bottleneck_forward.3} parent=0 // loop_header
    %s13 = sphi 0, %s17
    %p14 = scmp.ge.s32.totalorder %s13, 4
    %s20 = sphi 0, %s32
    %s21 = sphi 0, %s28
    %s22 = sphi 0, %s20
    %s23 = sphi 0, %s21
    %s24 = sphi 0, %s22
    %s25 = sphi 0, %s23
    %s37 = sphi 0, %s39
    %s40 = sphi 0, %s37
    %s41 = sphi 0, %s40
    %s57 = sphi 0, %s41
    %s63 = sphi 0, %s65
    %s66 = sphi 0, %s63
    %s67 = sphi 0, %s66
    %s83 = sphi 0, %s67
    %s87 = sphi 0, %s87
    %s89 = sphi 0, %s87
    %s90 = sphi 0, %s89
    %s104 = sphi 0, %s90
    %s110 = sphi 0, %s112
    %s113 = sphi 0, %s110
    %s114 = sphi 0, %s113
    %s130 = sphi 0, %s114
    %s134 = sphi 0, %s134
    %s136 = sphi 0, %s134
    %s137 = sphi 0, %s136
    %s151 = sphi 0, %s137
    %s157 = sphi 0, %s159
    %s160 = sphi 0, %s157
    %s161 = sphi 0, %s160
    %s177 = sphi 0, %s161
    %s183 = sphi 0, %s185
    %s186 = sphi 0, %s183
    %s187 = sphi 0, %s186
    %s203 = sphi 0, %s187
  $region4: #{bottleneck_forward.3} parent=0 // loop_header_branch
    %16 = sbr.rel (%p14) target = $region8
  $region5: #{bottleneck_forward.3} parent=0 // loop_body
    %s18 = ssub.s32 %s13, 1
    %s19 = ssub.s32 %s13, 2
    %s26 = sadd.s32 1, %s21
    %p27 = scmp.ge.s32.totalorder %s26, 1
    %s28 = scalar_select %p27, 0, %s26
    %s29 = sadd.s32 1, %s20
    %s30 = scalar_select %p27, %s29, %s20
    %p31 = scmp.ge.s32.totalorder %s30, 2
    %s32 = scalar_select %p31, 0, %s30
    %s33 = ssub.s32 %s20, %s32
    %s34 = ssub.s32 %s21, %s28
    %s35 = sor.u32 %s33, %s34
    %p36 = scmp.eq.s32.totalorder %s35, 0
    %s38 = sadd.s32 %s37, 1
    %s39 = scalar_select %p36, %s37, %s38
    %p42 = pneg %p36
    %p43 = scmp.eq.s32.totalorder %s13, 1
    %p44 = por %p42, %p43
    %p45 = scmp.ne.s32.totalorder %s37, %s40
    %p46 = scmp.eq.s32.totalorder %s13, 0
    %p47 = por %p45, %p46
    %p48 = scmp.ne.s32.totalorder %s37, %s40
    %p49 = scmp.eq.s32.totalorder %s18, 1
    %p50 = por %p48, %p49
    %p51 = scmp.ne.s32.totalorder %s40, %s41
    %p52 = scmp.eq.s32.totalorder %s18, 0
    %p53 = por %p51, %p52
    %p54 = scmp.ne.s32.totalorder %s40, %s41
    %p55 = scmp.eq.s32.totalorder %s19, 1
    %p56 = por %p54, %p55
    %p58 = scmp.ne.s32.totalorder %s41, %s57
    %p59 = scmp.eq.s32.totalorder %s19, 0
    %p60 = por %p58, %p59
    %s61 = ssub.s32 %s21, %s28
    %p62 = scmp.eq.s32.totalorder %s61, 0
    %s64 = sadd.s32 %s63, 1
    %s65 = scalar_select %p62, %s63, %s64
    %p68 = pneg %p62
    %p69 = scmp.eq.s32.totalorder %s13, 1
    %p70 = por %p68, %p69
    %p71 = scmp.ne.s32.totalorder %s63, %s66
    %p72 = scmp.eq.s32.totalorder %s13, 0
    %p73 = por %p71, %p72
    %p74 = scmp.ne.s32.totalorder %s63, %s66
    %p75 = scmp.eq.s32.totalorder %s18, 1
    %p76 = por %p74, %p75
    %p77 = scmp.ne.s32.totalorder %s66, %s67
    %p78 = scmp.eq.s32.totalorder %s18, 0
    %p79 = por %p77, %p78
    %p80 = scmp.ne.s32.totalorder %s66, %s67
    %p81 = scmp.eq.s32.totalorder %s19, 1
    %p82 = por %p80, %p81
    %p84 = scmp.ne.s32.totalorder %s67, %s83
    %p85 = scmp.eq.s32.totalorder %s19, 0
    %p86 = por %p84, %p85
    %s88 = sadd.s32 %s87, 1
    %p91 = scmp.eq.s32.totalorder %s13, 1
    %p92 = scmp.ne.s32.totalorder %s87, %s89
    %p93 = scmp.eq.s32.totalorder %s13, 0
    %p94 = por %p92, %p93
    %p95 = scmp.ne.s32.totalorder %s87, %s89
    %p96 = scmp.eq.s32.totalorder %s18, 1
    %p97 = por %p95, %p96
    %p98 = scmp.ne.s32.totalorder %s89, %s90
    %p99 = scmp.eq.s32.totalorder %s18, 0
    %p100 = por %p98, %p99
    %p101 = scmp.ne.s32.totalorder %s89, %s90
    %p102 = scmp.eq.s32.totalorder %s19, 1
    %p103 = por %p101, %p102
    %p105 = scmp.ne.s32.totalorder %s90, %s104
    %p106 = scmp.eq.s32.totalorder %s19, 0
    %p107 = por %p105, %p106
    %s108 = ssub.s32 %s21, %s28
    %p109 = scmp.eq.s32.totalorder %s108, 0
    %s111 = sadd.s32 %s110, 1
    %s112 = scalar_select %p109, %s110, %s111
    %p115 = pneg %p109
    %p116 = scmp.eq.s32.totalorder %s13, 1
    %p117 = por %p115, %p116
    %p118 = scmp.ne.s32.totalorder %s110, %s113
    %p119 = scmp.eq.s32.totalorder %s13, 0
    %p120 = por %p118, %p119
    %p121 = scmp.ne.s32.totalorder %s110, %s113
    %p122 = scmp.eq.s32.totalorder %s18, 1
    %p123 = por %p121, %p122
    %p124 = scmp.ne.s32.totalorder %s113, %s114
    %p125 = scmp.eq.s32.totalorder %s18, 0
    %p126 = por %p124, %p125
    %p127 = scmp.ne.s32.totalorder %s113, %s114
    %p128 = scmp.eq.s32.totalorder %s19, 1
    %p129 = por %p127, %p128
    %p131 = scmp.ne.s32.totalorder %s114, %s130
    %p132 = scmp.eq.s32.totalorder %s19, 0
    %p133 = por %p131, %p132
    %s135 = sadd.s32 %s134, 1
    %p138 = scmp.eq.s32.totalorder %s13, 1
    %p139 = scmp.ne.s32.totalorder %s134, %s136
    %p140 = scmp.eq.s32.totalorder %s13, 0
    %p141 = por %p139, %p140
    %p142 = scmp.ne.s32.totalorder %s134, %s136
    %p143 = scmp.eq.s32.totalorder %s18, 1
    %p144 = por %p142, %p143
    %p145 = scmp.ne.s32.totalorder %s136, %s137
    %p146 = scmp.eq.s32.totalorder %s18, 0
    %p147 = por %p145, %p146
    %p148 = scmp.ne.s32.totalorder %s136, %s137
    %p149 = scmp.eq.s32.totalorder %s19, 1
    %p150 = por %p148, %p149
    %p152 = scmp.ne.s32.totalorder %s137, %s151
    %p153 = scmp.eq.s32.totalorder %s19, 0
    %p154 = por %p152, %p153
    %s155 = ssub.s32 %s20, %s32
    %p156 = scmp.eq.s32.totalorder %s155, 0
    %s158 = sadd.s32 %s157, 1
    %s159 = scalar_select %p156, %s157, %s158
    %p162 = pneg %p156
    %p163 = scmp.eq.s32.totalorder %s13, 1
    %p164 = por %p162, %p163
    %p165 = scmp.ne.s32.totalorder %s157, %s160
    %p166 = scmp.eq.s32.totalorder %s13, 0
    %p167 = por %p165, %p166
    %p168 = scmp.ne.s32.totalorder %s157, %s160
    %p169 = scmp.eq.s32.totalorder %s18, 1
    %p170 = por %p168, %p169
    %p171 = scmp.ne.s32.totalorder %s160, %s161
    %p172 = scmp.eq.s32.totalorder %s18, 0
    %p173 = por %p171, %p172
    %p174 = scmp.ne.s32.totalorder %s160, %s161
    %p175 = scmp.eq.s32.totalorder %s19, 1
    %p176 = por %p174, %p175
    %p178 = scmp.ne.s32.totalorder %s161, %s177
    %p179 = scmp.eq.s32.totalorder %s19, 0
    %p180 = por %p178, %p179
    %s181 = ssub.s32 %s20, %s32
    %p182 = scmp.eq.s32.totalorder %s181, 0
    %s184 = sadd.s32 %s183, 1
    %s185 = scalar_select %p182, %s183, %s184
    %p188 = pneg %p182
    %p189 = scmp.eq.s32.totalorder %s13, 1
    %p190 = por %p188, %p189
    %p191 = scmp.ne.s32.totalorder %s183, %s186
    %p192 = scmp.eq.s32.totalorder %s13, 0
    %p193 = por %p191, %p192
    %p194 = scmp.ne.s32.totalorder %s183, %s186
    %p195 = scmp.eq.s32.totalorder %s18, 1
    %p196 = por %p194, %p195
    %p197 = scmp.ne.s32.totalorder %s186, %s187
    %p198 = scmp.eq.s32.totalorder %s18, 0
    %p199 = por %p197, %p198
    %p200 = scmp.ne.s32.totalorder %s186, %s187
    %p201 = scmp.eq.s32.totalorder %s19, 1
    %p202 = por %p200, %p201
    %p204 = scmp.ne.s32.totalorder %s187, %s203
    %p205 = scmp.eq.s32.totalorder %s19, 0
    %p206 = por %p204, %p205
    %p207 = scmp.le.s32.totalorder 1, %s13
    %p208 = scmp.lt.s32.totalorder %s13, 3
    %p209 = pnand %p207, %p208
    %p210 = pneg %p209
    // Predicated region
    $region9: #{bottleneck_forward.3} parent=5 // pred_check
      _
    $region10: #{bottleneck_forward.3} parent=5 // pred_check_branch
      %212 = sbr.rel (%p209) target = $region12
    $region11: #{bottleneck_forward.3} parent=5 // pred_region
      %s213 = ssub.s32 %s13, 1
      // Predicated region
      $region13: #{bottleneck_forward.3} parent=11 // pred_check
        %p214 = pneg %p79
      $region14: #{bottleneck_forward.3} parent=11 // pred_check_branch
        %216 = sbr.rel (%p214) target = $region16
      $region15: #{bottleneck_forward.3} parent=11 // pred_region
        %s217 = smul.u32 16, %s23
        %p218 = scmp.lt.s32.totalorder %s217, 15
        %s219 = scalar_select %p218, %s217, 15
        %s220 = smul.addr %s219, 4
        %s221 = scalar_lea.vmem %s1, %s220
        %s222 = smul.u32 16, %s23
      $region16: #{bottleneck_forward.3} parent=11 // pred_fallthru
        _
      // Predicated region
      $region17: #{bottleneck_forward.3} parent=11 // pred_check
        %p223 = pneg %p100
      $region18: #{bottleneck_forward.3} parent=11 // pred_check_branch
        %225 = sbr.rel (%p223) target = $region20
      $region19: #{bottleneck_forward.3} parent=11 // pred_region
        _
      $region20: #{bottleneck_forward.3} parent=11 // pred_fallthru
        _
      // Predicated region
      $region21: #{bottleneck_forward.3} parent=11 // pred_check
        %p226 = pneg %p126
      $region22: #{bottleneck_forward.3} parent=11 // pred_check_branch
        %228 = sbr.rel (%p226) target = $region24
      $region23: #{bottleneck_forward.3} parent=11 // pred_region
        %s229 = smul.u32 16, %s23
        %p230 = scmp.lt.s32.totalorder %s229, 15
        %s231 = scalar_select %p230, %s229, 15
        %s232 = smul.addr %s231, 4
        %s233 = scalar_lea.vmem %s3, %s232
        %s234 = smul.u32 16, %s23
      $region24: #{bottleneck_forward.3} parent=11 // pred_fallthru
        _
      // Predicated region
      $region25: #{bottleneck_forward.3} parent=11 // pred_check
        %p235 = pneg %p147
      $region26: #{bottleneck_forward.3} parent=11 // pred_check_branch
        %237 = sbr.rel (%p235) target = $region28
      $region27: #{bottleneck_forward.3} parent=11 // pred_region
        _
      $region28: #{bottleneck_forward.3} parent=11 // pred_fallthru
        _
    $region12: #{bottleneck_forward.3} parent=5 // pred_fallthru
      _
    %p238 = scmp.lt.s32.totalorder %s13, 2
    // Predicated region
    $region29: #{bottleneck_forward.3} parent=5 // pred_check
      %p239 = pneg %p238
    $region30: #{bottleneck_forward.3} parent=5 // pred_check_branch
      %241 = sbr.rel (%p239) target = $region32
    $region31: #{bottleneck_forward.3} parent=5 // pred_region
      // Predicated region
      $region33: #{bottleneck_forward.3} parent=31 // pred_check
        %p242 = pneg %p47
      $region34: #{bottleneck_forward.3} parent=31 // pred_check_branch
        %244 = sbr.rel (%p242) target = $region36
      $region35: #{bottleneck_forward.3} parent=31 // pred_region
        %s245 = smul.u32 32, %s20
        %p246 = scmp.lt.s32.totalorder %s245, 63
        %s247 = scalar_select %p246, %s245, 63
        %p248 = scmp.lt.s32.totalorder %s21, 0
        %s249 = scalar_select %p248, %s21, 0
        %s250 = sadd.s32 %s249, %s247
        %s251 = smul.addr %s250, 4
        %s252 = scalar_lea.vmem %s0, %s251
        %s253 = smul.u32 32, %s20
      $region36: #{bottleneck_forward.3} parent=31 // pred_fallthru
        _
    $region32: #{bottleneck_forward.3} parent=5 // pred_fallthru
      _
    %p254 = scmp.le.s32.totalorder 1, %s13
    %p255 = scmp.lt.s32.totalorder %s13, 3
    %p256 = pnand %p254, %p255
    %p257 = pneg %p256
    // Predicated region
    $region37: #{bottleneck_forward.3} parent=5 // pred_check
      _
    $region38: #{bottleneck_forward.3} parent=5 // pred_check_branch
      %259 = sbr.rel (%p256) target = $region40
    $region39: #{bottleneck_forward.3} parent=5 // pred_region
      %s260 = ssub.s32 %s13, 1
      %s261 = smul.u32 32, %s22
      %p262 = scmp.lt.s32.totalorder %s261, 63
      %s263 = scalar_select %p262, %s261, 63
      %p264 = scmp.lt.s32.totalorder %s23, 0
      %s265 = scalar_select %p264, %s23, 0
      %s266 = sadd.s32 %s265, %s263
      %s267 = smul.addr %s266, 4
      %s268 = scalar_lea.vmem %s0, %s267
      %p269 = pneg %p53
      %p270 = pneg %p50
      %s271 = smul.u32 16, %s23
      %p272 = scmp.lt.s32.totalorder %s271, 15
      %s273 = scalar_select %p272, %s271, 15
      %s274 = smul.addr %s273, 4
      %s275 = scalar_lea.vmem %s1, %s274
      %p276 = pneg %p79
      %p277 = pneg %p76
      %p278 = pneg %p100
      %p279 = pneg %p97
      %s280 = smul.u32 16, %s23
      %p281 = scmp.lt.s32.totalorder %s280, 15
      %s282 = scalar_select %p281, %s280, 15
      %s283 = smul.addr %s282, 4
      %s284 = scalar_lea.vmem %s3, %s283
      %p285 = pneg %p126
      %p286 = pneg %p123
      %p287 = pneg %p147
      %p288 = pneg %p144
      %p289 = pneg %p173
      %p290 = pneg %p170
      %s291 = smul.u32 32, %s22
      %p292 = scmp.lt.s32.totalorder %s291, 63
      %s293 = scalar_select %p292, %s291, 63
      %s294 = smul.addr %s293, 4
      %s295 = scalar_lea.vmem %s5, %s294
      %p296 = pneg %p199
      %p297 = pneg %p196
      %s298 = smul.u32 32, %s22
      %p299 = scmp.lt.s32.totalorder %s298, 63
      %s300 = scalar_select %p299, %s298, 63
      %s301 = smul.addr %s300, 4
      %s302 = scalar_lea.vmem %s6, %s301
      %s303 = smul.u32 32, %s22
      %p304 = scmp.lt.s32.totalorder %s303, 63
      %s305 = scalar_select %p304, %s303, 63
      %p306 = scmp.lt.s32.totalorder %s23, 0
      %s307 = scalar_select %p306, %s23, 0
      %s308 = sadd.s32 %s307, %s305
      %s309 = smul.addr %s308, 4
      %s310 = scalar_lea.vmem %s0, %s309
      %s311 = smul.u32 32, %s22
      %s312 = smul.u32 16, %s23
      %p313 = scmp.lt.s32.totalorder %s312, 15
      %s314 = scalar_select %p313, %s312, 15
      %s315 = smul.addr %s314, 4
      %s316 = scalar_lea.vmem %s1, %s315
      %s317 = smul.u32 16, %s23
      %s318 = smul.u32 16, %s23
      %p319 = scmp.lt.s32.totalorder %s318, 15
      %s320 = scalar_select %p319, %s318, 15
      %s321 = smul.addr %s320, 4
      %s322 = scalar_lea.vmem %s3, %s321
      %s323 = smul.u32 16, %s23
      %s324 = smul.u32 32, %s22
      %p325 = scmp.lt.s32.totalorder %s324, 63
      %s326 = scalar_select %p325, %s324, 63
      %s327 = smul.addr %s326, 4
      %s328 = scalar_lea.vmem %s5, %s327
      %s329 = smul.u32 32, %s22
      %s330 = smul.u32 32, %s22
      %p331 = scmp.lt.s32.totalorder %s330, 63
      %s332 = scalar_select %p331, %s330, 63
      %s333 = smul.addr %s332, 4
      %s334 = scalar_lea.vmem %s6, %s333
      %s335 = smul.u32 32, %s22
      %p337 = scmp.eq.s32.totalorder %s23, 0
      // Predicated region
      $region41: #{bottleneck_forward.3} parent=39 // pred_check
        %p338 = pneg %p337
      $region42: #{bottleneck_forward.3} parent=39 // pred_check_branch
        %340 = sbr.rel (%p338) target = $region44
      $region43: #{bottleneck_forward.3} parent=39 // pred_region
        %341 = vst [vmem:[#allocation2] sm:$0xff] 0.0
        %342 = vst [vmem:[#allocation2 + $0x8] sm:$0xff] 0.0
        %343 = vst [vmem:[#allocation2 + $0x10] sm:$0xff] 0.0
        %344 = vst [vmem:[#allocation2 + $0x18] sm:$0xff] 0.0
        %345 = vst [vmem:[#allocation2 + $0x20] sm:$0xff] 0.0
        %346 = vst [vmem:[#allocation2 + $0x28] sm:$0xff] 0.0
        %347 = vst [vmem:[#allocation2 + $0x30] sm:$0xff] 0.0
        %348 = vst [vmem:[#allocation2 + $0x38] sm:$0xff] 0.0
        %349 = vst [vmem:[#allocation2 + $0x40] sm:$0xff] 0.0
        %350 = vst [vmem:[#allocation2 + $0x48] sm:$0xff] 0.0
        %351 = vst [vmem:[#allocation2 + $0x50] sm:$0xff] 0.0
        %352 = vst [vmem:[#allocation2 + $0x58] sm:$0xff] 0.0
        %353 = vst [vmem:[#allocation2 + $0x60] sm:$0xff] 0.0
        %354 = vst [vmem:[#allocation2 + $0x68] sm:$0xff] 0.0
        %355 = vst [vmem:[#allocation2 + $0x70] sm:$0xff] 0.0
        %356 = vst [vmem:[#allocation2 + $0x78] sm:$0xff] 0.0
        %357 = vst [vmem:[#allocation2 + $0x80] sm:$0xff] 0.0
        %358 = vst [vmem:[#allocation2 + $0x88] sm:$0xff] 0.0
        %359 = vst [vmem:[#allocation2 + $0x90] sm:$0xff] 0.0
        %360 = vst [vmem:[#allocation2 + $0x98] sm:$0xff] 0.0
        %361 = vst [vmem:[#allocation2 + $0xa0] sm:$0xff] 0.0
        %362 = vst [vmem:[#allocation2 + $0xa8] sm:$0xff] 0.0
        %363 = vst [vmem:[#allocation2 + $0xb0] sm:$0xff] 0.0
        %364 = vst [vmem:[#allocation2 + $0xb8] sm:$0xff] 0.0
        %365 = vst [vmem:[#allocation2 + $0xc0] sm:$0xff] 0.0
        %366 = vst [vmem:[#allocation2 + $0xc8] sm:$0xff] 0.0
        %367 = vst [vmem:[#allocation2 + $0xd0] sm:$0xff] 0.0
        %368 = vst [vmem:[#allocation2 + $0xd8] sm:$0xff] 0.0
        %369 = vst [vmem:[#allocation2 + $0xe0] sm:$0xff] 0.0
        %370 = vst [vmem:[#allocation2 + $0xe8] sm:$0xff] 0.0
        %371 = vst [vmem:[#allocation2 + $0xf0] sm:$0xff] 0.0
        %372 = vst [vmem:[#allocation2 + $0xf8] sm:$0xff] 0.0
        %373 = vst [vmem:[#allocation3] sm:$0xff] 0.0
        %374 = vst [vmem:[#allocation3 + $0x8] sm:$0xff] 0.0
        %375 = vst [vmem:[#allocation3 + $0x10] sm:$0xff] 0.0
        %376 = vst [vmem:[#allocation3 + $0x18] sm:$0xff] 0.0
        %377 = vst [vmem:[#allocation3 + $0x20] sm:$0xff] 0.0
        %378 = vst [vmem:[#allocation3 + $0x28] sm:$0xff] 0.0
        %379 = vst [vmem:[#allocation3 + $0x30] sm:$0xff] 0.0
        %380 = vst [vmem:[#allocation3 + $0x38] sm:$0xff] 0.0
        %381 = vst [vmem:[#allocation3 + $0x40] sm:$0xff] 0.0
        %382 = vst [vmem:[#allocation3 + $0x48] sm:$0xff] 0.0
        %383 = vst [vmem:[#allocation3 + $0x50] sm:$0xff] 0.0
        %384 = vst [vmem:[#allocation3 + $0x58] sm:$0xff] 0.0
        %385 = vst [vmem:[#allocation3 + $0x60] sm:$0xff] 0.0
        %386 = vst [vmem:[#allocation3 + $0x68] sm:$0xff] 0.0
        %387 = vst [vmem:[#allocation3 + $0x70] sm:$0xff] 0.0
        %388 = vst [vmem:[#allocation3 + $0x78] sm:$0xff] 0.0
        %389 = vst [vmem:[#allocation3 + $0x80] sm:$0xff] 0.0
        %390 = vst [vmem:[#allocation3 + $0x88] sm:$0xff] 0.0
        %391 = vst [vmem:[#allocation3 + $0x90] sm:$0xff] 0.0
        %392 = vst [vmem:[#allocation3 + $0x98] sm:$0xff] 0.0
        %393 = vst [vmem:[#allocation3 + $0xa0] sm:$0xff] 0.0
        %394 = vst [vmem:[#allocation3 + $0xa8] sm:$0xff] 0.0
        %395 = vst [vmem:[#allocation3 + $0xb0] sm:$0xff] 0.0
        %396 = vst [vmem:[#allocation3 + $0xb8] sm:$0xff] 0.0
        %397 = vst [vmem:[#allocation3 + $0xc0] sm:$0xff] 0.0
        %398 = vst [vmem:[#allocation3 + $0xc8] sm:$0xff] 0.0
        %399 = vst [vmem:[#allocation3 + $0xd0] sm:$0xff] 0.0
        %400 = vst [vmem:[#allocation3 + $0xd8] sm:$0xff] 0.0
        %401 = vst [vmem:[#allocation3 + $0xe0] sm:$0xff] 0.0
        %402 = vst [vmem:[#allocation3 + $0xe8] sm:$0xff] 0.0
        %403 = vst [vmem:[#allocation3 + $0xf0] sm:$0xff] 0.0
        %404 = vst [vmem:[#allocation3 + $0xf8] sm:$0xff] 0.0
      $region44: #{bottleneck_forward.3} parent=39 // pred_fallthru
        _
      %v405 = vld [vmem:[%s310] sm:$0xf]
      %v406 = vld [vmem:[%s310 + $0x4] sm:$0xf]
      %v407 = vld [vmem:[%s310 + $0x8] sm:$0xf]
      %v408 = vld [vmem:[%s310 + $0xc] sm:$0xf]
      %v409 = vld [vmem:[%s310 + $0x10] sm:$0xf]
      %v410 = vld [vmem:[%s310 + $0x14] sm:$0xf]
      %v411 = vld [vmem:[%s310 + $0x18] sm:$0xf]
      %v412 = vld [vmem:[%s310 + $0x1c] sm:$0xf]
      %v413 = vld [vmem:[%s310 + $0x20] sm:$0xf]
      %v414 = vld [vmem:[%s310 + $0x24] sm:$0xf]
      %v415 = vld [vmem:[%s310 + $0x28] sm:$0xf]
      %v416 = vld [vmem:[%s310 + $0x2c] sm:$0xf]
      %v417 = vld [vmem:[%s310 + $0x30] sm:$0xf]
      %v418 = vld [vmem:[%s310 + $0x34] sm:$0xf]
      %v419 = vld [vmem:[%s310 + $0x38] sm:$0xf]
      %v420 = vld [vmem:[%s310 + $0x3c] sm:$0xf]
      %v421 = vld [vmem:[%s310 + $0x40] sm:$0xf]
      %v422 = vld [vmem:[%s310 + $0x44] sm:$0xf]
      %v423 = vld [vmem:[%s310 + $0x48] sm:$0xf]
      %v424 = vld [vmem:[%s310 + $0x4c] sm:$0xf]
      %v425 = vld [vmem:[%s310 + $0x50] sm:$0xf]
      %v426 = vld [vmem:[%s310 + $0x54] sm:$0xf]
      %v427 = vld [vmem:[%s310 + $0x58] sm:$0xf]
      %v428 = vld [vmem:[%s310 + $0x5c] sm:$0xf]
      %v429 = vld [vmem:[%s310 + $0x60] sm:$0xf]
      %v430 = vld [vmem:[%s310 + $0x64] sm:$0xf]
      %v431 = vld [vmem:[%s310 + $0x68] sm:$0xf]
      %v432 = vld [vmem:[%s310 + $0x6c] sm:$0xf]
      %v433 = vld [vmem:[%s310 + $0x70] sm:$0xf]
      %v434 = vld [vmem:[%s310 + $0x74] sm:$0xf]
      %v435 = vld [vmem:[%s310 + $0x78] sm:$0xf]
      %v436 = vld [vmem:[%s310 + $0x7c] sm:$0xf]
      %v437 = vld [vmem:[#allocation2] sm:$0xff]
      %v438 = vld [vmem:[#allocation2 + $0x8] sm:$0xff]
      %v439 = vld [vmem:[#allocation2 + $0x10] sm:$0xff]
      %v440 = vld [vmem:[#allocation2 + $0x18] sm:$0xff]
      %v441 = vld [vmem:[#allocation2 + $0x20] sm:$0xff]
      %v442 = vld [vmem:[#allocation2 + $0x28] sm:$0xff]
      %v443 = vld [vmem:[#allocation2 + $0x30] sm:$0xff]
      %v444 = vld [vmem:[#allocation2 + $0x38] sm:$0xff]
      %v445 = vld [vmem:[#allocation2 + $0x40] sm:$0xff]
      %v446 = vld [vmem:[#allocation2 + $0x48] sm:$0xff]
      %v447 = vld [vmem:[#allocation2 + $0x50] sm:$0xff]
      %v448 = vld [vmem:[#allocation2 + $0x58] sm:$0xff]
      %v449 = vld [vmem:[#allocation2 + $0x60] sm:$0xff]
      %v450 = vld [vmem:[#allocation2 + $0x68] sm:$0xff]
      %v451 = vld [vmem:[#allocation2 + $0x70] sm:$0xff]
      %v452 = vld [vmem:[#allocation2 + $0x78] sm:$0xff]
      %v453 = vld [vmem:[#allocation2 + $0x80] sm:$0xff]
      %v454 = vld [vmem:[#allocation2 + $0x88] sm:$0xff]
      %v455 = vld [vmem:[#allocation2 + $0x90] sm:$0xff]
      %v456 = vld [vmem:[#allocation2 + $0x98] sm:$0xff]
      %v457 = vld [vmem:[#allocation2 + $0xa0] sm:$0xff]
      %v458 = vld [vmem:[#allocation2 + $0xa8] sm:$0xff]
      %v459 = vld [vmem:[#allocation2 + $0xb0] sm:$0xff]
      %v460 = vld [vmem:[#allocation2 + $0xb8] sm:$0xff]
      %v461 = vld [vmem:[#allocation2 + $0xc0] sm:$0xff]
      %v462 = vld [vmem:[#allocation2 + $0xc8] sm:$0xff]
      %v463 = vld [vmem:[#allocation2 + $0xd0] sm:$0xff]
      %v464 = vld [vmem:[#allocation2 + $0xd8] sm:$0xff]
      %v465 = vld [vmem:[#allocation2 + $0xe0] sm:$0xff]
      %v466 = vld [vmem:[#allocation2 + $0xe8] sm:$0xff]
      %v467 = vld [vmem:[#allocation2 + $0xf0] sm:$0xff]
      %v468 = vld [vmem:[#allocation2 + $0xf8] sm:$0xff]
      %v469 = vld [vmem:[%s316] sm:$0xf]
      %v470 = vld [vmem:[%s316 + $0x4] sm:$0xf]
      %v471 = vld [vmem:[%s316 + $0x8] sm:$0xf]
      %v472 = vld [vmem:[%s316 + $0xc] sm:$0xf]
      %v473 = vld [vmem:[%s316 + $0x10] sm:$0xf]
      %v474 = vld [vmem:[%s316 + $0x14] sm:$0xf]
      %v475 = vld [vmem:[%s316 + $0x18] sm:$0xf]
      %v476 = vld [vmem:[%s316 + $0x1c] sm:$0xf]
      %v477 = vld [vmem:[%s316 + $0x20] sm:$0xf]
      %v478 = vld [vmem:[%s316 + $0x24] sm:$0xf]
      %v479 = vld [vmem:[%s316 + $0x28] sm:$0xf]
      %v480 = vld [vmem:[%s316 + $0x2c] sm:$0xf]
      %v481 = vld [vmem:[%s316 + $0x30] sm:$0xf]
      %v482 = vld [vmem:[%s316 + $0x34] sm:$0xf]
      %v483 = vld [vmem:[%s316 + $0x38] sm:$0xf]
      %v484 = vld [vmem:[%s316 + $0x3c] sm:$0xf]
      %v517 = vunpack.c.l.b16 %v405
      %v518 = vunpack.c.l.b16 %v406
      %v519 = vunpack.c.l.b16 %v407
      %v520 = vunpack.c.l.b16 %v408
      %v521 = vunpack.c.l.b16 %v409
      %v522 = vunpack.c.l.b16 %v410
      %v523 = vunpack.c.l.b16 %v411
      %v524 = vunpack.c.l.b16 %v412
      %v525 = vunpack.c.l.b16 %v413
      %v526 = vunpack.c.l.b16 %v414
      %v527 = vunpack.c.l.b16 %v415
      %v528 = vunpack.c.l.b16 %v416
      %v529 = vunpack.c.l.b16 %v417
      %v530 = vunpack.c.l.b16 %v418
      %v531 = vunpack.c.l.b16 %v419
      %v532 = vunpack.c.l.b16 %v420
      %v533 = vunpack.c.l.b16 %v421
      %v534 = vunpack.c.l.b16 %v422
      %v535 = vunpack.c.l.b16 %v423
      %v536 = vunpack.c.l.b16 %v424
      %v537 = vunpack.c.l.b16 %v425
      %v538 = vunpack.c.l.b16 %v426
      %v539 = vunpack.c.l.b16 %v427
      %v540 = vunpack.c.l.b16 %v428
      %v541 = vunpack.c.l.b16 %v429
      %v542 = vunpack.c.l.b16 %v430
      %v543 = vunpack.c.l.b16 %v431
      %v544 = vunpack.c.l.b16 %v432
      %v545 = vunpack.c.l.b16 %v433
      %v546 = vunpack.c.l.b16 %v434
      %v547 = vunpack.c.l.b16 %v435
      %v548 = vunpack.c.l.b16 %v436
      %v549 = vpack.c.b16 %v518, %v517
      %v550 = vpack.c.b16 %v520, %v519
      %v551 = vpack.c.b16 %v522, %v521
      %v552 = vpack.c.b16 %v524, %v523
      %v553 = vpack.c.b16 %v526, %v525
      %v554 = vpack.c.b16 %v528, %v527
      %v555 = vpack.c.b16 %v530, %v529
      %v556 = vpack.c.b16 %v532, %v531
      %v557 = vpack.c.b16 %v534, %v533
      %v558 = vpack.c.b16 %v536, %v535
      %v559 = vpack.c.b16 %v538, %v537
      %v560 = vpack.c.b16 %v540, %v539
      %v561 = vpack.c.b16 %v542, %v541
      %v562 = vpack.c.b16 %v544, %v543
      %v563 = vpack.c.b16 %v546, %v545
      %v564 = vpack.c.b16 %v548, %v547
      %v597 = vunpack.c.l.b16 %v469
      %v598 = vunpack.c.l.b16 %v470
      %v599 = vunpack.c.l.b16 %v471
      %v600 = vunpack.c.l.b16 %v472
      %v601 = vunpack.c.l.b16 %v473
      %v602 = vunpack.c.l.b16 %v474
      %v603 = vunpack.c.l.b16 %v475
      %v604 = vunpack.c.l.b16 %v476
      %v605 = vunpack.c.l.b16 %v477
      %v606 = vunpack.c.l.b16 %v478
      %v607 = vunpack.c.l.b16 %v479
      %v608 = vunpack.c.l.b16 %v480
      %v609 = vunpack.c.l.b16 %v481
      %v610 = vunpack.c.l.b16 %v482
      %v611 = vunpack.c.l.b16 %v483
      %v612 = vunpack.c.l.b16 %v484
      %v613 = vpack.c.b16 %v598, %v597
      %v614 = vpack.c.b16 %v600, %v599
      %v615 = vpack.c.b16 %v602, %v601
      %v616 = vpack.c.b16 %v604, %v603
      %v617 = vpack.c.b16 %v606, %v605
      %v618 = vpack.c.b16 %v608, %v607
      %v619 = vpack.c.b16 %v610, %v609
      %v620 = vpack.c.b16 %v612, %v611
      %629 = vmatprep.subr.bf16.mxu0 0
      %630 = vmatpush1.bf16.msra.mxu0 %v613
      %631 = vmatprep.subr.bf16.mxu0 0
      %632 = vmatpush1.bf16.msra.mxu0 %v614
      %633 = vmatprep.subr.bf16.mxu0 0
      %634 = vmatpush1.bf16.msra.mxu0 %v615
      %635 = vmatprep.subr.bf16.mxu0 0
      %636 = vmatpush1.bf16.msra.mxu0 %v616
      %637 = vmatprep.subr.bf16.mxu0 0
      %638 = vmatpush1.bf16.msra.mxu0 %v617
      %639 = vmatprep.subr.bf16.mxu0 0
      %640 = vmatpush1.bf16.msra.mxu0 %v618
      %641 = vmatprep.subr.bf16.mxu0 0
      %642 = vmatpush1.bf16.msra.mxu0 %v619
      %643 = vmatprep.subr.bf16.mxu0 0
      %644 = vmatpush1.bf16.msra.mxu0 %v620
      %645 = vmatprep.subr.bf16.mxu0 0
      %646 = vmatpush1.bf16.msra.mxu0 0
      %647 = vmatprep.subr.bf16.mxu0 0
      %648 = vmatpush1.bf16.msra.mxu0 0
      %649 = vmatprep.subr.bf16.mxu0 0
      %650 = vmatpush1.bf16.msra.mxu0 0
      %651 = vmatprep.subr.bf16.mxu0 0
      %652 = vmatpush1.bf16.msra.mxu0 0
      %653 = vmatprep.subr.bf16.mxu0 0
      %654 = vmatpush1.bf16.msra.mxu0 0
      %655 = vmatprep.subr.bf16.mxu0 0
      %656 = vmatpush1.bf16.msra.mxu0 0
      %657 = vmatprep.subr.bf16.mxu0 0
      %658 = vmatpush1.bf16.msra.mxu0 0
      %659 = vmatprep.subr.bf16.mxu0 0
      %660 = vmatpush1.bf16.msra.mxu0 0
      %661 = vmatprep.mubr.bf16.mxu0 0
      %662 = vmatmul.mubr.bf16.gmra.mrb[0].mxu0 %v549
      %v663 = vpop.f32.mrb[0].mxu0
      %v664 = vadd.f32 0.0, %v663
      %v665 = vpop.f32.mrb[0].mxu0
      %v666 = vpop.f32.mrb[0].mxu0
      %v667 = vadd.f32 0.0, %v666
      %v668 = vpop.f32.mrb[0].mxu0
      %669 = vmatprep.mubr.bf16.mxu0 0
      %670 = vmatmul.mubr.bf16.gmra.mrb[0].mxu0 %v550
      %v671 = vpop.f32.mrb[0].mxu0
      %v672 = vadd.f32 0.0, %v671
      %v673 = vpop.f32.mrb[0].mxu0
      %v674 = vpop.f32.mrb[0].mxu0
      %v675 = vadd.f32 0.0, %v674
      %v676 = vpop.f32.mrb[0].mxu0
      %677 = vmatprep.mubr.bf16.mxu0 0
      %678 = vmatmul.mubr.bf16.gmra.mrb[0].mxu0 %v551
      %v679 = vpop.f32.mrb[0].mxu0
      %v680 = vadd.f32 0.0, %v679
      %v681 = vpop.f32.mrb[0].mxu0
      %v682 = vpop.f32.mrb[0].mxu0
      %v683 = vadd.f32 0.0, %v682
      %v684 = vpop.f32.mrb[0].mxu0
      %685 = vmatprep.mubr.bf16.mxu0 0
      %686 = vmatmul.mubr.bf16.gmra.mrb[0].mxu0 %v552
      %v687 = vpop.f32.mrb[0].mxu0
      %v688 = vadd.f32 0.0, %v687
      %v689 = vpop.f32.mrb[0].mxu0
      %v690 = vpop.f32.mrb[0].mxu0
      %v691 = vadd.f32 0.0, %v690
      %v692 = vpop.f32.mrb[0].mxu0
      %693 = vmatprep.mubr.bf16.mxu0 0
      %694 = vmatmul.mubr.bf16.gmra.mrb[0].mxu0 %v553
      %v695 = vpop.f32.mrb[0].mxu0
      %v696 = vadd.f32 0.0, %v695
      %v697 = vpop.f32.mrb[0].mxu0
      %v698 = vpop.f32.mrb[0].mxu0
      %v699 = vadd.f32 0.0, %v698
      %v700 = vpop.f32.mrb[0].mxu0
      %701 = vmatprep.mubr.bf16.mxu0 0
      %702 = vmatmul.mubr.bf16.gmra.mrb[0].mxu0 %v554
      %v703 = vpop.f32.mrb[0].mxu0
      %v704 = vadd.f32 0.0, %v703
      %v705 = vpop.f32.mrb[0].mxu0
      %v706 = vpop.f32.mrb[0].mxu0
      %v707 = vadd.f32 0.0, %v706
      %v708 = vpop.f32.mrb[0].mxu0
      %709 = vmatprep.mubr.bf16.mxu0 0
      %710 = vmatmul.mubr.bf16.gmra.mrb[0].mxu0 %v555
      %v711 = vpop.f32.mrb[0].mxu0
      %v712 = vadd.f32 0.0, %v711
      %v713 = vpop.f32.mrb[0].mxu0
      %v714 = vpop.f32.mrb[0].mxu0
      %v715 = vadd.f32 0.0, %v714
      %v716 = vpop.f32.mrb[0].mxu0
      %717 = vmatprep.mubr.bf16.mxu0 0
      %718 = vmatmul.mubr.bf16.gmra.mrb[0].mxu0 %v556
      %v719 = vpop.f32.mrb[0].mxu0
      %v720 = vadd.f32 0.0, %v719
      %v721 = vpop.f32.mrb[0].mxu0
      %v722 = vpop.f32.mrb[0].mxu0
      %v723 = vadd.f32 0.0, %v722
      %v724 = vpop.f32.mrb[0].mxu0
      %725 = vmatprep.mubr.bf16.mxu0 0
      %726 = vmatmul.mubr.bf16.gmra.mrb[0].mxu0 %v557
      %v727 = vpop.f32.mrb[0].mxu0
      %v728 = vadd.f32 0.0, %v727
      %v729 = vpop.f32.mrb[0].mxu0
      %v730 = vpop.f32.mrb[0].mxu0
      %v731 = vadd.f32 0.0, %v730
      %v732 = vpop.f32.mrb[0].mxu0
      %733 = vmatprep.mubr.bf16.mxu0 0
      %734 = vmatmul.mubr.bf16.gmra.mrb[0].mxu0 %v558
      %v735 = vpop.f32.mrb[0].mxu0
      %v736 = vadd.f32 0.0, %v735
      %v737 = vpop.f32.mrb[0].mxu0
      %v738 = vpop.f32.mrb[0].mxu0
      %v739 = vadd.f32 0.0, %v738
      %v740 = vpop.f32.mrb[0].mxu0
      %741 = vmatprep.mubr.bf16.mxu0 0
      %742 = vmatmul.mubr.bf16.gmra.mrb[0].mxu0 %v559
      %v743 = vpop.f32.mrb[0].mxu0
      %v744 = vadd.f32 0.0, %v743
      %v745 = vpop.f32.mrb[0].mxu0
      %v746 = vpop.f32.mrb[0].mxu0
      %v747 = vadd.f32 0.0, %v746
      %v748 = vpop.f32.mrb[0].mxu0
      %749 = vmatprep.mubr.bf16.mxu0 0
      %750 = vmatmul.mubr.bf16.gmra.mrb[0].mxu0 %v560
      %v751 = vpop.f32.mrb[0].mxu0
      %v752 = vadd.f32 0.0, %v751
      %v753 = vpop.f32.mrb[0].mxu0
      %v754 = vpop.f32.mrb[0].mxu0
      %v755 = vadd.f32 0.0, %v754
      %v756 = vpop.f32.mrb[0].mxu0
      %757 = vmatprep.mubr.bf16.mxu0 0
      %758 = vmatmul.mubr.bf16.gmra.mrb[0].mxu0 %v561
      %v759 = vpop.f32.mrb[0].mxu0
      %v760 = vadd.f32 0.0, %v759
      %v761 = vpop.f32.mrb[0].mxu0
      %v762 = vpop.f32.mrb[0].mxu0
      %v763 = vadd.f32 0.0, %v762
      %v764 = vpop.f32.mrb[0].mxu0
      %765 = vmatprep.mubr.bf16.mxu0 0
      %766 = vmatmul.mubr.bf16.gmra.mrb[0].mxu0 %v562
      %v767 = vpop.f32.mrb[0].mxu0
      %v768 = vadd.f32 0.0, %v767
      %v769 = vpop.f32.mrb[0].mxu0
      %v770 = vpop.f32.mrb[0].mxu0
      %v771 = vadd.f32 0.0, %v770
      %v772 = vpop.f32.mrb[0].mxu0
      %773 = vmatprep.mubr.bf16.mxu0 0
      %774 = vmatmul.mubr.bf16.gmra.mrb[0].mxu0 %v563
      %v775 = vpop.f32.mrb[0].mxu0
      %v776 = vadd.f32 0.0, %v775
      %v777 = vpop.f32.mrb[0].mxu0
      %v778 = vpop.f32.mrb[0].mxu0
      %v779 = vadd.f32 0.0, %v778
      %v780 = vpop.f32.mrb[0].mxu0
      %781 = vmatprep.mubr.bf16.mxu0 0
      %782 = vmatmul.mubr.bf16.gmra.mrb[0].mxu0 %v564
      %v783 = vpop.f32.mrb[0].mxu0
      %v784 = vadd.f32 0.0, %v783
      %v785 = vpop.f32.mrb[0].mxu0
      %v786 = vpop.f32.mrb[0].mxu0
      %v787 = vadd.f32 0.0, %v786
      %v788 = vpop.f32.mrb[0].mxu0
      %789 = vdwg.mxu0
      %v790 = vadd.f32 %v437, %v664
      %v791 = vadd.f32 %v438, %v667
      %v792 = vadd.f32 %v439, %v672
      %v793 = vadd.f32 %v440, %v675
      %v794 = vadd.f32 %v441, %v680
      %v795 = vadd.f32 %v442, %v683
      %v796 = vadd.f32 %v443, %v688
      %v797 = vadd.f32 %v444, %v691
      %v798 = vadd.f32 %v445, %v696
      %v799 = vadd.f32 %v446, %v699
      %v800 = vadd.f32 %v447, %v704
      %v801 = vadd.f32 %v448, %v707
      %v802 = vadd.f32 %v449, %v712
      %v803 = vadd.f32 %v450, %v715
      %v804 = vadd.f32 %v451, %v720
      %v805 = vadd.f32 %v452, %v723
      %v806 = vadd.f32 %v453, %v728
      %v807 = vadd.f32 %v454, %v731
      %v808 = vadd.f32 %v455, %v736
      %v809 = vadd.f32 %v456, %v739
      %v810 = vadd.f32 %v457, %v744
      %v811 = vadd.f32 %v458, %v747
      %v812 = vadd.f32 %v459, %v752
      %v813 = vadd.f32 %v460, %v755
      %v814 = vadd.f32 %v461, %v760
      %v815 = vadd.f32 %v462, %v763
      %v816 = vadd.f32 %v463, %v768
      %v817 = vadd.f32 %v464, %v771
      %v818 = vadd.f32 %v465, %v776
      %v819 = vadd.f32 %v466, %v779
      %v820 = vadd.f32 %v467, %v784
      %v821 = vadd.f32 %v468, %v787
      %822 = vst [vmem:[#allocation2] sm:$0xff] %v790
      %823 = vst [vmem:[#allocation2 + $0x8] sm:$0xff] %v791
      %824 = vst [vmem:[#allocation2 + $0x10] sm:$0xff] %v792
      %825 = vst [vmem:[#allocation2 + $0x18] sm:$0xff] %v793
      %826 = vst [vmem:[#allocation2 + $0x20] sm:$0xff] %v794
      %827 = vst [vmem:[#allocation2 + $0x28] sm:$0xff] %v795
      %828 = vst [vmem:[#allocation2 + $0x30] sm:$0xff] %v796
      %829 = vst [vmem:[#allocation2 + $0x38] sm:$0xff] %v797
      %830 = vst [vmem:[#allocation2 + $0x40] sm:$0xff] %v798
      %831 = vst [vmem:[#allocation2 + $0x48] sm:$0xff] %v799
      %832 = vst [vmem:[#allocation2 + $0x50] sm:$0xff] %v800
      %833 = vst [vmem:[#allocation2 + $0x58] sm:$0xff] %v801
      %834 = vst [vmem:[#allocation2 + $0x60] sm:$0xff] %v802
      %835 = vst [vmem:[#allocation2 + $0x68] sm:$0xff] %v803
      %836 = vst [vmem:[#allocation2 + $0x70] sm:$0xff] %v804
      %837 = vst [vmem:[#allocation2 + $0x78] sm:$0xff] %v805
      %838 = vst [vmem:[#allocation2 + $0x80] sm:$0xff] %v806
      %839 = vst [vmem:[#allocation2 + $0x88] sm:$0xff] %v807
      %840 = vst [vmem:[#allocation2 + $0x90] sm:$0xff] %v808
      %841 = vst [vmem:[#allocation2 + $0x98] sm:$0xff] %v809
      %842 = vst [vmem:[#allocation2 + $0xa0] sm:$0xff] %v810
      %843 = vst [vmem:[#allocation2 + $0xa8] sm:$0xff] %v811
      %844 = vst [vmem:[#allocation2 + $0xb0] sm:$0xff] %v812
      %845 = vst [vmem:[#allocation2 + $0xb8] sm:$0xff] %v813
      %846 = vst [vmem:[#allocation2 + $0xc0] sm:$0xff] %v814
      %847 = vst [vmem:[#allocation2 + $0xc8] sm:$0xff] %v815
      %848 = vst [vmem:[#allocation2 + $0xd0] sm:$0xff] %v816
      %849 = vst [vmem:[#allocation2 + $0xd8] sm:$0xff] %v817
      %850 = vst [vmem:[#allocation2 + $0xe0] sm:$0xff] %v818
      %851 = vst [vmem:[#allocation2 + $0xe8] sm:$0xff] %v819
      %852 = vst [vmem:[#allocation2 + $0xf0] sm:$0xff] %v820
      %853 = vst [vmem:[#allocation2 + $0xf8] sm:$0xff] %v821
      %v854 = vld [vmem:[#allocation3] sm:$0xff]
      %v855 = vld [vmem:[#allocation3 + $0x8] sm:$0xff]
      %v856 = vld [vmem:[#allocation3 + $0x10] sm:$0xff]
      %v857 = vld [vmem:[#allocation3 + $0x18] sm:$0xff]
      %v858 = vld [vmem:[#allocation3 + $0x20] sm:$0xff]
      %v859 = vld [vmem:[#allocation3 + $0x28] sm:$0xff]
      %v860 = vld [vmem:[#allocation3 + $0x30] sm:$0xff]
      %v861 = vld [vmem:[#allocation3 + $0x38] sm:$0xff]
      %v862 = vld [vmem:[#allocation3 + $0x40] sm:$0xff]
      %v863 = vld [vmem:[#allocation3 + $0x48] sm:$0xff]
      %v864 = vld [vmem:[#allocation3 + $0x50] sm:$0xff]
      %v865 = vld [vmem:[#allocation3 + $0x58] sm:$0xff]
      %v866 = vld [vmem:[#allocation3 + $0x60] sm:$0xff]
      %v867 = vld [vmem:[#allocation3 + $0x68] sm:$0xff]
      %v868 = vld [vmem:[#allocation3 + $0x70] sm:$0xff]
      %v869 = vld [vmem:[#allocation3 + $0x78] sm:$0xff]
      %v870 = vld [vmem:[#allocation3 + $0x80] sm:$0xff]
      %v871 = vld [vmem:[#allocation3 + $0x88] sm:$0xff]
      %v872 = vld [vmem:[#allocation3 + $0x90] sm:$0xff]
      %v873 = vld [vmem:[#allocation3 + $0x98] sm:$0xff]
      %v874 = vld [vmem:[#allocation3 + $0xa0] sm:$0xff]
      %v875 = vld [vmem:[#allocation3 + $0xa8] sm:$0xff]
      %v876 = vld [vmem:[#allocation3 + $0xb0] sm:$0xff]
      %v877 = vld [vmem:[#allocation3 + $0xb8] sm:$0xff]
      %v878 = vld [vmem:[#allocation3 + $0xc0] sm:$0xff]
      %v879 = vld [vmem:[#allocation3 + $0xc8] sm:$0xff]
      %v880 = vld [vmem:[#allocation3 + $0xd0] sm:$0xff]
      %v881 = vld [vmem:[#allocation3 + $0xd8] sm:$0xff]
      %v882 = vld [vmem:[#allocation3 + $0xe0] sm:$0xff]
      %v883 = vld [vmem:[#allocation3 + $0xe8] sm:$0xff]
      %v884 = vld [vmem:[#allocation3 + $0xf0] sm:$0xff]
      %v885 = vld [vmem:[#allocation3 + $0xf8] sm:$0xff]
      %v886 = vld [vmem:[%s322] sm:$0xf]
      %v887 = vld [vmem:[%s322 + $0x4] sm:$0xf]
      %v888 = vld [vmem:[%s322 + $0x8] sm:$0xf]
      %v889 = vld [vmem:[%s322 + $0xc] sm:$0xf]
      %v890 = vld [vmem:[%s322 + $0x10] sm:$0xf]
      %v891 = vld [vmem:[%s322 + $0x14] sm:$0xf]
      %v892 = vld [vmem:[%s322 + $0x18] sm:$0xf]
      %v893 = vld [vmem:[%s322 + $0x1c] sm:$0xf]
      %v894 = vld [vmem:[%s322 + $0x20] sm:$0xf]
      %v895 = vld [vmem:[%s322 + $0x24] sm:$0xf]
      %v896 = vld [vmem:[%s322 + $0x28] sm:$0xf]
      %v897 = vld [vmem:[%s322 + $0x2c] sm:$0xf]
      %v898 = vld [vmem:[%s322 + $0x30] sm:$0xf]
      %v899 = vld [vmem:[%s322 + $0x34] sm:$0xf]
      %v900 = vld [vmem:[%s322 + $0x38] sm:$0xf]
      %v901 = vld [vmem:[%s322 + $0x3c] sm:$0xf]
      %v918 = vunpack.c.l.b16 %v886
      %v919 = vunpack.c.l.b16 %v887
      %v920 = vunpack.c.l.b16 %v888
      %v921 = vunpack.c.l.b16 %v889
      %v922 = vunpack.c.l.b16 %v890
      %v923 = vunpack.c.l.b16 %v891
      %v924 = vunpack.c.l.b16 %v892
      %v925 = vunpack.c.l.b16 %v893
      %v926 = vunpack.c.l.b16 %v894
      %v927 = vunpack.c.l.b16 %v895
      %v928 = vunpack.c.l.b16 %v896
      %v929 = vunpack.c.l.b16 %v897
      %v930 = vunpack.c.l.b16 %v898
      %v931 = vunpack.c.l.b16 %v899
      %v932 = vunpack.c.l.b16 %v900
      %v933 = vunpack.c.l.b16 %v901
      %v934 = vpack.c.b16 %v919, %v918
      %v935 = vpack.c.b16 %v921, %v920
      %v936 = vpack.c.b16 %v923, %v922
      %v937 = vpack.c.b16 %v925, %v924
      %v938 = vpack.c.b16 %v927, %v926
      %v939 = vpack.c.b16 %v929, %v928
      %v940 = vpack.c.b16 %v931, %v930
      %v941 = vpack.c.b16 %v933, %v932
      %950 = vmatprep.subr.bf16.mxu0 0
      %951 = vmatpush1.bf16.msra.mxu0 %v934
      %952 = vmatprep.subr.bf16.mxu0 0
      %953 = vmatpush1.bf16.msra.mxu0 %v935
      %954 = vmatprep.subr.bf16.mxu0 0
      %955 = vmatpush1.bf16.msra.mxu0 %v936
      %956 = vmatprep.subr.bf16.mxu0 0
      %957 = vmatpush1.bf16.msra.mxu0 %v937
      %958 = vmatprep.subr.bf16.mxu0 0
      %959 = vmatpush1.bf16.msra.mxu0 %v938
      %960 = vmatprep.subr.bf16.mxu0 0
      %961 = vmatpush1.bf16.msra.mxu0 %v939
      %962 = vmatprep.subr.bf16.mxu0 0
      %963 = vmatpush1.bf16.msra.mxu0 %v940
      %964 = vmatprep.subr.bf16.mxu0 0
      %965 = vmatpush1.bf16.msra.mxu0 %v941
      %966 = vmatprep.subr.bf16.mxu0 0
      %967 = vmatpush1.bf16.msra.mxu0 0
      %968 = vmatprep.subr.bf16.mxu0 0
      %969 = vmatpush1.bf16.msra.mxu0 0
      %970 = vmatprep.subr.bf16.mxu0 0
      %971 = vmatpush1.bf16.msra.mxu0 0
      %972 = vmatprep.subr.bf16.mxu0 0
      %973 = vmatpush1.bf16.msra.mxu0 0
      %974 = vmatprep.subr.bf16.mxu0 0
      %975 = vmatpush1.bf16.msra.mxu0 0
      %976 = vmatprep.subr.bf16.mxu0 0
      %977 = vmatpush1.bf16.msra.mxu0 0
      %978 = vmatprep.subr.bf16.mxu0 0
      %979 = vmatpush1.bf16.msra.mxu0 0
      %980 = vmatprep.subr.bf16.mxu0 0
      %981 = vmatpush1.bf16.msra.mxu0 0
      %982 = vmatprep.mubr.bf16.mxu0 0
      %983 = vmatmul.mubr.bf16.gmra.mrb[0].mxu0 %v549
      %v984 = vpop.f32.mrb[0].mxu0
      %v985 = vadd.f32 0.0, %v984
      %v986 = vpop.f32.mrb[0].mxu0
      %v987 = vpop.f32.mrb[0].mxu0
      %v988 = vadd.f32 0.0, %v987
      %v989 = vpop.f32.mrb[0].mxu0
      %990 = vmatprep.mubr.bf16.mxu0 0
      %991 = vmatmul.mubr.bf16.gmra.mrb[0].mxu0 %v550
      %v992 = vpop.f32.mrb[0].mxu0
      %v993 = vadd.f32 0.0, %v992
      %v994 = vpop.f32.mrb[0].mxu0
      %v995 = vpop.f32.mrb[0].mxu0
      %v996 = vadd.f32 0.0, %v995
      %v997 = vpop.f32.mrb[0].mxu0
      %998 = vmatprep.mubr.bf16.mxu0 0
      %999 = vmatmul.mubr.bf16.gmra.mrb[0].mxu0 %v551
      %v1000 = vpop.f32.mrb[0].mxu0
      %v1001 = vadd.f32 0.0, %v1000
      %v1002 = vpop.f32.mrb[0].mxu0
      %v1003 = vpop.f32.mrb[0].mxu0
      %v1004 = vadd.f32 0.0, %v1003
      %v1005 = vpop.f32.mrb[0].mxu0
      %1006 = vmatprep.mubr.bf16.mxu0 0
      %1007 = vmatmul.mubr.bf16.gmra.mrb[0].mxu0 %v552
      %v1008 = vpop.f32.mrb[0].mxu0
      %v1009 = vadd.f32 0.0, %v1008
      %v1010 = vpop.f32.mrb[0].mxu0
      %v1011 = vpop.f32.mrb[0].mxu0
      %v1012 = vadd.f32 0.0, %v1011
      %v1013 = vpop.f32.mrb[0].mxu0
      %1014 = vmatprep.mubr.bf16.mxu0 0
      %1015 = vmatmul.mubr.bf16.gmra.mrb[0].mxu0 %v553
      %v1016 = vpop.f32.mrb[0].mxu0
      %v1017 = vadd.f32 0.0, %v1016
      %v1018 = vpop.f32.mrb[0].mxu0
      %v1019 = vpop.f32.mrb[0].mxu0
      %v1020 = vadd.f32 0.0, %v1019
      %v1021 = vpop.f32.mrb[0].mxu0
      %1022 = vmatprep.mubr.bf16.mxu0 0
      %1023 = vmatmul.mubr.bf16.gmra.mrb[0].mxu0 %v554
      %v1024 = vpop.f32.mrb[0].mxu0
      %v1025 = vadd.f32 0.0, %v1024
      %v1026 = vpop.f32.mrb[0].mxu0
      %v1027 = vpop.f32.mrb[0].mxu0
      %v1028 = vadd.f32 0.0, %v1027
      %v1029 = vpop.f32.mrb[0].mxu0
      %1030 = vmatprep.mubr.bf16.mxu0 0
      %1031 = vmatmul.mubr.bf16.gmra.mrb[0].mxu0 %v555
      %v1032 = vpop.f32.mrb[0].mxu0
      %v1033 = vadd.f32 0.0, %v1032
      %v1034 = vpop.f32.mrb[0].mxu0
      %v1035 = vpop.f32.mrb[0].mxu0
      %v1036 = vadd.f32 0.0, %v1035
      %v1037 = vpop.f32.mrb[0].mxu0
      %1038 = vmatprep.mubr.bf16.mxu0 0
      %1039 = vmatmul.mubr.bf16.gmra.mrb[0].mxu0 %v556
      %v1040 = vpop.f32.mrb[0].mxu0
      %v1041 = vadd.f32 0.0, %v1040
      %v1042 = vpop.f32.mrb[0].mxu0
      %v1043 = vpop.f32.mrb[0].mxu0
      %v1044 = vadd.f32 0.0, %v1043
      %v1045 = vpop.f32.mrb[0].mxu0
      %1046 = vmatprep.mubr.bf16.mxu0 0
      %1047 = vmatmul.mubr.bf16.gmra.mrb[0].mxu0 %v557
      %v1048 = vpop.f32.mrb[0].mxu0
      %v1049 = vadd.f32 0.0, %v1048
      %v1050 = vpop.f32.mrb[0].mxu0
      %v1051 = vpop.f32.mrb[0].mxu0
      %v1052 = vadd.f32 0.0, %v1051
      %v1053 = vpop.f32.mrb[0].mxu0
      %1054 = vmatprep.mubr.bf16.mxu0 0
      %1055 = vmatmul.mubr.bf16.gmra.mrb[0].mxu0 %v558
      %v1056 = vpop.f32.mrb[0].mxu0
      %v1057 = vadd.f32 0.0, %v1056
      %v1058 = vpop.f32.mrb[0].mxu0
      %v1059 = vpop.f32.mrb[0].mxu0
      %v1060 = vadd.f32 0.0, %v1059
      %v1061 = vpop.f32.mrb[0].mxu0
      %1062 = vmatprep.mubr.bf16.mxu0 0
      %1063 = vmatmul.mubr.bf16.gmra.mrb[0].mxu0 %v559
      %v1064 = vpop.f32.mrb[0].mxu0
      %v1065 = vadd.f32 0.0, %v1064
      %v1066 = vpop.f32.mrb[0].mxu0
      %v1067 = vpop.f32.mrb[0].mxu0
      %v1068 = vadd.f32 0.0, %v1067
      %v1069 = vpop.f32.mrb[0].mxu0
      %1070 = vmatprep.mubr.bf16.mxu0 0
      %1071 = vmatmul.mubr.bf16.gmra.mrb[0].mxu0 %v560
      %v1072 = vpop.f32.mrb[0].mxu0
      %v1073 = vadd.f32 0.0, %v1072
      %v1074 = vpop.f32.mrb[0].mxu0
      %v1075 = vpop.f32.mrb[0].mxu0
      %v1076 = vadd.f32 0.0, %v1075
      %v1077 = vpop.f32.mrb[0].mxu0
      %1078 = vmatprep.mubr.bf16.mxu0 0
      %1079 = vmatmul.mubr.bf16.gmra.mrb[0].mxu0 %v561
      %v1080 = vpop.f32.mrb[0].mxu0
      %v1081 = vadd.f32 0.0, %v1080
      %v1082 = vpop.f32.mrb[0].mxu0
      %v1083 = vpop.f32.mrb[0].mxu0
      %v1084 = vadd.f32 0.0, %v1083
      %v1085 = vpop.f32.mrb[0].mxu0
      %1086 = vmatprep.mubr.bf16.mxu0 0
      %1087 = vmatmul.mubr.bf16.gmra.mrb[0].mxu0 %v562
      %v1088 = vpop.f32.mrb[0].mxu0
      %v1089 = vadd.f32 0.0, %v1088
      %v1090 = vpop.f32.mrb[0].mxu0
      %v1091 = vpop.f32.mrb[0].mxu0
      %v1092 = vadd.f32 0.0, %v1091
      %v1093 = vpop.f32.mrb[0].mxu0
      %1094 = vmatprep.mubr.bf16.mxu0 0
      %1095 = vmatmul.mubr.bf16.gmra.mrb[0].mxu0 %v563
      %v1096 = vpop.f32.mrb[0].mxu0
      %v1097 = vadd.f32 0.0, %v1096
      %v1098 = vpop.f32.mrb[0].mxu0
      %v1099 = vpop.f32.mrb[0].mxu0
      %v1100 = vadd.f32 0.0, %v1099
      %v1101 = vpop.f32.mrb[0].mxu0
      %1102 = vmatprep.mubr.bf16.mxu0 0
      %1103 = vmatmul.mubr.bf16.gmra.mrb[0].mxu0 %v564
      %v1104 = vpop.f32.mrb[0].mxu0
      %v1105 = vadd.f32 0.0, %v1104
      %v1106 = vpop.f32.mrb[0].mxu0
      %v1107 = vpop.f32.mrb[0].mxu0
      %v1108 = vadd.f32 0.0, %v1107
      %v1109 = vpop.f32.mrb[0].mxu0
      %1110 = vdwg.mxu0
      %v1111 = vadd.f32 %v854, %v985
      %v1112 = vadd.f32 %v855, %v988
      %v1113 = vadd.f32 %v856, %v993
      %v1114 = vadd.f32 %v857, %v996
      %v1115 = vadd.f32 %v858, %v1001
      %v1116 = vadd.f32 %v859, %v1004
      %v1117 = vadd.f32 %v860, %v1009
      %v1118 = vadd.f32 %v861, %v1012
      %v1119 = vadd.f32 %v862, %v1017
      %v1120 = vadd.f32 %v863, %v1020
      %v1121 = vadd.f32 %v864, %v1025
      %v1122 = vadd.f32 %v865, %v1028
      %v1123 = vadd.f32 %v866, %v1033
      %v1124 = vadd.f32 %v867, %v1036
      %v1125 = vadd.f32 %v868, %v1041
      %v1126 = vadd.f32 %v869, %v1044
      %v1127 = vadd.f32 %v870, %v1049
      %v1128 = vadd.f32 %v871, %v1052
      %v1129 = vadd.f32 %v872, %v1057
      %v1130 = vadd.f32 %v873, %v1060
      %v1131 = vadd.f32 %v874, %v1065
      %v1132 = vadd.f32 %v875, %v1068
      %v1133 = vadd.f32 %v876, %v1073
      %v1134 = vadd.f32 %v877, %v1076
      %v1135 = vadd.f32 %v878, %v1081
      %v1136 = vadd.f32 %v879, %v1084
      %v1137 = vadd.f32 %v880, %v1089
      %v1138 = vadd.f32 %v881, %v1092
      %v1139 = vadd.f32 %v882, %v1097
      %v1140 = vadd.f32 %v883, %v1100
      %v1141 = vadd.f32 %v884, %v1105
      %v1142 = vadd.f32 %v885, %v1108
      %1143 = vst [vmem:[#allocation3] sm:$0xff] %v1111
      %1144 = vst [vmem:[#allocation3 + $0x8] sm:$0xff] %v1112
      %1145 = vst [vmem:[#allocation3 + $0x10] sm:$0xff] %v1113
      %1146 = vst [vmem:[#allocation3 + $0x18] sm:$0xff] %v1114
      %1147 = vst [vmem:[#allocation3 + $0x20] sm:$0xff] %v1115
      %1148 = vst [vmem:[#allocation3 + $0x28] sm:$0xff] %v1116
      %1149 = vst [vmem:[#allocation3 + $0x30] sm:$0xff] %v1117
      %1150 = vst [vmem:[#allocation3 + $0x38] sm:$0xff] %v1118
      %1151 = vst [vmem:[#allocation3 + $0x40] sm:$0xff] %v1119
      %1152 = vst [vmem:[#allocation3 + $0x48] sm:$0xff] %v1120
      %1153 = vst [vmem:[#allocation3 + $0x50] sm:$0xff] %v1121
      %1154 = vst [vmem:[#allocation3 + $0x58] sm:$0xff] %v1122
      %1155 = vst [vmem:[#allocation3 + $0x60] sm:$0xff] %v1123
      %1156 = vst [vmem:[#allocation3 + $0x68] sm:$0xff] %v1124
      %1157 = vst [vmem:[#allocation3 + $0x70] sm:$0xff] %v1125
      %1158 = vst [vmem:[#allocation3 + $0x78] sm:$0xff] %v1126
      %1159 = vst [vmem:[#allocation3 + $0x80] sm:$0xff] %v1127
      %1160 = vst [vmem:[#allocation3 + $0x88] sm:$0xff] %v1128
      %1161 = vst [vmem:[#allocation3 + $0x90] sm:$0xff] %v1129
      %1162 = vst [vmem:[#allocation3 + $0x98] sm:$0xff] %v1130
      %1163 = vst [vmem:[#allocation3 + $0xa0] sm:$0xff] %v1131
      %1164 = vst [vmem:[#allocation3 + $0xa8] sm:$0xff] %v1132
      %1165 = vst [vmem:[#allocation3 + $0xb0] sm:$0xff] %v1133
      %1166 = vst [vmem:[#allocation3 + $0xb8] sm:$0xff] %v1134
      %1167 = vst [vmem:[#allocation3 + $0xc0] sm:$0xff] %v1135
      %1168 = vst [vmem:[#allocation3 + $0xc8] sm:$0xff] %v1136
      %1169 = vst [vmem:[#allocation3 + $0xd0] sm:$0xff] %v1137
      %1170 = vst [vmem:[#allocation3 + $0xd8] sm:$0xff] %v1138
      %1171 = vst [vmem:[#allocation3 + $0xe0] sm:$0xff] %v1139
      %1172 = vst [vmem:[#allocation3 + $0xe8] sm:$0xff] %v1140
      %1173 = vst [vmem:[#allocation3 + $0xf0] sm:$0xff] %v1141
      %1174 = vst [vmem:[#allocation3 + $0xf8] sm:$0xff] %v1142
      // Predicated region
      $region45: #{bottleneck_forward.3} parent=39 // pred_check
        %p1175 = pneg %p337
      $region46: #{bottleneck_forward.3} parent=39 // pred_check_branch
        %1177 = sbr.rel (%p1175) target = $region48
      $region47: #{bottleneck_forward.3} parent=39 // pred_region
        %v1178 = vld [vmem:[#allocation2] sm:$0xff]
        %v1179 = vld [vmem:[#allocation2 + $0x8] sm:$0xff]
        %v1180 = vld [vmem:[#allocation2 + $0x10] sm:$0xff]
        %v1181 = vld [vmem:[#allocation2 + $0x18] sm:$0xff]
        %v1182 = vld [vmem:[#allocation2 + $0x20] sm:$0xff]
        %v1183 = vld [vmem:[#allocation2 + $0x28] sm:$0xff]
        %v1184 = vld [vmem:[#allocation2 + $0x30] sm:$0xff]
        %v1185 = vld [vmem:[#allocation2 + $0x38] sm:$0xff]
        %v1186 = vld [vmem:[#allocation2 + $0x40] sm:$0xff]
        %v1187 = vld [vmem:[#allocation2 + $0x48] sm:$0xff]
        %v1188 = vld [vmem:[#allocation2 + $0x50] sm:$0xff]
        %v1189 = vld [vmem:[#allocation2 + $0x58] sm:$0xff]
        %v1190 = vld [vmem:[#allocation2 + $0x60] sm:$0xff]
        %v1191 = vld [vmem:[#allocation2 + $0x68] sm:$0xff]
        %v1192 = vld [vmem:[#allocation2 + $0x70] sm:$0xff]
        %v1193 = vld [vmem:[#allocation2 + $0x78] sm:$0xff]
        %v1194 = vld [vmem:[#allocation2 + $0x80] sm:$0xff]
        %v1195 = vld [vmem:[#allocation2 + $0x88] sm:$0xff]
        %v1196 = vld [vmem:[#allocation2 + $0x90] sm:$0xff]
        %v1197 = vld [vmem:[#allocation2 + $0x98] sm:$0xff]
        %v1198 = vld [vmem:[#allocation2 + $0xa0] sm:$0xff]
        %v1199 = vld [vmem:[#allocation2 + $0xa8] sm:$0xff]
        %v1200 = vld [vmem:[#allocation2 + $0xb0] sm:$0xff]
        %v1201 = vld [vmem:[#allocation2 + $0xb8] sm:$0xff]
        %v1202 = vld [vmem:[#allocation2 + $0xc0] sm:$0xff]
        %v1203 = vld [vmem:[#allocation2 + $0xc8] sm:$0xff]
        %v1204 = vld [vmem:[#allocation2 + $0xd0] sm:$0xff]
        %v1205 = vld [vmem:[#allocation2 + $0xd8] sm:$0xff]
        %v1206 = vld [vmem:[#allocation2 + $0xe0] sm:$0xff]
        %v1207 = vld [vmem:[#allocation2 + $0xe8] sm:$0xff]
        %v1208 = vld [vmem:[#allocation2 + $0xf0] sm:$0xff]
        %v1209 = vld [vmem:[#allocation2 + $0xf8] sm:$0xff]
        %v1210 = vld [vmem:[%s2] sm:$0x1]
        %v1212 = vlaneseq
        %v1213 = vshrl.u32 %v1212, 7
        %v1214 = vsub.s32 0, %v1213
        %v1215 = vrot.slane %v1210, %v1214
        %v1217 = vadd.f32 %v1178, %v1215
        %v1218 = vadd.f32 %v1179, %v1215
        %v1219 = vadd.f32 %v1180, %v1215
        %v1220 = vadd.f32 %v1181, %v1215
        %v1221 = vadd.f32 %v1182, %v1215
        %v1222 = vadd.f32 %v1183, %v1215
        %v1223 = vadd.f32 %v1184, %v1215
        %v1224 = vadd.f32 %v1185, %v1215
        %v1225 = vadd.f32 %v1186, %v1215
        %v1226 = vadd.f32 %v1187, %v1215
        %v1227 = vadd.f32 %v1188, %v1215
        %v1228 = vadd.f32 %v1189, %v1215
        %v1229 = vadd.f32 %v1190, %v1215
        %v1230 = vadd.f32 %v1191, %v1215
        %v1231 = vadd.f32 %v1192, %v1215
        %v1232 = vadd.f32 %v1193, %v1215
        %v1233 = vadd.f32 %v1194, %v1215
        %v1234 = vadd.f32 %v1195, %v1215
        %v1235 = vadd.f32 %v1196, %v1215
        %v1236 = vadd.f32 %v1197, %v1215
        %v1237 = vadd.f32 %v1198, %v1215
        %v1238 = vadd.f32 %v1199, %v1215
        %v1239 = vadd.f32 %v1200, %v1215
        %v1240 = vadd.f32 %v1201, %v1215
        %v1241 = vadd.f32 %v1202, %v1215
        %v1242 = vadd.f32 %v1203, %v1215
        %v1243 = vadd.f32 %v1204, %v1215
        %v1244 = vadd.f32 %v1205, %v1215
        %v1245 = vadd.f32 %v1206, %v1215
        %v1246 = vadd.f32 %v1207, %v1215
        %v1247 = vadd.f32 %v1208, %v1215
        %v1248 = vadd.f32 %v1209, %v1215
        %v1249 = vmax.f32 %v1217, 0.0
        %v1250 = vmax.f32 %v1218, 0.0
        %v1251 = vmax.f32 %v1219, 0.0
        %v1252 = vmax.f32 %v1220, 0.0
        %v1253 = vmax.f32 %v1221, 0.0
        %v1254 = vmax.f32 %v1222, 0.0
        %v1255 = vmax.f32 %v1223, 0.0
        %v1256 = vmax.f32 %v1224, 0.0
        %v1257 = vmax.f32 %v1225, 0.0
        %v1258 = vmax.f32 %v1226, 0.0
        %v1259 = vmax.f32 %v1227, 0.0
        %v1260 = vmax.f32 %v1228, 0.0
        %v1261 = vmax.f32 %v1229, 0.0
        %v1262 = vmax.f32 %v1230, 0.0
        %v1263 = vmax.f32 %v1231, 0.0
        %v1264 = vmax.f32 %v1232, 0.0
        %v1265 = vmax.f32 %v1233, 0.0
        %v1266 = vmax.f32 %v1234, 0.0
        %v1267 = vmax.f32 %v1235, 0.0
        %v1268 = vmax.f32 %v1236, 0.0
        %v1269 = vmax.f32 %v1237, 0.0
        %v1270 = vmax.f32 %v1238, 0.0
        %v1271 = vmax.f32 %v1239, 0.0
        %v1272 = vmax.f32 %v1240, 0.0
        %v1273 = vmax.f32 %v1241, 0.0
        %v1274 = vmax.f32 %v1242, 0.0
        %v1275 = vmax.f32 %v1243, 0.0
        %v1276 = vmax.f32 %v1244, 0.0
        %v1277 = vmax.f32 %v1245, 0.0
        %v1278 = vmax.f32 %v1246, 0.0
        %v1279 = vmax.f32 %v1247, 0.0
        %v1280 = vmax.f32 %v1248, 0.0
        %v1281 = vpack.c.bf16 %v1250, %v1249
        %v1282 = vpack.c.bf16 %v1252, %v1251
        %v1283 = vpack.c.bf16 %v1254, %v1253
        %v1284 = vpack.c.bf16 %v1256, %v1255
        %v1285 = vpack.c.bf16 %v1258, %v1257
        %v1286 = vpack.c.bf16 %v1260, %v1259
        %v1287 = vpack.c.bf16 %v1262, %v1261
        %v1288 = vpack.c.bf16 %v1264, %v1263
        %v1289 = vpack.c.bf16 %v1266, %v1265
        %v1290 = vpack.c.bf16 %v1268, %v1267
        %v1291 = vpack.c.bf16 %v1270, %v1269
        %v1292 = vpack.c.bf16 %v1272, %v1271
        %v1293 = vpack.c.bf16 %v1274, %v1273
        %v1294 = vpack.c.bf16 %v1276, %v1275
        %v1295 = vpack.c.bf16 %v1278, %v1277
        %v1296 = vpack.c.bf16 %v1280, %v1279
        %v1313 = vunpack.c.l.b16 %v1281
        %v1314 = vunpack.c.h.b16 %v1281
        %v1315 = vunpack.c.l.b16 %v1282
        %v1316 = vunpack.c.h.b16 %v1282
        %v1317 = vunpack.c.l.b16 %v1283
        %v1318 = vunpack.c.h.b16 %v1283
        %v1319 = vunpack.c.l.b16 %v1284
        %v1320 = vunpack.c.h.b16 %v1284
        %v1321 = vunpack.c.l.b16 %v1285
        %v1322 = vunpack.c.h.b16 %v1285
        %v1323 = vunpack.c.l.b16 %v1286
        %v1324 = vunpack.c.h.b16 %v1286
        %v1325 = vunpack.c.l.b16 %v1287
        %v1326 = vunpack.c.h.b16 %v1287
        %v1327 = vunpack.c.l.b16 %v1288
        %v1328 = vunpack.c.h.b16 %v1288
        %v1329 = vunpack.c.l.b16 %v1289
        %v1330 = vunpack.c.h.b16 %v1289
        %v1331 = vunpack.c.l.b16 %v1290
        %v1332 = vunpack.c.h.b16 %v1290
        %v1333 = vunpack.c.l.b16 %v1291
        %v1334 = vunpack.c.h.b16 %v1291
        %v1335 = vunpack.c.l.b16 %v1292
        %v1336 = vunpack.c.h.b16 %v1292
        %v1337 = vunpack.c.l.b16 %v1293
        %v1338 = vunpack.c.h.b16 %v1293
        %v1339 = vunpack.c.l.b16 %v1294
        %v1340 = vunpack.c.h.b16 %v1294
        %v1341 = vunpack.c.l.b16 %v1295
        %v1342 = vunpack.c.h.b16 %v1295
        %v1343 = vunpack.c.l.b16 %v1296
        %v1344 = vunpack.c.h.b16 %v1296
        %v1345 = vpack.c.b16 %v1313, %v1313
        %v1346 = vpack.c.b16 %v1314, %v1314
        %v1347 = vpack.c.b16 %v1315, %v1315
        %v1348 = vpack.c.b16 %v1316, %v1316
        %v1349 = vpack.c.b16 %v1317, %v1317
        %v1350 = vpack.c.b16 %v1318, %v1318
        %v1351 = vpack.c.b16 %v1319, %v1319
        %v1352 = vpack.c.b16 %v1320, %v1320
        %v1353 = vpack.c.b16 %v1321, %v1321
        %v1354 = vpack.c.b16 %v1322, %v1322
        %v1355 = vpack.c.b16 %v1323, %v1323
        %v1356 = vpack.c.b16 %v1324, %v1324
        %v1357 = vpack.c.b16 %v1325, %v1325
        %v1358 = vpack.c.b16 %v1326, %v1326
        %v1359 = vpack.c.b16 %v1327, %v1327
        %v1360 = vpack.c.b16 %v1328, %v1328
        %v1361 = vpack.c.b16 %v1329, %v1329
        %v1362 = vpack.c.b16 %v1330, %v1330
        %v1363 = vpack.c.b16 %v1331, %v1331
        %v1364 = vpack.c.b16 %v1332, %v1332
        %v1365 = vpack.c.b16 %v1333, %v1333
        %v1366 = vpack.c.b16 %v1334, %v1334
        %v1367 = vpack.c.b16 %v1335, %v1335
        %v1368 = vpack.c.b16 %v1336, %v1336
        %v1369 = vpack.c.b16 %v1337, %v1337
        %v1370 = vpack.c.b16 %v1338, %v1338
        %v1371 = vpack.c.b16 %v1339, %v1339
        %v1372 = vpack.c.b16 %v1340, %v1340
        %v1373 = vpack.c.b16 %v1341, %v1341
        %v1374 = vpack.c.b16 %v1342, %v1342
        %v1375 = vpack.c.b16 %v1343, %v1343
        %v1376 = vpack.c.b16 %v1344, %v1344
        %1409 = vst [vmem:[%s328] sm:$0xf] %v1345
        %1410 = vst [vmem:[%s328 + $0x4] sm:$0xf] %v1346
        %1411 = vst [vmem:[%s328 + $0x8] sm:$0xf] %v1347
        %1412 = vst [vmem:[%s328 + $0xc] sm:$0xf] %v1348
        %1413 = vst [vmem:[%s328 + $0x10] sm:$0xf] %v1349
        %1414 = vst [vmem:[%s328 + $0x14] sm:$0xf] %v1350
        %1415 = vst [vmem:[%s328 + $0x18] sm:$0xf] %v1351
        %1416 = vst [vmem:[%s328 + $0x1c] sm:$0xf] %v1352
        %1417 = vst [vmem:[%s328 + $0x20] sm:$0xf] %v1353
        %1418 = vst [vmem:[%s328 + $0x24] sm:$0xf] %v1354
        %1419 = vst [vmem:[%s328 + $0x28] sm:$0xf] %v1355
        %1420 = vst [vmem:[%s328 + $0x2c] sm:$0xf] %v1356
        %1421 = vst [vmem:[%s328 + $0x30] sm:$0xf] %v1357
        %1422 = vst [vmem:[%s328 + $0x34] sm:$0xf] %v1358
        %1423 = vst [vmem:[%s328 + $0x38] sm:$0xf] %v1359
        %1424 = vst [vmem:[%s328 + $0x3c] sm:$0xf] %v1360
        %1425 = vst [vmem:[%s328 + $0x40] sm:$0xf] %v1361
        %1426 = vst [vmem:[%s328 + $0x44] sm:$0xf] %v1362
        %1427 = vst [vmem:[%s328 + $0x48] sm:$0xf] %v1363
        %1428 = vst [vmem:[%s328 + $0x4c] sm:$0xf] %v1364
        %1429 = vst [vmem:[%s328 + $0x50] sm:$0xf] %v1365
        %1430 = vst [vmem:[%s328 + $0x54] sm:$0xf] %v1366
        %1431 = vst [vmem:[%s328 + $0x58] sm:$0xf] %v1367
        %1432 = vst [vmem:[%s328 + $0x5c] sm:$0xf] %v1368
        %1433 = vst [vmem:[%s328 + $0x60] sm:$0xf] %v1369
        %1434 = vst [vmem:[%s328 + $0x64] sm:$0xf] %v1370
        %1435 = vst [vmem:[%s328 + $0x68] sm:$0xf] %v1371
        %1436 = vst [vmem:[%s328 + $0x6c] sm:$0xf] %v1372
        %1437 = vst [vmem:[%s328 + $0x70] sm:$0xf] %v1373
        %1438 = vst [vmem:[%s328 + $0x74] sm:$0xf] %v1374
        %1439 = vst [vmem:[%s328 + $0x78] sm:$0xf] %v1375
        %1440 = vst [vmem:[%s328 + $0x7c] sm:$0xf] %v1376
        %v1441 = vld [vmem:[#allocation3] sm:$0xff]
        %v1442 = vld [vmem:[#allocation3 + $0x8] sm:$0xff]
        %v1443 = vld [vmem:[#allocation3 + $0x10] sm:$0xff]
        %v1444 = vld [vmem:[#allocation3 + $0x18] sm:$0xff]
        %v1445 = vld [vmem:[#allocation3 + $0x20] sm:$0xff]
        %v1446 = vld [vmem:[#allocation3 + $0x28] sm:$0xff]
        %v1447 = vld [vmem:[#allocation3 + $0x30] sm:$0xff]
        %v1448 = vld [vmem:[#allocation3 + $0x38] sm:$0xff]
        %v1449 = vld [vmem:[#allocation3 + $0x40] sm:$0xff]
        %v1450 = vld [vmem:[#allocation3 + $0x48] sm:$0xff]
        %v1451 = vld [vmem:[#allocation3 + $0x50] sm:$0xff]
        %v1452 = vld [vmem:[#allocation3 + $0x58] sm:$0xff]
        %v1453 = vld [vmem:[#allocation3 + $0x60] sm:$0xff]
        %v1454 = vld [vmem:[#allocation3 + $0x68] sm:$0xff]
        %v1455 = vld [vmem:[#allocation3 + $0x70] sm:$0xff]
        %v1456 = vld [vmem:[#allocation3 + $0x78] sm:$0xff]
        %v1457 = vld [vmem:[#allocation3 + $0x80] sm:$0xff]
        %v1458 = vld [vmem:[#allocation3 + $0x88] sm:$0xff]
        %v1459 = vld [vmem:[#allocation3 + $0x90] sm:$0xff]
        %v1460 = vld [vmem:[#allocation3 + $0x98] sm:$0xff]
        %v1461 = vld [vmem:[#allocation3 + $0xa0] sm:$0xff]
        %v1462 = vld [vmem:[#allocation3 + $0xa8] sm:$0xff]
        %v1463 = vld [vmem:[#allocation3 + $0xb0] sm:$0xff]
        %v1464 = vld [vmem:[#allocation3 + $0xb8] sm:$0xff]
        %v1465 = vld [vmem:[#allocation3 + $0xc0] sm:$0xff]
        %v1466 = vld [vmem:[#allocation3 + $0xc8] sm:$0xff]
        %v1467 = vld [vmem:[#allocation3 + $0xd0] sm:$0xff]
        %v1468 = vld [vmem:[#allocation3 + $0xd8] sm:$0xff]
        %v1469 = vld [vmem:[#allocation3 + $0xe0] sm:$0xff]
        %v1470 = vld [vmem:[#allocation3 + $0xe8] sm:$0xff]
        %v1471 = vld [vmem:[#allocation3 + $0xf0] sm:$0xff]
        %v1472 = vld [vmem:[#allocation3 + $0xf8] sm:$0xff]
        %v1473 = vld [vmem:[%s4] sm:$0x1]
        %v1475 = vlaneseq
        %v1476 = vshrl.u32 %v1475, 7
        %v1477 = vsub.s32 0, %v1476
        %v1478 = vrot.slane %v1473, %v1477
        %v1480 = vadd.f32 %v1441, %v1478
        %v1481 = vadd.f32 %v1442, %v1478
        %v1482 = vadd.f32 %v1443, %v1478
        %v1483 = vadd.f32 %v1444, %v1478
        %v1484 = vadd.f32 %v1445, %v1478
        %v1485 = vadd.f32 %v1446, %v1478
        %v1486 = vadd.f32 %v1447, %v1478
        %v1487 = vadd.f32 %v1448, %v1478
        %v1488 = vadd.f32 %v1449, %v1478
        %v1489 = vadd.f32 %v1450, %v1478
        %v1490 = vadd.f32 %v1451, %v1478
        %v1491 = vadd.f32 %v1452, %v1478
        %v1492 = vadd.f32 %v1453, %v1478
        %v1493 = vadd.f32 %v1454, %v1478
        %v1494 = vadd.f32 %v1455, %v1478
        %v1495 = vadd.f32 %v1456, %v1478
        %v1496 = vadd.f32 %v1457, %v1478
        %v1497 = vadd.f32 %v1458, %v1478
        %v1498 = vadd.f32 %v1459, %v1478
        %v1499 = vadd.f32 %v1460, %v1478
        %v1500 = vadd.f32 %v1461, %v1478
        %v1501 = vadd.f32 %v1462, %v1478
        %v1502 = vadd.f32 %v1463, %v1478
        %v1503 = vadd.f32 %v1464, %v1478
        %v1504 = vadd.f32 %v1465, %v1478
        %v1505 = vadd.f32 %v1466, %v1478
        %v1506 = vadd.f32 %v1467, %v1478
        %v1507 = vadd.f32 %v1468, %v1478
        %v1508 = vadd.f32 %v1469, %v1478
        %v1509 = vadd.f32 %v1470, %v1478
        %v1510 = vadd.f32 %v1471, %v1478
        %v1511 = vadd.f32 %v1472, %v1478
        %v1512 = vpack.c.bf16 %v1481, %v1480
        %v1513 = vpack.c.bf16 %v1483, %v1482
        %v1514 = vpack.c.bf16 %v1485, %v1484
        %v1515 = vpack.c.bf16 %v1487, %v1486
        %v1516 = vpack.c.bf16 %v1489, %v1488
        %v1517 = vpack.c.bf16 %v1491, %v1490
        %v1518 = vpack.c.bf16 %v1493, %v1492
        %v1519 = vpack.c.bf16 %v1495, %v1494
        %v1520 = vpack.c.bf16 %v1497, %v1496
        %v1521 = vpack.c.bf16 %v1499, %v1498
        %v1522 = vpack.c.bf16 %v1501, %v1500
        %v1523 = vpack.c.bf16 %v1503, %v1502
        %v1524 = vpack.c.bf16 %v1505, %v1504
        %v1525 = vpack.c.bf16 %v1507, %v1506
        %v1526 = vpack.c.bf16 %v1509, %v1508
        %v1527 = vpack.c.bf16 %v1511, %v1510
        %v1544 = vunpack.c.l.b16 %v1512
        %v1545 = vunpack.c.h.b16 %v1512
        %v1546 = vunpack.c.l.b16 %v1513
        %v1547 = vunpack.c.h.b16 %v1513
        %v1548 = vunpack.c.l.b16 %v1514
        %v1549 = vunpack.c.h.b16 %v1514
        %v1550 = vunpack.c.l.b16 %v1515
        %v1551 = vunpack.c.h.b16 %v1515
        %v1552 = vunpack.c.l.b16 %v1516
        %v1553 = vunpack.c.h.b16 %v1516
        %v1554 = vunpack.c.l.b16 %v1517
        %v1555 = vunpack.c.h.b16 %v1517
        %v1556 = vunpack.c.l.b16 %v1518
        %v1557 = vunpack.c.h.b16 %v1518
        %v1558 = vunpack.c.l.b16 %v1519
        %v1559 = vunpack.c.h.b16 %v1519
        %v1560 = vunpack.c.l.b16 %v1520
        %v1561 = vunpack.c.h.b16 %v1520
        %v1562 = vunpack.c.l.b16 %v1521
        %v1563 = vunpack.c.h.b16 %v1521
        %v1564 = vunpack.c.l.b16 %v1522
        %v1565 = vunpack.c.h.b16 %v1522
        %v1566 = vunpack.c.l.b16 %v1523
        %v1567 = vunpack.c.h.b16 %v1523
        %v1568 = vunpack.c.l.b16 %v1524
        %v1569 = vunpack.c.h.b16 %v1524
        %v1570 = vunpack.c.l.b16 %v1525
        %v1571 = vunpack.c.h.b16 %v1525
        %v1572 = vunpack.c.l.b16 %v1526
        %v1573 = vunpack.c.h.b16 %v1526
        %v1574 = vunpack.c.l.b16 %v1527
        %v1575 = vunpack.c.h.b16 %v1527
        %v1576 = vpack.c.b16 %v1544, %v1544
        %v1577 = vpack.c.b16 %v1545, %v1545
        %v1578 = vpack.c.b16 %v1546, %v1546
        %v1579 = vpack.c.b16 %v1547, %v1547
        %v1580 = vpack.c.b16 %v1548, %v1548
        %v1581 = vpack.c.b16 %v1549, %v1549
        %v1582 = vpack.c.b16 %v1550, %v1550
        %v1583 = vpack.c.b16 %v1551, %v1551
        %v1584 = vpack.c.b16 %v1552, %v1552
        %v1585 = vpack.c.b16 %v1553, %v1553
        %v1586 = vpack.c.b16 %v1554, %v1554
        %v1587 = vpack.c.b16 %v1555, %v1555
        %v1588 = vpack.c.b16 %v1556, %v1556
        %v1589 = vpack.c.b16 %v1557, %v1557
        %v1590 = vpack.c.b16 %v1558, %v1558
        %v1591 = vpack.c.b16 %v1559, %v1559
        %v1592 = vpack.c.b16 %v1560, %v1560
        %v1593 = vpack.c.b16 %v1561, %v1561
        %v1594 = vpack.c.b16 %v1562, %v1562
        %v1595 = vpack.c.b16 %v1563, %v1563
        %v1596 = vpack.c.b16 %v1564, %v1564
        %v1597 = vpack.c.b16 %v1565, %v1565
        %v1598 = vpack.c.b16 %v1566, %v1566
        %v1599 = vpack.c.b16 %v1567, %v1567
        %v1600 = vpack.c.b16 %v1568, %v1568
        %v1601 = vpack.c.b16 %v1569, %v1569
        %v1602 = vpack.c.b16 %v1570, %v1570
        %v1603 = vpack.c.b16 %v1571, %v1571
        %v1604 = vpack.c.b16 %v1572, %v1572
        %v1605 = vpack.c.b16 %v1573, %v1573
        %v1606 = vpack.c.b16 %v1574, %v1574
        %v1607 = vpack.c.b16 %v1575, %v1575
        %1640 = vst [vmem:[%s334] sm:$0xf] %v1576
        %1641 = vst [vmem:[%s334 + $0x4] sm:$0xf] %v1577
        %1642 = vst [vmem:[%s334 + $0x8] sm:$0xf] %v1578
        %1643 = vst [vmem:[%s334 + $0xc] sm:$0xf] %v1579
        %1644 = vst [vmem:[%s334 + $0x10] sm:$0xf] %v1580
        %1645 = vst [vmem:[%s334 + $0x14] sm:$0xf] %v1581
        %1646 = vst [vmem:[%s334 + $0x18] sm:$0xf] %v1582
        %1647 = vst [vmem:[%s334 + $0x1c] sm:$0xf] %v1583
        %1648 = vst [vmem:[%s334 + $0x20] sm:$0xf] %v1584
        %1649 = vst [vmem:[%s334 + $0x24] sm:$0xf] %v1585
        %1650 = vst [vmem:[%s334 + $0x28] sm:$0xf] %v1586
        %1651 = vst [vmem:[%s334 + $0x2c] sm:$0xf] %v1587
        %1652 = vst [vmem:[%s334 + $0x30] sm:$0xf] %v1588
        %1653 = vst [vmem:[%s334 + $0x34] sm:$0xf] %v1589
        %1654 = vst [vmem:[%s334 + $0x38] sm:$0xf] %v1590
        %1655 = vst [vmem:[%s334 + $0x3c] sm:$0xf] %v1591
        %1656 = vst [vmem:[%s334 + $0x40] sm:$0xf] %v1592
        %1657 = vst [vmem:[%s334 + $0x44] sm:$0xf] %v1593
        %1658 = vst [vmem:[%s334 + $0x48] sm:$0xf] %v1594
        %1659 = vst [vmem:[%s334 + $0x4c] sm:$0xf] %v1595
        %1660 = vst [vmem:[%s334 + $0x50] sm:$0xf] %v1596
        %1661 = vst [vmem:[%s334 + $0x54] sm:$0xf] %v1597
        %1662 = vst [vmem:[%s334 + $0x58] sm:$0xf] %v1598
        %1663 = vst [vmem:[%s334 + $0x5c] sm:$0xf] %v1599
        %1664 = vst [vmem:[%s334 + $0x60] sm:$0xf] %v1600
        %1665 = vst [vmem:[%s334 + $0x64] sm:$0xf] %v1601
        %1666 = vst [vmem:[%s334 + $0x68] sm:$0xf] %v1602
        %1667 = vst [vmem:[%s334 + $0x6c] sm:$0xf] %v1603
        %1668 = vst [vmem:[%s334 + $0x70] sm:$0xf] %v1604
        %1669 = vst [vmem:[%s334 + $0x74] sm:$0xf] %v1605
        %1670 = vst [vmem:[%s334 + $0x78] sm:$0xf] %v1606
        %1671 = vst [vmem:[%s334 + $0x7c] sm:$0xf] %v1607
      $region48: #{bottleneck_forward.3} parent=39 // pred_fallthru
        _
      %s1672 = smul.u32 32, %s22
      %p1673 = scmp.lt.s32.totalorder %s1672, 63
      %s1674 = scalar_select %p1673, %s1672, 63
      %s1675 = smul.addr %s1674, 4
      %s1676 = scalar_lea.vmem %s5, %s1675
      %s1677 = smul.u32 32, %s22
      %p1678 = scmp.lt.s32.totalorder %s1677, 63
      %s1679 = scalar_select %p1678, %s1677, 63
      %s1680 = smul.addr %s1679, 4
      %s1681 = scalar_lea.vmem %s6, %s1680
      // Predicated region
      $region49: #{bottleneck_forward.3} parent=39 // pred_check
        %p1682 = pneg %p170
      $region50: #{bottleneck_forward.3} parent=39 // pred_check_branch
        %1684 = sbr.rel (%p1682) target = $region52
      $region51: #{bottleneck_forward.3} parent=39 // pred_region
        %s1685 = smul.u32 32, %s22
      $region52: #{bottleneck_forward.3} parent=39 // pred_fallthru
        _
      // Predicated region
      $region53: #{bottleneck_forward.3} parent=39 // pred_check
        %p1686 = pneg %p196
      $region54: #{bottleneck_forward.3} parent=39 // pred_check_branch
        %1688 = sbr.rel (%p1686) target = $region56
      $region55: #{bottleneck_forward.3} parent=39 // pred_region
        %s1689 = smul.u32 32, %s22
      $region56: #{bottleneck_forward.3} parent=39 // pred_fallthru
        _
    $region40: #{bottleneck_forward.3} parent=5 // pred_fallthru
      _
    %p1690 = scmp.le.s32.totalorder 2, %s13
    // Predicated region
    $region57: #{bottleneck_forward.3} parent=5 // pred_check
      %p1691 = pneg %p1690
    $region58: #{bottleneck_forward.3} parent=5 // pred_check_branch
      %1693 = sbr.rel (%p1691) target = $region60
    $region59: #{bottleneck_forward.3} parent=5 // pred_region
      %s1694 = ssub.s32 %s13, 2
      // Predicated region
      $region61: #{bottleneck_forward.3} parent=59 // pred_check
        %p1695 = pneg %p176
      $region62: #{bottleneck_forward.3} parent=59 // pred_check_branch
        %1697 = sbr.rel (%p1695) target = $region64
      $region63: #{bottleneck_forward.3} parent=59 // pred_region
        %s1698 = smul.u32 32, %s24
        %p1699 = scmp.lt.s32.totalorder %s1698, 63
        %s1700 = scalar_select %p1699, %s1698, 63
        %s1701 = smul.addr %s1700, 4
        %s1702 = scalar_lea.vmem %s5, %s1701
      $region64: #{bottleneck_forward.3} parent=59 // pred_fallthru
        _
      // Predicated region
      $region65: #{bottleneck_forward.3} parent=59 // pred_check
        %p1703 = pneg %p202
      $region66: #{bottleneck_forward.3} parent=59 // pred_check_branch
        %1705 = sbr.rel (%p1703) target = $region68
      $region67: #{bottleneck_forward.3} parent=59 // pred_region
        %s1706 = smul.u32 32, %s24
        %p1707 = scmp.lt.s32.totalorder %s1706, 63
        %s1708 = scalar_select %p1707, %s1706, 63
        %s1709 = smul.addr %s1708, 4
        %s1710 = scalar_lea.vmem %s6, %s1709
      $region68: #{bottleneck_forward.3} parent=59 // pred_fallthru
        _
    $region60: #{bottleneck_forward.3} parent=5 // pred_fallthru
      _
  $region6: #{bottleneck_forward.3} parent=0 // loop_footer
    %s17 = sadd.s32 1, %s13
  $region7: #{bottleneck_forward.3} parent=0 // loop_footer_branch
    %12 = sbr.rel target = $region3
  $region8: #{bottleneck_forward.3} parent=0 // loop_exit
    _

// kernel: bottleneck_forward.5
$region0: #{bottleneck_forward.5}
  #allocation0 [shape = 'u32[]', space=smem, size = 0x4, offset = 0x4, fixed_abs, tag = 'smem constant byte address 0x4 - core index']
  #allocation1 [shape = 'u32[144,128]{1,0:T(1,128)}', space=vmem, size = 0x12000, scoped, tag = 'internal scratch']
  #allocation2 [shape = 'f32[256,128]{1,0:T(8,128)}', space=vmem, size = 0x20000, scoped, tag = 'scratch operand']
  %s0 = inlined_call_operand.vmem [shape: bf16[512,128], index: 0, kind: input, shape index: {}]
  %s1 = inlined_call_operand.vmem [shape: bf16[128,128], index: 1, kind: input, shape index: {}]
  %s2 = inlined_call_operand.vmem [shape: f32[1,128], index: 2, kind: input, shape index: {}]
  %s3 = inlined_call_operand.vmem [shape: bf16[512,128], index: 3, kind: input, shape index: {}]
  %s4 = inlined_call_operand.vmem [shape: bf16[512,128], index: 4, kind: output, shape index: {}]
  %s5 = sld [smem:[#allocation0]]
  $region57: #{bottleneck_forward.5} parent=0
    _
  %s7 = ssub.s32 1, %s5
  %s8 = scalar_select 0, %s7, %s5
  loop: start=0, step=1, limit=4
  $region2: #{bottleneck_forward.5} parent=0 // loop_pre_header
    _
  $region3: #{bottleneck_forward.5} parent=0 // loop_header
    %s10 = sphi 0, %s14
    %p11 = scmp.ge.s32.totalorder %s10, 4
    %s17 = sphi 0, %s36
    %s18 = sphi 0, %s32
    %s19 = sphi 0, %s28
    %s20 = sphi 0, %s17
    %s21 = sphi 0, %s18
    %s22 = sphi 0, %s19
    %s23 = sphi 0, %s20
    %s24 = sphi 0, %s21
    %s25 = sphi 0, %s22
    %s41 = sphi 0, %s43
    %s44 = sphi 0, %s41
    %s45 = sphi 0, %s44
    %s61 = sphi 0, %s45
    %s69 = sphi 0, %s71
    %s72 = sphi 0, %s69
    %s73 = sphi 0, %s72
    %s89 = sphi 0, %s73
    %s95 = sphi 0, %s97
    %s98 = sphi 0, %s95
    %s99 = sphi 0, %s98
    %s115 = sphi 0, %s99
    %s123 = sphi 0, %s125
    %s126 = sphi 0, %s123
    %s127 = sphi 0, %s126
    %s143 = sphi 0, %s127
    %s151 = sphi 0, %s153
    %s154 = sphi 0, %s151
    %s155 = sphi 0, %s154
    %s171 = sphi 0, %s155
  $region4: #{bottleneck_forward.5} parent=0 // loop_header_branch
    %13 = sbr.rel (%p11) target = $region8
  $region5: #{bottleneck_forward.5} parent=0 // loop_body
    %s15 = ssub.s32 %s10, 1
    %s16 = ssub.s32 %s10, 2
    %s26 = sadd.s32 1, %s19
    %p27 = scmp.ge.s32.totalorder %s26, 1
    %s28 = scalar_select %p27, 0, %s26
    %s29 = sadd.s32 1, %s18
    %s30 = scalar_select %p27, %s29, %s18
    %p31 = scmp.ge.s32.totalorder %s30, 1
    %s32 = scalar_select %p31, 0, %s30
    %s33 = sadd.s32 1, %s17
    %s34 = scalar_select %p31, %s33, %s17
    %p35 = scmp.ge.s32.totalorder %s34, 2
    %s36 = scalar_select %p35, 0, %s34
    %s37 = ssub.s32 %s17, %s36
    %s38 = ssub.s32 %s19, %s28
    %s39 = sor.u32 %s37, %s38
    %p40 = scmp.eq.s32.totalorder %s39, 0
    %s42 = sadd.s32 %s41, 1
    %s43 = scalar_select %p40, %s41, %s42
    %p46 = pneg %p40
    %p47 = scmp.eq.s32.totalorder %s10, 1
    %p48 = por %p46, %p47
    %p49 = scmp.ne.s32.totalorder %s41, %s44
    %p50 = scmp.eq.s32.totalorder %s10, 0
    %p51 = por %p49, %p50
    %p52 = scmp.ne.s32.totalorder %s41, %s44
    %p53 = scmp.eq.s32.totalorder %s15, 1
    %p54 = por %p52, %p53
    %p55 = scmp.ne.s32.totalorder %s44, %s45
    %p56 = scmp.eq.s32.totalorder %s15, 0
    %p57 = por %p55, %p56
    %p58 = scmp.ne.s32.totalorder %s44, %s45
    %p59 = scmp.eq.s32.totalorder %s16, 1
    %p60 = por %p58, %p59
    %p62 = scmp.ne.s32.totalorder %s45, %s61
    %p63 = scmp.eq.s32.totalorder %s16, 0
    %p64 = por %p62, %p63
    %s65 = ssub.s32 %s19, %s28
    %s66 = ssub.s32 %s18, %s32
    %s67 = sor.u32 %s65, %s66
    %p68 = scmp.eq.s32.totalorder %s67, 0
    %s70 = sadd.s32 %s69, 1
    %s71 = scalar_select %p68, %s69, %s70
    %p74 = pneg %p68
    %p75 = scmp.eq.s32.totalorder %s10, 1
    %p76 = por %p74, %p75
    %p77 = scmp.ne.s32.totalorder %s69, %s72
    %p78 = scmp.eq.s32.totalorder %s10, 0
    %p79 = por %p77, %p78
    %p80 = scmp.ne.s32.totalorder %s69, %s72
    %p81 = scmp.eq.s32.totalorder %s15, 1
    %p82 = por %p80, %p81
    %p83 = scmp.ne.s32.totalorder %s72, %s73
    %p84 = scmp.eq.s32.totalorder %s15, 0
    %p85 = por %p83, %p84
    %p86 = scmp.ne.s32.totalorder %s72, %s73
    %p87 = scmp.eq.s32.totalorder %s16, 1
    %p88 = por %p86, %p87
    %p90 = scmp.ne.s32.totalorder %s73, %s89
    %p91 = scmp.eq.s32.totalorder %s16, 0
    %p92 = por %p90, %p91
    %s93 = ssub.s32 %s18, %s32
    %p94 = scmp.eq.s32.totalorder %s93, 0
    %s96 = sadd.s32 %s95, 1
    %s97 = scalar_select %p94, %s95, %s96
    %p100 = pneg %p94
    %p101 = scmp.eq.s32.totalorder %s10, 1
    %p102 = por %p100, %p101
    %p103 = scmp.ne.s32.totalorder %s95, %s98
    %p104 = scmp.eq.s32.totalorder %s10, 0
    %p105 = por %p103, %p104
    %p106 = scmp.ne.s32.totalorder %s95, %s98
    %p107 = scmp.eq.s32.totalorder %s15, 1
    %p108 = por %p106, %p107
    %p109 = scmp.ne.s32.totalorder %s98, %s99
    %p110 = scmp.eq.s32.totalorder %s15, 0
    %p111 = por %p109, %p110
    %p112 = scmp.ne.s32.totalorder %s98, %s99
    %p113 = scmp.eq.s32.totalorder %s16, 1
    %p114 = por %p112, %p113
    %p116 = scmp.ne.s32.totalorder %s99, %s115
    %p117 = scmp.eq.s32.totalorder %s16, 0
    %p118 = por %p116, %p117
    %s119 = ssub.s32 %s17, %s36
    %s120 = ssub.s32 %s18, %s32
    %s121 = sor.u32 %s119, %s120
    %p122 = scmp.eq.s32.totalorder %s121, 0
    %s124 = sadd.s32 %s123, 1
    %s125 = scalar_select %p122, %s123, %s124
    %p128 = pneg %p122
    %p129 = scmp.eq.s32.totalorder %s10, 1
    %p130 = por %p128, %p129
    %p131 = scmp.ne.s32.totalorder %s123, %s126
    %p132 = scmp.eq.s32.totalorder %s10, 0
    %p133 = por %p131, %p132
    %p134 = scmp.ne.s32.totalorder %s123, %s126
    %p135 = scmp.eq.s32.totalorder %s15, 1
    %p136 = por %p134, %p135
    %p137 = scmp.ne.s32.totalorder %s126, %s127
    %p138 = scmp.eq.s32.totalorder %s15, 0
    %p139 = por %p137, %p138
    %p140 = scmp.ne.s32.totalorder %s126, %s127
    %p141 = scmp.eq.s32.totalorder %s16, 1
    %p142 = por %p140, %p141
    %p144 = scmp.ne.s32.totalorder %s127, %s143
    %p145 = scmp.eq.s32.totalorder %s16, 0
    %p146 = por %p144, %p145
    %s147 = ssub.s32 %s17, %s36
    %s148 = ssub.s32 %s18, %s32
    %s149 = sor.u32 %s147, %s148
    %p150 = scmp.eq.s32.totalorder %s149, 0
    %s152 = sadd.s32 %s151, 1
    %s153 = scalar_select %p150, %s151, %s152
    %p156 = pneg %p150
    %p157 = scmp.eq.s32.totalorder %s10, 1
    %p158 = por %p156, %p157
    %p159 = scmp.ne.s32.totalorder %s151, %s154
    %p160 = scmp.eq.s32.totalorder %s10, 0
    %p161 = por %p159, %p160
    %p162 = scmp.ne.s32.totalorder %s151, %s154
    %p163 = scmp.eq.s32.totalorder %s15, 1
    %p164 = por %p162, %p163
    %p165 = scmp.ne.s32.totalorder %s154, %s155
    %p166 = scmp.eq.s32.totalorder %s15, 0
    %p167 = por %p165, %p166
    %p168 = scmp.ne.s32.totalorder %s154, %s155
    %p169 = scmp.eq.s32.totalorder %s16, 1
    %p170 = por %p168, %p169
    %p172 = scmp.ne.s32.totalorder %s155, %s171
    %p173 = scmp.eq.s32.totalorder %s16, 0
    %p174 = por %p172, %p173
    %p175 = scmp.le.s32.totalorder 1, %s10
    %p176 = scmp.lt.s32.totalorder %s10, 3
    %p177 = pnand %p175, %p176
    %p178 = pneg %p177
    // Predicated region
    $region9: #{bottleneck_forward.5} parent=5 // pred_check
      _
    $region10: #{bottleneck_forward.5} parent=5 // pred_check_branch
      %180 = sbr.rel (%p177) target = $region12
    $region11: #{bottleneck_forward.5} parent=5 // pred_region
      %s181 = ssub.s32 %s10, 1
      // Predicated region
      $region13: #{bottleneck_forward.5} parent=11 // pred_check
        %p182 = pneg %p85
      $region14: #{bottleneck_forward.5} parent=11 // pred_check_branch
        %184 = sbr.rel (%p182) target = $region16
      $region15: #{bottleneck_forward.5} parent=11 // pred_region
        %s185 = smul.u32 16, %s22
        %p186 = scmp.lt.s32.totalorder %s185, 15
        %s187 = scalar_select %p186, %s185, 15
        %p188 = scmp.lt.s32.totalorder %s21, 0
        %s189 = scalar_select %p188, %s21, 0
        %s190 = sadd.s32 %s189, %s187
        %s191 = smul.addr %s190, 4
        %s192 = scalar_lea.vmem %s1, %s191
        %s193 = smul.u32 16, %s22
      $region16: #{bottleneck_forward.5} parent=11 // pred_fallthru
        _
      // Predicated region
      $region17: #{bottleneck_forward.5} parent=11 // pred_check
        %p194 = pneg %p111
      $region18: #{bottleneck_forward.5} parent=11 // pred_check_branch
        %196 = sbr.rel (%p194) target = $region20
      $region19: #{bottleneck_forward.5} parent=11 // pred_region
        %p197 = scmp.lt.s32.totalorder %s21, 0
        %s198 = scalar_select %p197, %s21, 0
        %s199 = scalar_lea.vmem %s2, %s198
      $region20: #{bottleneck_forward.5} parent=11 // pred_fallthru
        _
    $region12: #{bottleneck_forward.5} parent=5 // pred_fallthru
      _
    %p200 = scmp.lt.s32.totalorder %s10, 2
    // Predicated region
    $region21: #{bottleneck_forward.5} parent=5 // pred_check
      %p201 = pneg %p200
    $region22: #{bottleneck_forward.5} parent=5 // pred_check_branch
      %203 = sbr.rel (%p201) target = $region24
    $region23: #{bottleneck_forward.5} parent=5 // pred_region
      // Predicated region
      $region25: #{bottleneck_forward.5} parent=23 // pred_check
        %p204 = pneg %p51
      $region26: #{bottleneck_forward.5} parent=23 // pred_check_branch
        %206 = sbr.rel (%p204) target = $region28
      $region27: #{bottleneck_forward.5} parent=23 // pred_region
        %s207 = smul.u32 32, %s17
        %p208 = scmp.lt.s32.totalorder %s207, 63
        %s209 = scalar_select %p208, %s207, 63
        %p210 = scmp.lt.s32.totalorder %s19, 0
        %s211 = scalar_select %p210, %s19, 0
        %s212 = sadd.s32 %s211, %s209
        %s213 = smul.addr %s212, 4
        %s214 = scalar_lea.vmem %s0, %s213
        %s215 = smul.u32 32, %s17
      $region28: #{bottleneck_forward.5} parent=23 // pred_fallthru
        _
      // Predicated region
      $region29: #{bottleneck_forward.5} parent=23 // pred_check
        %p216 = pneg %p133
      $region30: #{bottleneck_forward.5} parent=23 // pred_check_branch
        %218 = sbr.rel (%p216) target = $region32
      $region31: #{bottleneck_forward.5} parent=23 // pred_region
        %s219 = smul.u32 32, %s17
        %p220 = scmp.lt.s32.totalorder %s219, 63
        %s221 = scalar_select %p220, %s219, 63
        %p222 = scmp.lt.s32.totalorder %s18, 0
        %s223 = scalar_select %p222, %s18, 0
        %s224 = sadd.s32 %s223, %s221
        %s225 = smul.addr %s224, 4
        %s226 = scalar_lea.vmem %s3, %s225
        %s227 = smul.u32 32, %s17
      $region32: #{bottleneck_forward.5} parent=23 // pred_fallthru
        _
    $region24: #{bottleneck_forward.5} parent=5 // pred_fallthru
      _
    %p228 = scmp.le.s32.totalorder 1, %s10
    %p229 = scmp.lt.s32.totalorder %s10, 3
    %p230 = pnand %p228, %p229
    %p231 = pneg %p230
    // Predicated region
    $region33: #{bottleneck_forward.5} parent=5 // pred_check
      _
    $region34: #{bottleneck_forward.5} parent=5 // pred_check_branch
      %233 = sbr.rel (%p230) target = $region36
    $region35: #{bottleneck_forward.5} parent=5 // pred_region
      %s234 = ssub.s32 %s10, 1
      %s235 = smul.u32 32, %s20
      %p236 = scmp.lt.s32.totalorder %s235, 63
      %s237 = scalar_select %p236, %s235, 63
      %p238 = scmp.lt.s32.totalorder %s22, 0
      %s239 = scalar_select %p238, %s22, 0
      %s240 = sadd.s32 %s239, %s237
      %s241 = smul.addr %s240, 4
      %s242 = scalar_lea.vmem %s0, %s241
      %p243 = pneg %p57
      %p244 = pneg %p54
      %s245 = smul.u32 16, %s22
      %p246 = scmp.lt.s32.totalorder %s245, 15
      %s247 = scalar_select %p246, %s245, 15
      %p248 = scmp.lt.s32.totalorder %s21, 0
      %s249 = scalar_select %p248, %s21, 0
      %s250 = sadd.s32 %s249, %s247
      %s251 = smul.addr %s250, 4
      %s252 = scalar_lea.vmem %s1, %s251
      %p253 = pneg %p85
      %p254 = pneg %p82
      %p255 = scmp.lt.s32.totalorder %s21, 0
      %s256 = scalar_select %p255, %s21, 0
      %s257 = scalar_lea.vmem %s2, %s256
      %p258 = pneg %p111
      %p259 = pneg %p108
      %s260 = smul.u32 32, %s20
      %p261 = scmp.lt.s32.totalorder %s260, 63
      %s262 = scalar_select %p261, %s260, 63
      %p263 = scmp.lt.s32.totalorder %s21, 0
      %s264 = scalar_select %p263, %s21, 0
      %s265 = sadd.s32 %s264, %s262
      %s266 = smul.addr %s265, 4
      %s267 = scalar_lea.vmem %s3, %s266
      %p268 = pneg %p139
      %p269 = pneg %p136
      %p270 = pneg %p167
      %p271 = pneg %p164
      %s272 = smul.u32 32, %s20
      %p273 = scmp.lt.s32.totalorder %s272, 63
      %s274 = scalar_select %p273, %s272, 63
      %p275 = scmp.lt.s32.totalorder %s21, 0
      %s276 = scalar_select %p275, %s21, 0
      %s277 = sadd.s32 %s276, %s274
      %s278 = smul.addr %s277, 4
      %s279 = scalar_lea.vmem %s4, %s278
      %s280 = smul.u32 32, %s20
      %p281 = scmp.lt.s32.totalorder %s280, 63
      %s282 = scalar_select %p281, %s280, 63
      %p283 = scmp.lt.s32.totalorder %s22, 0
      %s284 = scalar_select %p283, %s22, 0
      %s285 = sadd.s32 %s284, %s282
      %s286 = smul.addr %s285, 4
      %s287 = scalar_lea.vmem %s0, %s286
      %s288 = smul.u32 32, %s20
      %s289 = smul.u32 16, %s22
      %p290 = scmp.lt.s32.totalorder %s289, 15
      %s291 = scalar_select %p290, %s289, 15
      %p292 = scmp.lt.s32.totalorder %s21, 0
      %s293 = scalar_select %p292, %s21, 0
      %s294 = sadd.s32 %s293, %s291
      %s295 = smul.addr %s294, 4
      %s296 = scalar_lea.vmem %s1, %s295
      %s297 = smul.u32 16, %s22
      %p298 = scmp.lt.s32.totalorder %s21, 0
      %s299 = scalar_select %p298, %s21, 0
      %s300 = scalar_lea.vmem %s2, %s299
      %s301 = smul.u32 32, %s20
      %p302 = scmp.lt.s32.totalorder %s301, 63
      %s303 = scalar_select %p302, %s301, 63
      %p304 = scmp.lt.s32.totalorder %s21, 0
      %s305 = scalar_select %p304, %s21, 0
      %s306 = sadd.s32 %s305, %s303
      %s307 = smul.addr %s306, 4
      %s308 = scalar_lea.vmem %s3, %s307
      %s309 = smul.u32 32, %s20
      %s310 = smul.u32 32, %s20
      %p311 = scmp.lt.s32.totalorder %s310, 63
      %s312 = scalar_select %p311, %s310, 63
      %p313 = scmp.lt.s32.totalorder %s21, 0
      %s314 = scalar_select %p313, %s21, 0
      %s315 = sadd.s32 %s314, %s312
      %s316 = smul.addr %s315, 4
      %s317 = scalar_lea.vmem %s4, %s316
      %s318 = smul.u32 32, %s20
      %p320 = scmp.eq.s32.totalorder %s22, 0
      // Predicated region
      $region37: #{bottleneck_forward.5} parent=35 // pred_check
        %p321 = pneg %p320
      $region38: #{bottleneck_forward.5} parent=35 // pred_check_branch
        %323 = sbr.rel (%p321) target = $region40
      $region39: #{bottleneck_forward.5} parent=35 // pred_region
        %324 = vst [vmem:[#allocation2] sm:$0xff] 0.0
        %325 = vst [vmem:[#allocation2 + $0x8] sm:$0xff] 0.0
        %326 = vst [vmem:[#allocation2 + $0x10] sm:$0xff] 0.0
        %327 = vst [vmem:[#allocation2 + $0x18] sm:$0xff] 0.0
        %328 = vst [vmem:[#allocation2 + $0x20] sm:$0xff] 0.0
        %329 = vst [vmem:[#allocation2 + $0x28] sm:$0xff] 0.0
        %330 = vst [vmem:[#allocation2 + $0x30] sm:$0xff] 0.0
        %331 = vst [vmem:[#allocation2 + $0x38] sm:$0xff] 0.0
        %332 = vst [vmem:[#allocation2 + $0x40] sm:$0xff] 0.0
        %333 = vst [vmem:[#allocation2 + $0x48] sm:$0xff] 0.0
        %334 = vst [vmem:[#allocation2 + $0x50] sm:$0xff] 0.0
        %335 = vst [vmem:[#allocation2 + $0x58] sm:$0xff] 0.0
        %336 = vst [vmem:[#allocation2 + $0x60] sm:$0xff] 0.0
        %337 = vst [vmem:[#allocation2 + $0x68] sm:$0xff] 0.0
        %338 = vst [vmem:[#allocation2 + $0x70] sm:$0xff] 0.0
        %339 = vst [vmem:[#allocation2 + $0x78] sm:$0xff] 0.0
        %340 = vst [vmem:[#allocation2 + $0x80] sm:$0xff] 0.0
        %341 = vst [vmem:[#allocation2 + $0x88] sm:$0xff] 0.0
        %342 = vst [vmem:[#allocation2 + $0x90] sm:$0xff] 0.0
        %343 = vst [vmem:[#allocation2 + $0x98] sm:$0xff] 0.0
        %344 = vst [vmem:[#allocation2 + $0xa0] sm:$0xff] 0.0
        %345 = vst [vmem:[#allocation2 + $0xa8] sm:$0xff] 0.0
        %346 = vst [vmem:[#allocation2 + $0xb0] sm:$0xff] 0.0
        %347 = vst [vmem:[#allocation2 + $0xb8] sm:$0xff] 0.0
        %348 = vst [vmem:[#allocation2 + $0xc0] sm:$0xff] 0.0
        %349 = vst [vmem:[#allocation2 + $0xc8] sm:$0xff] 0.0
        %350 = vst [vmem:[#allocation2 + $0xd0] sm:$0xff] 0.0
        %351 = vst [vmem:[#allocation2 + $0xd8] sm:$0xff] 0.0
        %352 = vst [vmem:[#allocation2 + $0xe0] sm:$0xff] 0.0
        %353 = vst [vmem:[#allocation2 + $0xe8] sm:$0xff] 0.0
        %354 = vst [vmem:[#allocation2 + $0xf0] sm:$0xff] 0.0
        %355 = vst [vmem:[#allocation2 + $0xf8] sm:$0xff] 0.0
      $region40: #{bottleneck_forward.5} parent=35 // pred_fallthru
        _
      %v356 = vld [vmem:[#allocation2] sm:$0xff]
      %v357 = vld [vmem:[#allocation2 + $0x8] sm:$0xff]
      %v358 = vld [vmem:[#allocation2 + $0x10] sm:$0xff]
      %v359 = vld [vmem:[#allocation2 + $0x18] sm:$0xff]
      %v360 = vld [vmem:[#allocation2 + $0x20] sm:$0xff]
      %v361 = vld [vmem:[#allocation2 + $0x28] sm:$0xff]
      %v362 = vld [vmem:[#allocation2 + $0x30] sm:$0xff]
      %v363 = vld [vmem:[#allocation2 + $0x38] sm:$0xff]
      %v364 = vld [vmem:[#allocation2 + $0x40] sm:$0xff]
      %v365 = vld [vmem:[#allocation2 + $0x48] sm:$0xff]
      %v366 = vld [vmem:[#allocation2 + $0x50] sm:$0xff]
      %v367 = vld [vmem:[#allocation2 + $0x58] sm:$0xff]
      %v368 = vld [vmem:[#allocation2 + $0x60] sm:$0xff]
      %v369 = vld [vmem:[#allocation2 + $0x68] sm:$0xff]
      %v370 = vld [vmem:[#allocation2 + $0x70] sm:$0xff]
      %v371 = vld [vmem:[#allocation2 + $0x78] sm:$0xff]
      %v372 = vld [vmem:[#allocation2 + $0x80] sm:$0xff]
      %v373 = vld [vmem:[#allocation2 + $0x88] sm:$0xff]
      %v374 = vld [vmem:[#allocation2 + $0x90] sm:$0xff]
      %v375 = vld [vmem:[#allocation2 + $0x98] sm:$0xff]
      %v376 = vld [vmem:[#allocation2 + $0xa0] sm:$0xff]
      %v377 = vld [vmem:[#allocation2 + $0xa8] sm:$0xff]
      %v378 = vld [vmem:[#allocation2 + $0xb0] sm:$0xff]
      %v379 = vld [vmem:[#allocation2 + $0xb8] sm:$0xff]
      %v380 = vld [vmem:[#allocation2 + $0xc0] sm:$0xff]
      %v381 = vld [vmem:[#allocation2 + $0xc8] sm:$0xff]
      %v382 = vld [vmem:[#allocation2 + $0xd0] sm:$0xff]
      %v383 = vld [vmem:[#allocation2 + $0xd8] sm:$0xff]
      %v384 = vld [vmem:[#allocation2 + $0xe0] sm:$0xff]
      %v385 = vld [vmem:[#allocation2 + $0xe8] sm:$0xff]
      %v386 = vld [vmem:[#allocation2 + $0xf0] sm:$0xff]
      %v387 = vld [vmem:[#allocation2 + $0xf8] sm:$0xff]
      %v388 = vld [vmem:[%s287] sm:$0xf]
      %v389 = vld [vmem:[%s287 + $0x4] sm:$0xf]
      %v390 = vld [vmem:[%s287 + $0x8] sm:$0xf]
      %v391 = vld [vmem:[%s287 + $0xc] sm:$0xf]
      %v392 = vld [vmem:[%s287 + $0x10] sm:$0xf]
      %v393 = vld [vmem:[%s287 + $0x14] sm:$0xf]
      %v394 = vld [vmem:[%s287 + $0x18] sm:$0xf]
      %v395 = vld [vmem:[%s287 + $0x1c] sm:$0xf]
      %v396 = vld [vmem:[%s287 + $0x20] sm:$0xf]
      %v397 = vld [vmem:[%s287 + $0x24] sm:$0xf]
      %v398 = vld [vmem:[%s287 + $0x28] sm:$0xf]
      %v399 = vld [vmem:[%s287 + $0x2c] sm:$0xf]
      %v400 = vld [vmem:[%s287 + $0x30] sm:$0xf]
      %v401 = vld [vmem:[%s287 + $0x34] sm:$0xf]
      %v402 = vld [vmem:[%s287 + $0x38] sm:$0xf]
      %v403 = vld [vmem:[%s287 + $0x3c] sm:$0xf]
      %v404 = vld [vmem:[%s287 + $0x40] sm:$0xf]
      %v405 = vld [vmem:[%s287 + $0x44] sm:$0xf]
      %v406 = vld [vmem:[%s287 + $0x48] sm:$0xf]
      %v407 = vld [vmem:[%s287 + $0x4c] sm:$0xf]
      %v408 = vld [vmem:[%s287 + $0x50] sm:$0xf]
      %v409 = vld [vmem:[%s287 + $0x54] sm:$0xf]
      %v410 = vld [vmem:[%s287 + $0x58] sm:$0xf]
      %v411 = vld [vmem:[%s287 + $0x5c] sm:$0xf]
      %v412 = vld [vmem:[%s287 + $0x60] sm:$0xf]
      %v413 = vld [vmem:[%s287 + $0x64] sm:$0xf]
      %v414 = vld [vmem:[%s287 + $0x68] sm:$0xf]
      %v415 = vld [vmem:[%s287 + $0x6c] sm:$0xf]
      %v416 = vld [vmem:[%s287 + $0x70] sm:$0xf]
      %v417 = vld [vmem:[%s287 + $0x74] sm:$0xf]
      %v418 = vld [vmem:[%s287 + $0x78] sm:$0xf]
      %v419 = vld [vmem:[%s287 + $0x7c] sm:$0xf]
      %v420 = vld [vmem:[%s296] sm:$0xf]
      %v421 = vld [vmem:[%s296 + $0x4] sm:$0xf]
      %v422 = vld [vmem:[%s296 + $0x8] sm:$0xf]
      %v423 = vld [vmem:[%s296 + $0xc] sm:$0xf]
      %v424 = vld [vmem:[%s296 + $0x10] sm:$0xf]
      %v425 = vld [vmem:[%s296 + $0x14] sm:$0xf]
      %v426 = vld [vmem:[%s296 + $0x18] sm:$0xf]
      %v427 = vld [vmem:[%s296 + $0x1c] sm:$0xf]
      %v428 = vld [vmem:[%s296 + $0x20] sm:$0xf]
      %v429 = vld [vmem:[%s296 + $0x24] sm:$0xf]
      %v430 = vld [vmem:[%s296 + $0x28] sm:$0xf]
      %v431 = vld [vmem:[%s296 + $0x2c] sm:$0xf]
      %v432 = vld [vmem:[%s296 + $0x30] sm:$0xf]
      %v433 = vld [vmem:[%s296 + $0x34] sm:$0xf]
      %v434 = vld [vmem:[%s296 + $0x38] sm:$0xf]
      %v435 = vld [vmem:[%s296 + $0x3c] sm:$0xf]
      %v468 = vunpack.c.l.b16 %v388
      %v469 = vunpack.c.l.b16 %v389
      %v470 = vunpack.c.l.b16 %v390
      %v471 = vunpack.c.l.b16 %v391
      %v472 = vunpack.c.l.b16 %v392
      %v473 = vunpack.c.l.b16 %v393
      %v474 = vunpack.c.l.b16 %v394
      %v475 = vunpack.c.l.b16 %v395
      %v476 = vunpack.c.l.b16 %v396
      %v477 = vunpack.c.l.b16 %v397
      %v478 = vunpack.c.l.b16 %v398
      %v479 = vunpack.c.l.b16 %v399
      %v480 = vunpack.c.l.b16 %v400
      %v481 = vunpack.c.l.b16 %v401
      %v482 = vunpack.c.l.b16 %v402
      %v483 = vunpack.c.l.b16 %v403
      %v484 = vunpack.c.l.b16 %v404
      %v485 = vunpack.c.l.b16 %v405
      %v486 = vunpack.c.l.b16 %v406
      %v487 = vunpack.c.l.b16 %v407
      %v488 = vunpack.c.l.b16 %v408
      %v489 = vunpack.c.l.b16 %v409
      %v490 = vunpack.c.l.b16 %v410
      %v491 = vunpack.c.l.b16 %v411
      %v492 = vunpack.c.l.b16 %v412
      %v493 = vunpack.c.l.b16 %v413
      %v494 = vunpack.c.l.b16 %v414
      %v495 = vunpack.c.l.b16 %v415
      %v496 = vunpack.c.l.b16 %v416
      %v497 = vunpack.c.l.b16 %v417
      %v498 = vunpack.c.l.b16 %v418
      %v499 = vunpack.c.l.b16 %v419
      %v500 = vpack.c.b16 %v469, %v468
      %v501 = vpack.c.b16 %v471, %v470
      %v502 = vpack.c.b16 %v473, %v472
      %v503 = vpack.c.b16 %v475, %v474
      %v504 = vpack.c.b16 %v477, %v476
      %v505 = vpack.c.b16 %v479, %v478
      %v506 = vpack.c.b16 %v481, %v480
      %v507 = vpack.c.b16 %v483, %v482
      %v508 = vpack.c.b16 %v485, %v484
      %v509 = vpack.c.b16 %v487, %v486
      %v510 = vpack.c.b16 %v489, %v488
      %v511 = vpack.c.b16 %v491, %v490
      %v512 = vpack.c.b16 %v493, %v492
      %v513 = vpack.c.b16 %v495, %v494
      %v514 = vpack.c.b16 %v497, %v496
      %v515 = vpack.c.b16 %v499, %v498
      %v548 = vunpack.c.l.b16 %v420
      %v549 = vunpack.c.l.b16 %v421
      %v550 = vunpack.c.l.b16 %v422
      %v551 = vunpack.c.l.b16 %v423
      %v552 = vunpack.c.l.b16 %v424
      %v553 = vunpack.c.l.b16 %v425
      %v554 = vunpack.c.l.b16 %v426
      %v555 = vunpack.c.l.b16 %v427
      %v556 = vunpack.c.l.b16 %v428
      %v557 = vunpack.c.l.b16 %v429
      %v558 = vunpack.c.l.b16 %v430
      %v559 = vunpack.c.l.b16 %v431
      %v560 = vunpack.c.l.b16 %v432
      %v561 = vunpack.c.l.b16 %v433
      %v562 = vunpack.c.l.b16 %v434
      %v563 = vunpack.c.l.b16 %v435
      %v564 = vpack.c.b16 %v549, %v548
      %v565 = vpack.c.b16 %v551, %v550
      %v566 = vpack.c.b16 %v553, %v552
      %v567 = vpack.c.b16 %v555, %v554
      %v568 = vpack.c.b16 %v557, %v556
      %v569 = vpack.c.b16 %v559, %v558
      %v570 = vpack.c.b16 %v561, %v560
      %v571 = vpack.c.b16 %v563, %v562
      %580 = vmatprep.subr.bf16.mxu0 0
      %581 = vmatpush1.bf16.msra.mxu0 %v564
      %582 = vmatprep.subr.bf16.mxu0 0
      %583 = vmatpush1.bf16.msra.mxu0 %v565
      %584 = vmatprep.subr.bf16.mxu0 0
      %585 = vmatpush1.bf16.msra.mxu0 %v566
      %586 = vmatprep.subr.bf16.mxu0 0
      %587 = vmatpush1.bf16.msra.mxu0 %v567
      %588 = vmatprep.subr.bf16.mxu0 0
      %589 = vmatpush1.bf16.msra.mxu0 %v568
      %590 = vmatprep.subr.bf16.mxu0 0
      %591 = vmatpush1.bf16.msra.mxu0 %v569
      %592 = vmatprep.subr.bf16.mxu0 0
      %593 = vmatpush1.bf16.msra.mxu0 %v570
      %594 = vmatprep.subr.bf16.mxu0 0
      %595 = vmatpush1.bf16.msra.mxu0 %v571
      %596 = vmatprep.subr.bf16.mxu0 0
      %597 = vmatpush1.bf16.msra.mxu0 0
      %598 = vmatprep.subr.bf16.mxu0 0
      %599 = vmatpush1.bf16.msra.mxu0 0
      %600 = vmatprep.subr.bf16.mxu0 0
      %601 = vmatpush1.bf16.msra.mxu0 0
      %602 = vmatprep.subr.bf16.mxu0 0
      %603 = vmatpush1.bf16.msra.mxu0 0
      %604 = vmatprep.subr.bf16.mxu0 0
      %605 = vmatpush1.bf16.msra.mxu0 0
      %606 = vmatprep.subr.bf16.mxu0 0
      %607 = vmatpush1.bf16.msra.mxu0 0
      %608 = vmatprep.subr.bf16.mxu0 0
      %609 = vmatpush1.bf16.msra.mxu0 0
      %610 = vmatprep.subr.bf16.mxu0 0
      %611 = vmatpush1.bf16.msra.mxu0 0
      %612 = vmatprep.mubr.bf16.mxu0 0
      %613 = vmatmul.mubr.bf16.gmra.mrb[0].mxu0 %v500
      %v614 = vpop.f32.mrb[0].mxu0
      %v615 = vadd.f32 0.0, %v614
      %v616 = vpop.f32.mrb[0].mxu0
      %v617 = vpop.f32.mrb[0].mxu0
      %v618 = vadd.f32 0.0, %v617
      %v619 = vpop.f32.mrb[0].mxu0
      %620 = vmatprep.mubr.bf16.mxu0 0
      %621 = vmatmul.mubr.bf16.gmra.mrb[0].mxu0 %v501
      %v622 = vpop.f32.mrb[0].mxu0
      %v623 = vadd.f32 0.0, %v622
      %v624 = vpop.f32.mrb[0].mxu0
      %v625 = vpop.f32.mrb[0].mxu0
      %v626 = vadd.f32 0.0, %v625
      %v627 = vpop.f32.mrb[0].mxu0
      %628 = vmatprep.mubr.bf16.mxu0 0
      %629 = vmatmul.mubr.bf16.gmra.mrb[0].mxu0 %v502
      %v630 = vpop.f32.mrb[0].mxu0
      %v631 = vadd.f32 0.0, %v630
      %v632 = vpop.f32.mrb[0].mxu0
      %v633 = vpop.f32.mrb[0].mxu0
      %v634 = vadd.f32 0.0, %v633
      %v635 = vpop.f32.mrb[0].mxu0
      %636 = vmatprep.mubr.bf16.mxu0 0
      %637 = vmatmul.mubr.bf16.gmra.mrb[0].mxu0 %v503
      %v638 = vpop.f32.mrb[0].mxu0
      %v639 = vadd.f32 0.0, %v638
      %v640 = vpop.f32.mrb[0].mxu0
      %v641 = vpop.f32.mrb[0].mxu0
      %v642 = vadd.f32 0.0, %v641
      %v643 = vpop.f32.mrb[0].mxu0
      %644 = vmatprep.mubr.bf16.mxu0 0
      %645 = vmatmul.mubr.bf16.gmra.mrb[0].mxu0 %v504
      %v646 = vpop.f32.mrb[0].mxu0
      %v647 = vadd.f32 0.0, %v646
      %v648 = vpop.f32.mrb[0].mxu0
      %v649 = vpop.f32.mrb[0].mxu0
      %v650 = vadd.f32 0.0, %v649
      %v651 = vpop.f32.mrb[0].mxu0
      %652 = vmatprep.mubr.bf16.mxu0 0
      %653 = vmatmul.mubr.bf16.gmra.mrb[0].mxu0 %v505
      %v654 = vpop.f32.mrb[0].mxu0
      %v655 = vadd.f32 0.0, %v654
      %v656 = vpop.f32.mrb[0].mxu0
      %v657 = vpop.f32.mrb[0].mxu0
      %v658 = vadd.f32 0.0, %v657
      %v659 = vpop.f32.mrb[0].mxu0
      %660 = vmatprep.mubr.bf16.mxu0 0
      %661 = vmatmul.mubr.bf16.gmra.mrb[0].mxu0 %v506
      %v662 = vpop.f32.mrb[0].mxu0
      %v663 = vadd.f32 0.0, %v662
      %v664 = vpop.f32.mrb[0].mxu0
      %v665 = vpop.f32.mrb[0].mxu0
      %v666 = vadd.f32 0.0, %v665
      %v667 = vpop.f32.mrb[0].mxu0
      %668 = vmatprep.mubr.bf16.mxu0 0
      %669 = vmatmul.mubr.bf16.gmra.mrb[0].mxu0 %v507
      %v670 = vpop.f32.mrb[0].mxu0
      %v671 = vadd.f32 0.0, %v670
      %v672 = vpop.f32.mrb[0].mxu0
      %v673 = vpop.f32.mrb[0].mxu0
      %v674 = vadd.f32 0.0, %v673
      %v675 = vpop.f32.mrb[0].mxu0
      %676 = vmatprep.mubr.bf16.mxu0 0
      %677 = vmatmul.mubr.bf16.gmra.mrb[0].mxu0 %v508
      %v678 = vpop.f32.mrb[0].mxu0
      %v679 = vadd.f32 0.0, %v678
      %v680 = vpop.f32.mrb[0].mxu0
      %v681 = vpop.f32.mrb[0].mxu0
      %v682 = vadd.f32 0.0, %v681
      %v683 = vpop.f32.mrb[0].mxu0
      %684 = vmatprep.mubr.bf16.mxu0 0
      %685 = vmatmul.mubr.bf16.gmra.mrb[0].mxu0 %v509
      %v686 = vpop.f32.mrb[0].mxu0
      %v687 = vadd.f32 0.0, %v686
      %v688 = vpop.f32.mrb[0].mxu0
      %v689 = vpop.f32.mrb[0].mxu0
      %v690 = vadd.f32 0.0, %v689
      %v691 = vpop.f32.mrb[0].mxu0
      %692 = vmatprep.mubr.bf16.mxu0 0
      %693 = vmatmul.mubr.bf16.gmra.mrb[0].mxu0 %v510
      %v694 = vpop.f32.mrb[0].mxu0
      %v695 = vadd.f32 0.0, %v694
      %v696 = vpop.f32.mrb[0].mxu0
      %v697 = vpop.f32.mrb[0].mxu0
      %v698 = vadd.f32 0.0, %v697
      %v699 = vpop.f32.mrb[0].mxu0
      %700 = vmatprep.mubr.bf16.mxu0 0
      %701 = vmatmul.mubr.bf16.gmra.mrb[0].mxu0 %v511
      %v702 = vpop.f32.mrb[0].mxu0
      %v703 = vadd.f32 0.0, %v702
      %v704 = vpop.f32.mrb[0].mxu0
      %v705 = vpop.f32.mrb[0].mxu0
      %v706 = vadd.f32 0.0, %v705
      %v707 = vpop.f32.mrb[0].mxu0
      %708 = vmatprep.mubr.bf16.mxu0 0
      %709 = vmatmul.mubr.bf16.gmra.mrb[0].mxu0 %v512
      %v710 = vpop.f32.mrb[0].mxu0
      %v711 = vadd.f32 0.0, %v710
      %v712 = vpop.f32.mrb[0].mxu0
      %v713 = vpop.f32.mrb[0].mxu0
      %v714 = vadd.f32 0.0, %v713
      %v715 = vpop.f32.mrb[0].mxu0
      %716 = vmatprep.mubr.bf16.mxu0 0
      %717 = vmatmul.mubr.bf16.gmra.mrb[0].mxu0 %v513
      %v718 = vpop.f32.mrb[0].mxu0
      %v719 = vadd.f32 0.0, %v718
      %v720 = vpop.f32.mrb[0].mxu0
      %v721 = vpop.f32.mrb[0].mxu0
      %v722 = vadd.f32 0.0, %v721
      %v723 = vpop.f32.mrb[0].mxu0
      %724 = vmatprep.mubr.bf16.mxu0 0
      %725 = vmatmul.mubr.bf16.gmra.mrb[0].mxu0 %v514
      %v726 = vpop.f32.mrb[0].mxu0
      %v727 = vadd.f32 0.0, %v726
      %v728 = vpop.f32.mrb[0].mxu0
      %v729 = vpop.f32.mrb[0].mxu0
      %v730 = vadd.f32 0.0, %v729
      %v731 = vpop.f32.mrb[0].mxu0
      %732 = vmatprep.mubr.bf16.mxu0 0
      %733 = vmatmul.mubr.bf16.gmra.mrb[0].mxu0 %v515
      %v734 = vpop.f32.mrb[0].mxu0
      %v735 = vadd.f32 0.0, %v734
      %v736 = vpop.f32.mrb[0].mxu0
      %v737 = vpop.f32.mrb[0].mxu0
      %v738 = vadd.f32 0.0, %v737
      %v739 = vpop.f32.mrb[0].mxu0
      %740 = vdwg.mxu0
      %v741 = vadd.f32 %v356, %v615
      %v742 = vadd.f32 %v357, %v618
      %v743 = vadd.f32 %v358, %v623
      %v744 = vadd.f32 %v359, %v626
      %v745 = vadd.f32 %v360, %v631
      %v746 = vadd.f32 %v361, %v634
      %v747 = vadd.f32 %v362, %v639
      %v748 = vadd.f32 %v363, %v642
      %v749 = vadd.f32 %v364, %v647
      %v750 = vadd.f32 %v365, %v650
      %v751 = vadd.f32 %v366, %v655
      %v752 = vadd.f32 %v367, %v658
      %v753 = vadd.f32 %v368, %v663
      %v754 = vadd.f32 %v369, %v666
      %v755 = vadd.f32 %v370, %v671
      %v756 = vadd.f32 %v371, %v674
      %v757 = vadd.f32 %v372, %v679
      %v758 = vadd.f32 %v373, %v682
      %v759 = vadd.f32 %v374, %v687
      %v760 = vadd.f32 %v375, %v690
      %v761 = vadd.f32 %v376, %v695
      %v762 = vadd.f32 %v377, %v698
      %v763 = vadd.f32 %v378, %v703
      %v764 = vadd.f32 %v379, %v706
      %v765 = vadd.f32 %v380, %v711
      %v766 = vadd.f32 %v381, %v714
      %v767 = vadd.f32 %v382, %v719
      %v768 = vadd.f32 %v383, %v722
      %v769 = vadd.f32 %v384, %v727
      %v770 = vadd.f32 %v385, %v730
      %v771 = vadd.f32 %v386, %v735
      %v772 = vadd.f32 %v387, %v738
      %773 = vst [vmem:[#allocation2] sm:$0xff] %v741
      %774 = vst [vmem:[#allocation2 + $0x8] sm:$0xff] %v742
      %775 = vst [vmem:[#allocation2 + $0x10] sm:$0xff] %v743
      %776 = vst [vmem:[#allocation2 + $0x18] sm:$0xff] %v744
      %777 = vst [vmem:[#allocation2 + $0x20] sm:$0xff] %v745
      %778 = vst [vmem:[#allocation2 + $0x28] sm:$0xff] %v746
      %779 = vst [vmem:[#allocation2 + $0x30] sm:$0xff] %v747
      %780 = vst [vmem:[#allocation2 + $0x38] sm:$0xff] %v748
      %781 = vst [vmem:[#allocation2 + $0x40] sm:$0xff] %v749
      %782 = vst [vmem:[#allocation2 + $0x48] sm:$0xff] %v750
      %783 = vst [vmem:[#allocation2 + $0x50] sm:$0xff] %v751
      %784 = vst [vmem:[#allocation2 + $0x58] sm:$0xff] %v752
      %785 = vst [vmem:[#allocation2 + $0x60] sm:$0xff] %v753
      %786 = vst [vmem:[#allocation2 + $0x68] sm:$0xff] %v754
      %787 = vst [vmem:[#allocation2 + $0x70] sm:$0xff] %v755
      %788 = vst [vmem:[#allocation2 + $0x78] sm:$0xff] %v756
      %789 = vst [vmem:[#allocation2 + $0x80] sm:$0xff] %v757
      %790 = vst [vmem:[#allocation2 + $0x88] sm:$0xff] %v758
      %791 = vst [vmem:[#allocation2 + $0x90] sm:$0xff] %v759
      %792 = vst [vmem:[#allocation2 + $0x98] sm:$0xff] %v760
      %793 = vst [vmem:[#allocation2 + $0xa0] sm:$0xff] %v761
      %794 = vst [vmem:[#allocation2 + $0xa8] sm:$0xff] %v762
      %795 = vst [vmem:[#allocation2 + $0xb0] sm:$0xff] %v763
      %796 = vst [vmem:[#allocation2 + $0xb8] sm:$0xff] %v764
      %797 = vst [vmem:[#allocation2 + $0xc0] sm:$0xff] %v765
      %798 = vst [vmem:[#allocation2 + $0xc8] sm:$0xff] %v766
      %799 = vst [vmem:[#allocation2 + $0xd0] sm:$0xff] %v767
      %800 = vst [vmem:[#allocation2 + $0xd8] sm:$0xff] %v768
      %801 = vst [vmem:[#allocation2 + $0xe0] sm:$0xff] %v769
      %802 = vst [vmem:[#allocation2 + $0xe8] sm:$0xff] %v770
      %803 = vst [vmem:[#allocation2 + $0xf0] sm:$0xff] %v771
      %804 = vst [vmem:[#allocation2 + $0xf8] sm:$0xff] %v772
      // Predicated region
      $region41: #{bottleneck_forward.5} parent=35 // pred_check
        %p805 = pneg %p320
      $region42: #{bottleneck_forward.5} parent=35 // pred_check_branch
        %807 = sbr.rel (%p805) target = $region44
      $region43: #{bottleneck_forward.5} parent=35 // pred_region
        %v808 = vld [vmem:[#allocation2] sm:$0xff]
        %v809 = vld [vmem:[#allocation2 + $0x8] sm:$0xff]
        %v810 = vld [vmem:[#allocation2 + $0x10] sm:$0xff]
        %v811 = vld [vmem:[#allocation2 + $0x18] sm:$0xff]
        %v812 = vld [vmem:[#allocation2 + $0x20] sm:$0xff]
        %v813 = vld [vmem:[#allocation2 + $0x28] sm:$0xff]
        %v814 = vld [vmem:[#allocation2 + $0x30] sm:$0xff]
        %v815 = vld [vmem:[#allocation2 + $0x38] sm:$0xff]
        %v816 = vld [vmem:[#allocation2 + $0x40] sm:$0xff]
        %v817 = vld [vmem:[#allocation2 + $0x48] sm:$0xff]
        %v818 = vld [vmem:[#allocation2 + $0x50] sm:$0xff]
        %v819 = vld [vmem:[#allocation2 + $0x58] sm:$0xff]
        %v820 = vld [vmem:[#allocation2 + $0x60] sm:$0xff]
        %v821 = vld [vmem:[#allocation2 + $0x68] sm:$0xff]
        %v822 = vld [vmem:[#allocation2 + $0x70] sm:$0xff]
        %v823 = vld [vmem:[#allocation2 + $0x78] sm:$0xff]
        %v824 = vld [vmem:[#allocation2 + $0x80] sm:$0xff]
        %v825 = vld [vmem:[#allocation2 + $0x88] sm:$0xff]
        %v826 = vld [vmem:[#allocation2 + $0x90] sm:$0xff]
        %v827 = vld [vmem:[#allocation2 + $0x98] sm:$0xff]
        %v828 = vld [vmem:[#allocation2 + $0xa0] sm:$0xff]
        %v829 = vld [vmem:[#allocation2 + $0xa8] sm:$0xff]
        %v830 = vld [vmem:[#allocation2 + $0xb0] sm:$0xff]
        %v831 = vld [vmem:[#allocation2 + $0xb8] sm:$0xff]
        %v832 = vld [vmem:[#allocation2 + $0xc0] sm:$0xff]
        %v833 = vld [vmem:[#allocation2 + $0xc8] sm:$0xff]
        %v834 = vld [vmem:[#allocation2 + $0xd0] sm:$0xff]
        %v835 = vld [vmem:[#allocation2 + $0xd8] sm:$0xff]
        %v836 = vld [vmem:[#allocation2 + $0xe0] sm:$0xff]
        %v837 = vld [vmem:[#allocation2 + $0xe8] sm:$0xff]
        %v838 = vld [vmem:[#allocation2 + $0xf0] sm:$0xff]
        %v839 = vld [vmem:[#allocation2 + $0xf8] sm:$0xff]
        %v840 = vld [vmem:[%s300] sm:$0x1]
        %v842 = vlaneseq
        %v843 = vshrl.u32 %v842, 7
        %v844 = vsub.s32 0, %v843
        %v845 = vrot.slane %v840, %v844
        %v847 = vadd.f32 %v808, %v845
        %v848 = vadd.f32 %v809, %v845
        %v849 = vadd.f32 %v810, %v845
        %v850 = vadd.f32 %v811, %v845
        %v851 = vadd.f32 %v812, %v845
        %v852 = vadd.f32 %v813, %v845
        %v853 = vadd.f32 %v814, %v845
        %v854 = vadd.f32 %v815, %v845
        %v855 = vadd.f32 %v816, %v845
        %v856 = vadd.f32 %v817, %v845
        %v857 = vadd.f32 %v818, %v845
        %v858 = vadd.f32 %v819, %v845
        %v859 = vadd.f32 %v820, %v845
        %v860 = vadd.f32 %v821, %v845
        %v861 = vadd.f32 %v822, %v845
        %v862 = vadd.f32 %v823, %v845
        %v863 = vadd.f32 %v824, %v845
        %v864 = vadd.f32 %v825, %v845
        %v865 = vadd.f32 %v826, %v845
        %v866 = vadd.f32 %v827, %v845
        %v867 = vadd.f32 %v828, %v845
        %v868 = vadd.f32 %v829, %v845
        %v869 = vadd.f32 %v830, %v845
        %v870 = vadd.f32 %v831, %v845
        %v871 = vadd.f32 %v832, %v845
        %v872 = vadd.f32 %v833, %v845
        %v873 = vadd.f32 %v834, %v845
        %v874 = vadd.f32 %v835, %v845
        %v875 = vadd.f32 %v836, %v845
        %v876 = vadd.f32 %v837, %v845
        %v877 = vadd.f32 %v838, %v845
        %v878 = vadd.f32 %v839, %v845
        %v879 = vld [vmem:[%s308] sm:$0xf]
        %v880 = vld [vmem:[%s308 + $0x4] sm:$0xf]
        %v881 = vld [vmem:[%s308 + $0x8] sm:$0xf]
        %v882 = vld [vmem:[%s308 + $0xc] sm:$0xf]
        %v883 = vld [vmem:[%s308 + $0x10] sm:$0xf]
        %v884 = vld [vmem:[%s308 + $0x14] sm:$0xf]
        %v885 = vld [vmem:[%s308 + $0x18] sm:$0xf]
        %v886 = vld [vmem:[%s308 + $0x1c] sm:$0xf]
        %v887 = vld [vmem:[%s308 + $0x20] sm:$0xf]
        %v888 = vld [vmem:[%s308 + $0x24] sm:$0xf]
        %v889 = vld [vmem:[%s308 + $0x28] sm:$0xf]
        %v890 = vld [vmem:[%s308 + $0x2c] sm:$0xf]
        %v891 = vld [vmem:[%s308 + $0x30] sm:$0xf]
        %v892 = vld [vmem:[%s308 + $0x34] sm:$0xf]
        %v893 = vld [vmem:[%s308 + $0x38] sm:$0xf]
        %v894 = vld [vmem:[%s308 + $0x3c] sm:$0xf]
        %v895 = vld [vmem:[%s308 + $0x40] sm:$0xf]
        %v896 = vld [vmem:[%s308 + $0x44] sm:$0xf]
        %v897 = vld [vmem:[%s308 + $0x48] sm:$0xf]
        %v898 = vld [vmem:[%s308 + $0x4c] sm:$0xf]
        %v899 = vld [vmem:[%s308 + $0x50] sm:$0xf]
        %v900 = vld [vmem:[%s308 + $0x54] sm:$0xf]
        %v901 = vld [vmem:[%s308 + $0x58] sm:$0xf]
        %v902 = vld [vmem:[%s308 + $0x5c] sm:$0xf]
        %v903 = vld [vmem:[%s308 + $0x60] sm:$0xf]
        %v904 = vld [vmem:[%s308 + $0x64] sm:$0xf]
        %v905 = vld [vmem:[%s308 + $0x68] sm:$0xf]
        %v906 = vld [vmem:[%s308 + $0x6c] sm:$0xf]
        %v907 = vld [vmem:[%s308 + $0x70] sm:$0xf]
        %v908 = vld [vmem:[%s308 + $0x74] sm:$0xf]
        %v909 = vld [vmem:[%s308 + $0x78] sm:$0xf]
        %v910 = vld [vmem:[%s308 + $0x7c] sm:$0xf]
        %v911 = vunpack.c.l.bf16 %v879
        %v912 = vunpack.c.l.bf16 %v880
        %v913 = vunpack.c.l.bf16 %v881
        %v914 = vunpack.c.l.bf16 %v882
        %v915 = vunpack.c.l.bf16 %v883
        %v916 = vunpack.c.l.bf16 %v884
        %v917 = vunpack.c.l.bf16 %v885
        %v918 = vunpack.c.l.bf16 %v886
        %v919 = vunpack.c.l.bf16 %v887
        %v920 = vunpack.c.l.bf16 %v888
        %v921 = vunpack.c.l.bf16 %v889
        %v922 = vunpack.c.l.bf16 %v890
        %v923 = vunpack.c.l.bf16 %v891
        %v924 = vunpack.c.l.bf16 %v892
        %v925 = vunpack.c.l.bf16 %v893
        %v926 = vunpack.c.l.bf16 %v894
        %v927 = vunpack.c.l.bf16 %v895
        %v928 = vunpack.c.l.bf16 %v896
        %v929 = vunpack.c.l.bf16 %v897
        %v930 = vunpack.c.l.bf16 %v898
        %v931 = vunpack.c.l.bf16 %v899
        %v932 = vunpack.c.l.bf16 %v900
        %v933 = vunpack.c.l.bf16 %v901
        %v934 = vunpack.c.l.bf16 %v902
        %v935 = vunpack.c.l.bf16 %v903
        %v936 = vunpack.c.l.bf16 %v904
        %v937 = vunpack.c.l.bf16 %v905
        %v938 = vunpack.c.l.bf16 %v906
        %v939 = vunpack.c.l.bf16 %v907
        %v940 = vunpack.c.l.bf16 %v908
        %v941 = vunpack.c.l.bf16 %v909
        %v942 = vunpack.c.l.bf16 %v910
        %v943 = vadd.f32 %v847, %v911
        %v944 = vadd.f32 %v848, %v912
        %v945 = vadd.f32 %v849, %v913
        %v946 = vadd.f32 %v850, %v914
        %v947 = vadd.f32 %v851, %v915
        %v948 = vadd.f32 %v852, %v916
        %v949 = vadd.f32 %v853, %v917
        %v950 = vadd.f32 %v854, %v918
        %v951 = vadd.f32 %v855, %v919
        %v952 = vadd.f32 %v856, %v920
        %v953 = vadd.f32 %v857, %v921
        %v954 = vadd.f32 %v858, %v922
        %v955 = vadd.f32 %v859, %v923
        %v956 = vadd.f32 %v860, %v924
        %v957 = vadd.f32 %v861, %v925
        %v958 = vadd.f32 %v862, %v926
        %v959 = vadd.f32 %v863, %v927
        %v960 = vadd.f32 %v864, %v928
        %v961 = vadd.f32 %v865, %v929
        %v962 = vadd.f32 %v866, %v930
        %v963 = vadd.f32 %v867, %v931
        %v964 = vadd.f32 %v868, %v932
        %v965 = vadd.f32 %v869, %v933
        %v966 = vadd.f32 %v870, %v934
        %v967 = vadd.f32 %v871, %v935
        %v968 = vadd.f32 %v872, %v936
        %v969 = vadd.f32 %v873, %v937
        %v970 = vadd.f32 %v874, %v938
        %v971 = vadd.f32 %v875, %v939
        %v972 = vadd.f32 %v876, %v940
        %v973 = vadd.f32 %v877, %v941
        %v974 = vadd.f32 %v878, %v942
        %v975 = vmax.f32 %v943, 0.0
        %v976 = vmax.f32 %v944, 0.0
        %v977 = vmax.f32 %v945, 0.0
        %v978 = vmax.f32 %v946, 0.0
        %v979 = vmax.f32 %v947, 0.0
        %v980 = vmax.f32 %v948, 0.0
        %v981 = vmax.f32 %v949, 0.0
        %v982 = vmax.f32 %v950, 0.0
        %v983 = vmax.f32 %v951, 0.0
        %v984 = vmax.f32 %v952, 0.0
        %v985 = vmax.f32 %v953, 0.0
        %v986 = vmax.f32 %v954, 0.0
        %v987 = vmax.f32 %v955, 0.0
        %v988 = vmax.f32 %v956, 0.0
        %v989 = vmax.f32 %v957, 0.0
        %v990 = vmax.f32 %v958, 0.0
        %v991 = vmax.f32 %v959, 0.0
        %v992 = vmax.f32 %v960, 0.0
        %v993 = vmax.f32 %v961, 0.0
        %v994 = vmax.f32 %v962, 0.0
        %v995 = vmax.f32 %v963, 0.0
        %v996 = vmax.f32 %v964, 0.0
        %v997 = vmax.f32 %v965, 0.0
        %v998 = vmax.f32 %v966, 0.0
        %v999 = vmax.f32 %v967, 0.0
        %v1000 = vmax.f32 %v968, 0.0
        %v1001 = vmax.f32 %v969, 0.0
        %v1002 = vmax.f32 %v970, 0.0
        %v1003 = vmax.f32 %v971, 0.0
        %v1004 = vmax.f32 %v972, 0.0
        %v1005 = vmax.f32 %v973, 0.0
        %v1006 = vmax.f32 %v974, 0.0
        %v1007 = vpack.c.bf16 %v976, %v975
        %v1008 = vpack.c.bf16 %v978, %v977
        %v1009 = vpack.c.bf16 %v980, %v979
        %v1010 = vpack.c.bf16 %v982, %v981
        %v1011 = vpack.c.bf16 %v984, %v983
        %v1012 = vpack.c.bf16 %v986, %v985
        %v1013 = vpack.c.bf16 %v988, %v987
        %v1014 = vpack.c.bf16 %v990, %v989
        %v1015 = vpack.c.bf16 %v992, %v991
        %v1016 = vpack.c.bf16 %v994, %v993
        %v1017 = vpack.c.bf16 %v996, %v995
        %v1018 = vpack.c.bf16 %v998, %v997
        %v1019 = vpack.c.bf16 %v1000, %v999
        %v1020 = vpack.c.bf16 %v1002, %v1001
        %v1021 = vpack.c.bf16 %v1004, %v1003
        %v1022 = vpack.c.bf16 %v1006, %v1005
        %v1039 = vunpack.c.l.b16 %v1007
        %v1040 = vunpack.c.h.b16 %v1007
        %v1041 = vunpack.c.l.b16 %v1008
        %v1042 = vunpack.c.h.b16 %v1008
        %v1043 = vunpack.c.l.b16 %v1009
        %v1044 = vunpack.c.h.b16 %v1009
        %v1045 = vunpack.c.l.b16 %v1010
        %v1046 = vunpack.c.h.b16 %v1010
        %v1047 = vunpack.c.l.b16 %v1011
        %v1048 = vunpack.c.h.b16 %v1011
        %v1049 = vunpack.c.l.b16 %v1012
        %v1050 = vunpack.c.h.b16 %v1012
        %v1051 = vunpack.c.l.b16 %v1013
        %v1052 = vunpack.c.h.b16 %v1013
        %v1053 = vunpack.c.l.b16 %v1014
        %v1054 = vunpack.c.h.b16 %v1014
        %v1055 = vunpack.c.l.b16 %v1015
        %v1056 = vunpack.c.h.b16 %v1015
        %v1057 = vunpack.c.l.b16 %v1016
        %v1058 = vunpack.c.h.b16 %v1016
        %v1059 = vunpack.c.l.b16 %v1017
        %v1060 = vunpack.c.h.b16 %v1017
        %v1061 = vunpack.c.l.b16 %v1018
        %v1062 = vunpack.c.h.b16 %v1018
        %v1063 = vunpack.c.l.b16 %v1019
        %v1064 = vunpack.c.h.b16 %v1019
        %v1065 = vunpack.c.l.b16 %v1020
        %v1066 = vunpack.c.h.b16 %v1020
        %v1067 = vunpack.c.l.b16 %v1021
        %v1068 = vunpack.c.h.b16 %v1021
        %v1069 = vunpack.c.l.b16 %v1022
        %v1070 = vunpack.c.h.b16 %v1022
        %v1071 = vpack.c.b16 %v1039, %v1039
        %v1072 = vpack.c.b16 %v1040, %v1040
        %v1073 = vpack.c.b16 %v1041, %v1041
        %v1074 = vpack.c.b16 %v1042, %v1042
        %v1075 = vpack.c.b16 %v1043, %v1043
        %v1076 = vpack.c.b16 %v1044, %v1044
        %v1077 = vpack.c.b16 %v1045, %v1045
        %v1078 = vpack.c.b16 %v1046, %v1046
        %v1079 = vpack.c.b16 %v1047, %v1047
        %v1080 = vpack.c.b16 %v1048, %v1048
        %v1081 = vpack.c.b16 %v1049, %v1049
        %v1082 = vpack.c.b16 %v1050, %v1050
        %v1083 = vpack.c.b16 %v1051, %v1051
        %v1084 = vpack.c.b16 %v1052, %v1052
        %v1085 = vpack.c.b16 %v1053, %v1053
        %v1086 = vpack.c.b16 %v1054, %v1054
        %v1087 = vpack.c.b16 %v1055, %v1055
        %v1088 = vpack.c.b16 %v1056, %v1056
        %v1089 = vpack.c.b16 %v1057, %v1057
        %v1090 = vpack.c.b16 %v1058, %v1058
        %v1091 = vpack.c.b16 %v1059, %v1059
        %v1092 = vpack.c.b16 %v1060, %v1060
        %v1093 = vpack.c.b16 %v1061, %v1061
        %v1094 = vpack.c.b16 %v1062, %v1062
        %v1095 = vpack.c.b16 %v1063, %v1063
        %v1096 = vpack.c.b16 %v1064, %v1064
        %v1097 = vpack.c.b16 %v1065, %v1065
        %v1098 = vpack.c.b16 %v1066, %v1066
        %v1099 = vpack.c.b16 %v1067, %v1067
        %v1100 = vpack.c.b16 %v1068, %v1068
        %v1101 = vpack.c.b16 %v1069, %v1069
        %v1102 = vpack.c.b16 %v1070, %v1070
        %1135 = vst [vmem:[%s317] sm:$0xf] %v1071
        %1136 = vst [vmem:[%s317 + $0x4] sm:$0xf] %v1072
        %1137 = vst [vmem:[%s317 + $0x8] sm:$0xf] %v1073
        %1138 = vst [vmem:[%s317 + $0xc] sm:$0xf] %v1074
        %1139 = vst [vmem:[%s317 + $0x10] sm:$0xf] %v1075
        %1140 = vst [vmem:[%s317 + $0x14] sm:$0xf] %v1076
        %1141 = vst [vmem:[%s317 + $0x18] sm:$0xf] %v1077
        %1142 = vst [vmem:[%s317 + $0x1c] sm:$0xf] %v1078
        %1143 = vst [vmem:[%s317 + $0x20] sm:$0xf] %v1079
        %1144 = vst [vmem:[%s317 + $0x24] sm:$0xf] %v1080
        %1145 = vst [vmem:[%s317 + $0x28] sm:$0xf] %v1081
        %1146 = vst [vmem:[%s317 + $0x2c] sm:$0xf] %v1082
        %1147 = vst [vmem:[%s317 + $0x30] sm:$0xf] %v1083
        %1148 = vst [vmem:[%s317 + $0x34] sm:$0xf] %v1084
        %1149 = vst [vmem:[%s317 + $0x38] sm:$0xf] %v1085
        %1150 = vst [vmem:[%s317 + $0x3c] sm:$0xf] %v1086
        %1151 = vst [vmem:[%s317 + $0x40] sm:$0xf] %v1087
        %1152 = vst [vmem:[%s317 + $0x44] sm:$0xf] %v1088
        %1153 = vst [vmem:[%s317 + $0x48] sm:$0xf] %v1089
        %1154 = vst [vmem:[%s317 + $0x4c] sm:$0xf] %v1090
        %1155 = vst [vmem:[%s317 + $0x50] sm:$0xf] %v1091
        %1156 = vst [vmem:[%s317 + $0x54] sm:$0xf] %v1092
        %1157 = vst [vmem:[%s317 + $0x58] sm:$0xf] %v1093
        %1158 = vst [vmem:[%s317 + $0x5c] sm:$0xf] %v1094
        %1159 = vst [vmem:[%s317 + $0x60] sm:$0xf] %v1095
        %1160 = vst [vmem:[%s317 + $0x64] sm:$0xf] %v1096
        %1161 = vst [vmem:[%s317 + $0x68] sm:$0xf] %v1097
        %1162 = vst [vmem:[%s317 + $0x6c] sm:$0xf] %v1098
        %1163 = vst [vmem:[%s317 + $0x70] sm:$0xf] %v1099
        %1164 = vst [vmem:[%s317 + $0x74] sm:$0xf] %v1100
        %1165 = vst [vmem:[%s317 + $0x78] sm:$0xf] %v1101
        %1166 = vst [vmem:[%s317 + $0x7c] sm:$0xf] %v1102
      $region44: #{bottleneck_forward.5} parent=35 // pred_fallthru
        _
      %s1167 = smul.u32 32, %s20
      %p1168 = scmp.lt.s32.totalorder %s1167, 63
      %s1169 = scalar_select %p1168, %s1167, 63
      %p1170 = scmp.lt.s32.totalorder %s21, 0
      %s1171 = scalar_select %p1170, %s21, 0
      %s1172 = sadd.s32 %s1171, %s1169
      %s1173 = smul.addr %s1172, 4
      %s1174 = scalar_lea.vmem %s4, %s1173
      // Predicated region
      $region45: #{bottleneck_forward.5} parent=35 // pred_check
        %p1175 = pneg %p164
      $region46: #{bottleneck_forward.5} parent=35 // pred_check_branch
        %1177 = sbr.rel (%p1175) target = $region48
      $region47: #{bottleneck_forward.5} parent=35 // pred_region
        %s1178 = smul.u32 32, %s20
      $region48: #{bottleneck_forward.5} parent=35 // pred_fallthru
        _
    $region36: #{bottleneck_forward.5} parent=5 // pred_fallthru
      _
    %p1179 = scmp.le.s32.totalorder 2, %s10
    // Predicated region
    $region49: #{bottleneck_forward.5} parent=5 // pred_check
      %p1180 = pneg %p1179
    $region50: #{bottleneck_forward.5} parent=5 // pred_check_branch
      %1182 = sbr.rel (%p1180) target = $region52
    $region51: #{bottleneck_forward.5} parent=5 // pred_region
      %s1183 = ssub.s32 %s10, 2
      // Predicated region
      $region53: #{bottleneck_forward.5} parent=51 // pred_check
        %p1184 = pneg %p170
      $region54: #{bottleneck_forward.5} parent=51 // pred_check_branch
        %1186 = sbr.rel (%p1184) target = $region56
      $region55: #{bottleneck_forward.5} parent=51 // pred_region
        %s1187 = smul.u32 32, %s23
        %p1188 = scmp.lt.s32.totalorder %s1187, 63
        %s1189 = scalar_select %p1188, %s1187, 63
        %p1190 = scmp.lt.s32.totalorder %s24, 0
        %s1191 = scalar_select %p1190, %s24, 0
        %s1192 = sadd.s32 %s1191, %s1189
        %s1193 = smul.addr %s1192, 4
        %s1194 = scalar_lea.vmem %s4, %s1193
      $region56: #{bottleneck_forward.5} parent=51 // pred_fallthru
        _
    $region52: #{bottleneck_forward.5} parent=5 // pred_fallthru
      _
  $region6: #{bottleneck_forward.5} parent=0 // loop_footer
    %s14 = sadd.s32 1, %s10
  $region7: #{bottleneck_forward.5} parent=0 // loop_footer_branch
    %9 = sbr.rel target = $region3
  $region8: #{bottleneck_forward.5} parent=0 // loop_exit
    _

// kernel: bottleneck_forward.4
$region0: #{bottleneck_forward.4}
  #allocation0 [shape = 'u32[]', space=smem, size = 0x4, offset = 0x4, fixed_abs, tag = 'smem constant byte address 0x4 - core index']
  #allocation1 [shape = 'u32[144,128]{1,0:T(1,128)}', space=vmem, size = 0x12000, scoped, tag = 'internal scratch']
  #allocation2 [shape = 'f32[128,128]{1,0:T(8,128)}', space=vmem, size = 0x10000, scoped, tag = 'scratch operand']
  %s0 = inlined_call_operand.vmem [shape: bf16[2,18,18,128], index: 0, kind: input, shape index: {}]
  %s1 = inlined_call_operand.vmem [shape: bf16[3,384,128], index: 1, kind: input, shape index: {}]
  %s2 = inlined_call_operand.vmem [shape: f32[1,128], index: 2, kind: input, shape index: {}]
  %s3 = inlined_call_operand.vmem [shape: bf16[2,16,16,128], index: 3, kind: output, shape index: {}]
  %s4 = sld [smem:[#allocation0]]
  $region45: #{bottleneck_forward.4} parent=0
    _
  %s6 = ssub.s32 1, %s4
  %s7 = scalar_select 0, %s6, %s4
  loop: start=0, step=1, limit=6
  $region2: #{bottleneck_forward.4} parent=0 // loop_pre_header
    _
  $region3: #{bottleneck_forward.4} parent=0 // loop_header
    %s9 = sphi 0, %s13
    %p10 = scmp.ge.s32.totalorder %s9, 6
    %s16 = sphi 0, %s35
    %s17 = sphi 0, %s31
    %s18 = sphi 0, %s27
    %s19 = sphi 0, %s16
    %s20 = sphi 0, %s17
    %s21 = sphi 0, %s18
    %s22 = sphi 0, %s19
    %s23 = sphi 0, %s20
    %s24 = sphi 0, %s21
    %s38 = sphi 0, %s40
    %s41 = sphi 0, %s38
    %s42 = sphi 0, %s41
    %s58 = sphi 0, %s42
    %s64 = sphi 0, %s66
    %s67 = sphi 0, %s64
    %s68 = sphi 0, %s67
    %s84 = sphi 0, %s68
    %s90 = sphi 0, %s92
    %s93 = sphi 0, %s90
    %s94 = sphi 0, %s93
    %s110 = sphi 0, %s94
    %s120 = sphi 0, %s122
    %s123 = sphi 0, %s120
    %s124 = sphi 0, %s123
    %s140 = sphi 0, %s124
  $region4: #{bottleneck_forward.4} parent=0 // loop_header_branch
    %12 = sbr.rel (%p10) target = $region8
  $region5: #{bottleneck_forward.4} parent=0 // loop_body
    %s14 = ssub.s32 %s9, 1
    %s15 = ssub.s32 %s9, 2
    %s25 = sadd.s32 1, %s18
    %p26 = scmp.ge.s32.totalorder %s25, 2
    %s27 = scalar_select %p26, 0, %s25
    %s28 = sadd.s32 1, %s17
    %s29 = scalar_select %p26, %s28, %s17
    %p30 = scmp.ge.s32.totalorder %s29, 1
    %s31 = scalar_select %p30, 0, %s29
    %s32 = sadd.s32 1, %s16
    %s33 = scalar_select %p30, %s32, %s16
    %p34 = scmp.ge.s32.totalorder %s33, 2
    %s35 = scalar_select %p34, 0, %s33
    %s36 = ssub.s32 %s16, %s35
    %p37 = scmp.eq.s32.totalorder %s36, 0
    %s39 = sadd.s32 %s38, 1
    %s40 = scalar_select %p37, %s38, %s39
    %p43 = pneg %p37
    %p44 = scmp.eq.s32.totalorder %s9, 3
    %p45 = por %p43, %p44
    %p46 = scmp.ne.s32.totalorder %s38, %s41
    %p47 = scmp.eq.s32.totalorder %s9, 0
    %p48 = por %p46, %p47
    %p49 = scmp.ne.s32.totalorder %s38, %s41
    %p50 = scmp.eq.s32.totalorder %s14, 3
    %p51 = por %p49, %p50
    %p52 = scmp.ne.s32.totalorder %s41, %s42
    %p53 = scmp.eq.s32.totalorder %s14, 0
    %p54 = por %p52, %p53
    %p55 = scmp.ne.s32.totalorder %s41, %s42
    %p56 = scmp.eq.s32.totalorder %s15, 3
    %p57 = por %p55, %p56
    %p59 = scmp.ne.s32.totalorder %s42, %s58
    %p60 = scmp.eq.s32.totalorder %s15, 0
    %p61 = por %p59, %p60
    %s62 = ssub.s32 %s17, %s31
    %p63 = scmp.eq.s32.totalorder %s62, 0
    %s65 = sadd.s32 %s64, 1
    %s66 = scalar_select %p63, %s64, %s65
    %p69 = pneg %p63
    %p70 = scmp.eq.s32.totalorder %s9, 3
    %p71 = por %p69, %p70
    %p72 = scmp.ne.s32.totalorder %s64, %s67
    %p73 = scmp.eq.s32.totalorder %s9, 0
    %p74 = por %p72, %p73
    %p75 = scmp.ne.s32.totalorder %s64, %s67
    %p76 = scmp.eq.s32.totalorder %s14, 3
    %p77 = por %p75, %p76
    %p78 = scmp.ne.s32.totalorder %s67, %s68
    %p79 = scmp.eq.s32.totalorder %s14, 0
    %p80 = por %p78, %p79
    %p81 = scmp.ne.s32.totalorder %s67, %s68
    %p82 = scmp.eq.s32.totalorder %s15, 3
    %p83 = por %p81, %p82
    %p85 = scmp.ne.s32.totalorder %s68, %s84
    %p86 = scmp.eq.s32.totalorder %s15, 0
    %p87 = por %p85, %p86
    %s88 = ssub.s32 %s17, %s31
    %p89 = scmp.eq.s32.totalorder %s88, 0
    %s91 = sadd.s32 %s90, 1
    %s92 = scalar_select %p89, %s90, %s91
    %p95 = pneg %p89
    %p96 = scmp.eq.s32.totalorder %s9, 3
    %p97 = por %p95, %p96
    %p98 = scmp.ne.s32.totalorder %s90, %s93
    %p99 = scmp.eq.s32.totalorder %s9, 0
    %p100 = por %p98, %p99
    %p101 = scmp.ne.s32.totalorder %s90, %s93
    %p102 = scmp.eq.s32.totalorder %s14, 3
    %p103 = por %p101, %p102
    %p104 = scmp.ne.s32.totalorder %s93, %s94
    %p105 = scmp.eq.s32.totalorder %s14, 0
    %p106 = por %p104, %p105
    %p107 = scmp.ne.s32.totalorder %s93, %s94
    %p108 = scmp.eq.s32.totalorder %s15, 3
    %p109 = por %p107, %p108
    %p111 = scmp.ne.s32.totalorder %s94, %s110
    %p112 = scmp.eq.s32.totalorder %s15, 0
    %p113 = por %p111, %p112
    %s114 = ssub.s32 %s16, %s35
    %s115 = ssub.s32 %s18, %s27
    %s116 = sor.u32 %s114, %s115
    %s117 = ssub.s32 %s17, %s31
    %s118 = sor.u32 %s116, %s117
    %p119 = scmp.eq.s32.totalorder %s118, 0
    %s121 = sadd.s32 %s120, 1
    %s122 = scalar_select %p119, %s120, %s121
    %p125 = pneg %p119
    %p126 = scmp.eq.s32.totalorder %s9, 3
    %p127 = por %p125, %p126
    %p128 = scmp.ne.s32.totalorder %s120, %s123
    %p129 = scmp.eq.s32.totalorder %s9, 0
    %p130 = por %p128, %p129
    %p131 = scmp.ne.s32.totalorder %s120, %s123
    %p132 = scmp.eq.s32.totalorder %s14, 3
    %p133 = por %p131, %p132
    %p134 = scmp.ne.s32.totalorder %s123, %s124
    %p135 = scmp.eq.s32.totalorder %s14, 0
    %p136 = por %p134, %p135
    %p137 = scmp.ne.s32.totalorder %s123, %s124
    %p138 = scmp.eq.s32.totalorder %s15, 3
    %p139 = por %p137, %p138
    %p141 = scmp.ne.s32.totalorder %s124, %s140
    %p142 = scmp.eq.s32.totalorder %s15, 0
    %p143 = por %p141, %p142
    %p144 = scmp.le.s32.totalorder 1, %s9
    %p145 = scmp.lt.s32.totalorder %s9, 5
    %p146 = pnand %p144, %p145
    %p147 = pneg %p146
    // Predicated region
    $region9: #{bottleneck_forward.4} parent=5 // pred_check
      _
    $region10: #{bottleneck_forward.4} parent=5 // pred_check_branch
      %149 = sbr.rel (%p146) target = $region12
    $region11: #{bottleneck_forward.4} parent=5 // pred_region
      %s150 = ssub.s32 %s9, 1
      // Predicated region
      $region13: #{bottleneck_forward.4} parent=11 // pred_check
        %p151 = pneg %p80
      $region14: #{bottleneck_forward.4} parent=11 // pred_check_branch
        %153 = sbr.rel (%p151) target = $region16
      $region15: #{bottleneck_forward.4} parent=11 // pred_region
        %p154 = scmp.lt.s32.totalorder %s20, 0
        %s155 = scalar_select %p154, %s20, 0
        %s156 = smul.addr %s155, 4
        %s157 = scalar_lea.vmem %s1, %s156
      $region16: #{bottleneck_forward.4} parent=11 // pred_fallthru
        _
      // Predicated region
      $region17: #{bottleneck_forward.4} parent=11 // pred_check
        %p158 = pneg %p106
      $region18: #{bottleneck_forward.4} parent=11 // pred_check_branch
        %160 = sbr.rel (%p158) target = $region20
      $region19: #{bottleneck_forward.4} parent=11 // pred_region
        %p161 = scmp.lt.s32.totalorder %s20, 0
        %s162 = scalar_select %p161, %s20, 0
        %s163 = scalar_lea.vmem %s2, %s162
      $region20: #{bottleneck_forward.4} parent=11 // pred_fallthru
        _
    $region12: #{bottleneck_forward.4} parent=5 // pred_fallthru
      _
    %p164 = scmp.lt.s32.totalorder %s9, 4
    // Predicated region
    $region21: #{bottleneck_forward.4} parent=5 // pred_check
      %p165 = pneg %p164
    $region22: #{bottleneck_forward.4} parent=5 // pred_check_branch
      %167 = sbr.rel (%p165) target = $region24
    $region23: #{bottleneck_forward.4} parent=5 // pred_region
      // Predicated region
      $region25: #{bottleneck_forward.4} parent=23 // pred_check
        %p168 = pneg %p48
      $region26: #{bottleneck_forward.4} parent=23 // pred_check_branch
        %170 = sbr.rel (%p168) target = $region28
      $region27: #{bottleneck_forward.4} parent=23 // pred_region
        %p171 = scmp.lt.s32.totalorder %s16, 1
        %s172 = scalar_select %p171, %s16, 1
        %s173 = smul.addr %s172, 54
        %s174 = smul.addr %s173, 4
        %s175 = scalar_lea.vmem %s0, %s174
      $region28: #{bottleneck_forward.4} parent=23 // pred_fallthru
        _
    $region24: #{bottleneck_forward.4} parent=5 // pred_fallthru
      _
    %p176 = scmp.le.s32.totalorder 1, %s9
    %p177 = scmp.lt.s32.totalorder %s9, 5
    %p178 = pnand %p176, %p177
    %p179 = pneg %p178
    // Predicated region
    $region29: #{bottleneck_forward.4} parent=5 // pred_check
      _
    $region30: #{bottleneck_forward.4} parent=5 // pred_check_branch
      %181 = sbr.rel (%p178) target = $region32
    $region31: #{bottleneck_forward.4} parent=5 // pred_region
      %s182 = ssub.s32 %s9, 1
      %p183 = scmp.lt.s32.totalorder %s19, 1
      %s184 = scalar_select %p183, %s19, 1
      %s185 = smul.addr %s184, 54
      %s186 = smul.addr %s185, 4
      %s187 = scalar_lea.vmem %s0, %s186
      %p188 = pneg %p54
      %p189 = pneg %p51
      %p190 = scmp.lt.s32.totalorder %s20, 0
      %s191 = scalar_select %p190, %s20, 0
      %s192 = smul.addr %s191, 4
      %s193 = scalar_lea.vmem %s1, %s192
      %p194 = pneg %p80
      %p195 = pneg %p77
      %p196 = scmp.lt.s32.totalorder %s20, 0
      %s197 = scalar_select %p196, %s20, 0
      %s198 = scalar_lea.vmem %s2, %s197
      %p199 = pneg %p106
      %p200 = pneg %p103
      %p201 = pneg %p136
      %p202 = pneg %p133
      %s203 = smul.u32 8, %s21
      %p204 = scmp.lt.s32.totalorder %s19, 1
      %s205 = scalar_select %p204, %s19, 1
      %p206 = scmp.lt.s32.totalorder %s203, 15
      %s207 = scalar_select %p206, %s203, 15
      %p208 = scmp.lt.s32.totalorder %s20, 0
      %s209 = scalar_select %p208, %s20, 0
      %s210 = smul.addr %s207, 2
      %s211 = sadd.s32 %s209, %s210
      %s212 = smul.addr %s205, 32
      %s213 = sadd.s32 %s211, %s212
      %s214 = smul.addr %s213, 4
      %s215 = scalar_lea.vmem %s3, %s214
      %p216 = scmp.lt.s32.totalorder %s19, 1
      %s217 = scalar_select %p216, %s19, 1
      %s218 = smul.addr %s217, 54
      %s219 = smul.addr %s218, 4
      %s220 = scalar_lea.vmem %s0, %s219
      %p221 = scmp.lt.s32.totalorder %s20, 0
      %s222 = scalar_select %p221, %s20, 0
      %s223 = smul.addr %s222, 4
      %s224 = scalar_lea.vmem %s1, %s223
      %p225 = scmp.lt.s32.totalorder %s20, 0
      %s226 = scalar_select %p225, %s20, 0
      %s227 = scalar_lea.vmem %s2, %s226
      %s228 = smul.u32 8, %s21
      %p229 = scmp.lt.s32.totalorder %s19, 1
      %s230 = scalar_select %p229, %s19, 1
      %p231 = scmp.lt.s32.totalorder %s228, 15
      %s232 = scalar_select %p231, %s228, 15
      %p233 = scmp.lt.s32.totalorder %s20, 0
      %s234 = scalar_select %p233, %s20, 0
      %s235 = smul.addr %s232, 2
      %s236 = sadd.s32 %s234, %s235
      %s237 = smul.addr %s230, 32
      %s238 = sadd.s32 %s236, %s237
      %s239 = smul.addr %s238, 4
      %s240 = scalar_lea.vmem %s3, %s239
      %s241 = smul.u32 8, %s21
      %s243 = smul.u32 %s21, 8
      %s244 = smul.u32 %s243, 3
      %s245 = smul.addr %s244, 4
      %s246 = scalar_lea.vmem %s220, %s245
      %v247 = vld [vmem:[%s246] sm:$0xf]
      %v248 = vld [vmem:[%s246 + $0x4] sm:$0xf]
      %v249 = vld [vmem:[%s246 + $0x8] sm:$0x1]
      %v250 = vld [vmem:[%s246 + $0xc] sm:$0xf]
      %v251 = vld [vmem:[%s246 + $0x10] sm:$0xf]
      %v252 = vld [vmem:[%s246 + $0x14] sm:$0x1]
      %v253 = vld [vmem:[%s246 + $0x18] sm:$0xf]
      %v254 = vld [vmem:[%s246 + $0x1c] sm:$0xf]
      %v255 = vld [vmem:[%s246 + $0x20] sm:$0x1]
      %v256 = vld [vmem:[%s246 + $0x24] sm:$0xf]
      %v257 = vld [vmem:[%s246 + $0x28] sm:$0xf]
      %v258 = vld [vmem:[%s246 + $0x2c] sm:$0x1]
      %v259 = vld [vmem:[%s246 + $0x30] sm:$0xf]
      %v260 = vld [vmem:[%s246 + $0x34] sm:$0xf]
      %v261 = vld [vmem:[%s246 + $0x38] sm:$0x1]
      %v262 = vld [vmem:[%s246 + $0x3c] sm:$0xf]
      %v263 = vld [vmem:[%s246 + $0x40] sm:$0xf]
      %v264 = vld [vmem:[%s246 + $0x44] sm:$0x1]
      %v265 = vld [vmem:[%s246 + $0x48] sm:$0xf]
      %v266 = vld [vmem:[%s246 + $0x4c] sm:$0xf]
      %v267 = vld [vmem:[%s246 + $0x50] sm:$0x1]
      %v268 = vld [vmem:[%s246 + $0x54] sm:$0xf]
      %v269 = vld [vmem:[%s246 + $0x58] sm:$0xf]
      %v270 = vld [vmem:[%s246 + $0x5c] sm:$0x1]
      %v287 = vunpack.c.l.b16 %v247
      %v288 = vunpack.c.l.b16 %v248
      %v289 = vunpack.c.l.b16 %v250
      %v290 = vunpack.c.l.b16 %v251
      %v291 = vunpack.c.l.b16 %v253
      %v292 = vunpack.c.l.b16 %v254
      %v293 = vunpack.c.l.b16 %v256
      %v294 = vunpack.c.l.b16 %v257
      %v295 = vunpack.c.l.b16 %v259
      %v296 = vunpack.c.l.b16 %v260
      %v297 = vunpack.c.l.b16 %v262
      %v298 = vunpack.c.l.b16 %v263
      %v299 = vunpack.c.l.b16 %v265
      %v300 = vunpack.c.l.b16 %v266
      %v301 = vunpack.c.l.b16 %v268
      %v302 = vunpack.c.l.b16 %v269
      %v303 = vpack.c.b16 %v288, %v287
      %v304 = vpack.c.b16 %v290, %v289
      %v305 = vpack.c.b16 %v292, %v291
      %v306 = vpack.c.b16 %v294, %v293
      %v307 = vpack.c.b16 %v296, %v295
      %v308 = vpack.c.b16 %v298, %v297
      %v309 = vpack.c.b16 %v300, %v299
      %v310 = vpack.c.b16 %v302, %v301
      %v327 = vunpack.c.l.b16 %v249
      %v328 = vunpack.c.l.b16 %v252
      %v329 = vunpack.c.l.b16 %v255
      %v330 = vunpack.c.l.b16 %v258
      %v331 = vunpack.c.l.b16 %v261
      %v332 = vunpack.c.l.b16 %v264
      %v333 = vunpack.c.l.b16 %v267
      %v334 = vunpack.c.l.b16 %v270
      %v335 = vpack.c.b16 %v327, %v327
      %v336 = vpack.c.b16 %v328, %v328
      %v337 = vpack.c.b16 %v329, %v329
      %v338 = vpack.c.b16 %v330, %v330
      %v339 = vpack.c.b16 %v331, %v331
      %v340 = vpack.c.b16 %v332, %v332
      %v341 = vpack.c.b16 %v333, %v333
      %v342 = vpack.c.b16 %v334, %v334
      %vm343 = vsmask.f32 7424
      %v345 = vshrl.u32 %v303, 16
      %v347 = vshll.u32 %v303, 16
      %v349 = vrot.slane %v347, 1
      %v350 = vor.u32 %v345, %v349
      %v352 = vshll.u32 %v335, 16
      %v354 = vrot.slane %v352, 1
      %v355 = vsel %vm343, %v350, %v354
      %v357 = vshrl.u32 %v304, 16
      %v359 = vshll.u32 %v304, 16
      %v361 = vrot.slane %v359, 1
      %v362 = vor.u32 %v357, %v361
      %v364 = vshll.u32 %v336, 16
      %v366 = vrot.slane %v364, 1
      %v367 = vsel %vm343, %v362, %v366
      %v369 = vshrl.u32 %v305, 16
      %v371 = vshll.u32 %v305, 16
      %v373 = vrot.slane %v371, 1
      %v374 = vor.u32 %v369, %v373
      %v376 = vshll.u32 %v337, 16
      %v378 = vrot.slane %v376, 1
      %v379 = vsel %vm343, %v374, %v378
      %v381 = vshrl.u32 %v306, 16
      %v383 = vshll.u32 %v306, 16
      %v385 = vrot.slane %v383, 1
      %v386 = vor.u32 %v381, %v385
      %v388 = vshll.u32 %v338, 16
      %v390 = vrot.slane %v388, 1
      %v391 = vsel %vm343, %v386, %v390
      %v393 = vshrl.u32 %v307, 16
      %v395 = vshll.u32 %v307, 16
      %v397 = vrot.slane %v395, 1
      %v398 = vor.u32 %v393, %v397
      %v400 = vshll.u32 %v339, 16
      %v402 = vrot.slane %v400, 1
      %v403 = vsel %vm343, %v398, %v402
      %v405 = vshrl.u32 %v308, 16
      %v407 = vshll.u32 %v308, 16
      %v409 = vrot.slane %v407, 1
      %v410 = vor.u32 %v405, %v409
      %v412 = vshll.u32 %v340, 16
      %v414 = vrot.slane %v412, 1
      %v415 = vsel %vm343, %v410, %v414
      %v417 = vshrl.u32 %v309, 16
      %v419 = vshll.u32 %v309, 16
      %v421 = vrot.slane %v419, 1
      %v422 = vor.u32 %v417, %v421
      %v424 = vshll.u32 %v341, 16
      %v426 = vrot.slane %v424, 1
      %v427 = vsel %vm343, %v422, %v426
      %v429 = vshrl.u32 %v310, 16
      %v431 = vshll.u32 %v310, 16
      %v433 = vrot.slane %v431, 1
      %v434 = vor.u32 %v429, %v433
      %v436 = vshll.u32 %v342, 16
      %v438 = vrot.slane %v436, 1
      %v439 = vsel %vm343, %v434, %v438
      %vm448 = vcmask 1046528
      %v449 = vrot.slane %v303, 1
      %v450 = vrot.slane %v335, 1
      %v451 = vsel %vm448, %v449, %v450
      %v452 = vrot.slane %v304, 1
      %v453 = vrot.slane %v336, 1
      %v454 = vsel %vm448, %v452, %v453
      %v455 = vrot.slane %v305, 1
      %v456 = vrot.slane %v337, 1
      %v457 = vsel %vm448, %v455, %v456
      %v458 = vrot.slane %v306, 1
      %v459 = vrot.slane %v338, 1
      %v460 = vsel %vm448, %v458, %v459
      %v461 = vrot.slane %v307, 1
      %v462 = vrot.slane %v339, 1
      %v463 = vsel %vm448, %v461, %v462
      %v464 = vrot.slane %v308, 1
      %v465 = vrot.slane %v340, 1
      %v466 = vsel %vm448, %v464, %v465
      %v467 = vrot.slane %v309, 1
      %v468 = vrot.slane %v341, 1
      %v469 = vsel %vm448, %v467, %v468
      %v470 = vrot.slane %v310, 1
      %v471 = vrot.slane %v342, 1
      %v472 = vsel %vm448, %v470, %v471
      %v481 = vld [vmem:[%s224] sm:$0xf]
      %v482 = vld [vmem:[%s224 + $0x4] sm:$0xf]
      %v483 = vld [vmem:[%s224 + $0x8] sm:$0xf]
      %v484 = vld [vmem:[%s224 + $0xc] sm:$0xf]
      %v485 = vld [vmem:[%s224 + $0x10] sm:$0xf]
      %v486 = vld [vmem:[%s224 + $0x14] sm:$0xf]
      %v487 = vld [vmem:[%s224 + $0x18] sm:$0xf]
      %v488 = vld [vmem:[%s224 + $0x1c] sm:$0xf]
      %v489 = vld [vmem:[%s224 + $0x20] sm:$0xf]
      %v490 = vld [vmem:[%s224 + $0x24] sm:$0xf]
      %v491 = vld [vmem:[%s224 + $0x28] sm:$0xf]
      %v492 = vld [vmem:[%s224 + $0x2c] sm:$0xf]
      %v493 = vld [vmem:[%s224 + $0x30] sm:$0xf]
      %v494 = vld [vmem:[%s224 + $0x34] sm:$0xf]
      %v495 = vld [vmem:[%s224 + $0x38] sm:$0xf]
      %v496 = vld [vmem:[%s224 + $0x3c] sm:$0xf]
      %v497 = vld [vmem:[%s224 + $0x40] sm:$0xf]
      %v498 = vld [vmem:[%s224 + $0x44] sm:$0xf]
      %v499 = vld [vmem:[%s224 + $0x48] sm:$0xf]
      %v500 = vld [vmem:[%s224 + $0x4c] sm:$0xf]
      %v501 = vld [vmem:[%s224 + $0x50] sm:$0xf]
      %v502 = vld [vmem:[%s224 + $0x54] sm:$0xf]
      %v503 = vld [vmem:[%s224 + $0x58] sm:$0xf]
      %v504 = vld [vmem:[%s224 + $0x5c] sm:$0xf]
      %v505 = vld [vmem:[%s224 + $0x60] sm:$0xf]
      %v506 = vld [vmem:[%s224 + $0x64] sm:$0xf]
      %v507 = vld [vmem:[%s224 + $0x68] sm:$0xf]
      %v508 = vld [vmem:[%s224 + $0x6c] sm:$0xf]
      %v509 = vld [vmem:[%s224 + $0x70] sm:$0xf]
      %v510 = vld [vmem:[%s224 + $0x74] sm:$0xf]
      %v511 = vld [vmem:[%s224 + $0x78] sm:$0xf]
      %v512 = vld [vmem:[%s224 + $0x7c] sm:$0xf]
      %v513 = vld [vmem:[%s224 + $0x80] sm:$0xf]
      %v514 = vld [vmem:[%s224 + $0x84] sm:$0xf]
      %v515 = vld [vmem:[%s224 + $0x88] sm:$0xf]
      %v516 = vld [vmem:[%s224 + $0x8c] sm:$0xf]
      %v517 = vld [vmem:[%s224 + $0x90] sm:$0xf]
      %v518 = vld [vmem:[%s224 + $0x94] sm:$0xf]
      %v519 = vld [vmem:[%s224 + $0x98] sm:$0xf]
      %v520 = vld [vmem:[%s224 + $0x9c] sm:$0xf]
      %v521 = vld [vmem:[%s224 + $0xa0] sm:$0xf]
      %v522 = vld [vmem:[%s224 + $0xa4] sm:$0xf]
      %v523 = vld [vmem:[%s224 + $0xa8] sm:$0xf]
      %v524 = vld [vmem:[%s224 + $0xac] sm:$0xf]
      %v525 = vld [vmem:[%s224 + $0xb0] sm:$0xf]
      %v526 = vld [vmem:[%s224 + $0xb4] sm:$0xf]
      %v527 = vld [vmem:[%s224 + $0xb8] sm:$0xf]
      %v528 = vld [vmem:[%s224 + $0xbc] sm:$0xf]
      %v577 = vunpack.c.l.b16 %v481
      %v578 = vunpack.c.l.b16 %v482
      %v579 = vunpack.c.l.b16 %v483
      %v580 = vunpack.c.l.b16 %v484
      %v581 = vunpack.c.l.b16 %v485
      %v582 = vunpack.c.l.b16 %v486
      %v583 = vunpack.c.l.b16 %v487
      %v584 = vunpack.c.l.b16 %v488
      %v585 = vunpack.c.l.b16 %v489
      %v586 = vunpack.c.l.b16 %v490
      %v587 = vunpack.c.l.b16 %v491
      %v588 = vunpack.c.l.b16 %v492
      %v589 = vunpack.c.l.b16 %v493
      %v590 = vunpack.c.l.b16 %v494
      %v591 = vunpack.c.l.b16 %v495
      %v592 = vunpack.c.l.b16 %v496
      %v593 = vunpack.c.l.b16 %v497
      %v594 = vunpack.c.l.b16 %v498
      %v595 = vunpack.c.l.b16 %v499
      %v596 = vunpack.c.l.b16 %v500
      %v597 = vunpack.c.l.b16 %v501
      %v598 = vunpack.c.l.b16 %v502
      %v599 = vunpack.c.l.b16 %v503
      %v600 = vunpack.c.l.b16 %v504
      %v601 = vunpack.c.l.b16 %v505
      %v602 = vunpack.c.l.b16 %v506
      %v603 = vunpack.c.l.b16 %v507
      %v604 = vunpack.c.l.b16 %v508
      %v605 = vunpack.c.l.b16 %v509
      %v606 = vunpack.c.l.b16 %v510
      %v607 = vunpack.c.l.b16 %v511
      %v608 = vunpack.c.l.b16 %v512
      %v609 = vunpack.c.l.b16 %v513
      %v610 = vunpack.c.l.b16 %v514
      %v611 = vunpack.c.l.b16 %v515
      %v612 = vunpack.c.l.b16 %v516
      %v613 = vunpack.c.l.b16 %v517
      %v614 = vunpack.c.l.b16 %v518
      %v615 = vunpack.c.l.b16 %v519
      %v616 = vunpack.c.l.b16 %v520
      %v617 = vunpack.c.l.b16 %v521
      %v618 = vunpack.c.l.b16 %v522
      %v619 = vunpack.c.l.b16 %v523
      %v620 = vunpack.c.l.b16 %v524
      %v621 = vunpack.c.l.b16 %v525
      %v622 = vunpack.c.l.b16 %v526
      %v623 = vunpack.c.l.b16 %v527
      %v624 = vunpack.c.l.b16 %v528
      %v625 = vpack.c.b16 %v578, %v577
      %v626 = vpack.c.b16 %v580, %v579
      %v627 = vpack.c.b16 %v582, %v581
      %v628 = vpack.c.b16 %v584, %v583
      %v629 = vpack.c.b16 %v586, %v585
      %v630 = vpack.c.b16 %v588, %v587
      %v631 = vpack.c.b16 %v590, %v589
      %v632 = vpack.c.b16 %v592, %v591
      %v633 = vpack.c.b16 %v594, %v593
      %v634 = vpack.c.b16 %v596, %v595
      %v635 = vpack.c.b16 %v598, %v597
      %v636 = vpack.c.b16 %v600, %v599
      %v637 = vpack.c.b16 %v602, %v601
      %v638 = vpack.c.b16 %v604, %v603
      %v639 = vpack.c.b16 %v606, %v605
      %v640 = vpack.c.b16 %v608, %v607
      %v641 = vpack.c.b16 %v610, %v609
      %v642 = vpack.c.b16 %v612, %v611
      %v643 = vpack.c.b16 %v614, %v613
      %v644 = vpack.c.b16 %v616, %v615
      %v645 = vpack.c.b16 %v618, %v617
      %v646 = vpack.c.b16 %v620, %v619
      %v647 = vpack.c.b16 %v622, %v621
      %v648 = vpack.c.b16 %v624, %v623
      %673 = vmatprep.subr.bf16.mxu0 0
      %674 = vmatpush1.bf16.msra.mxu0 %v625
      %675 = vmatprep.subr.bf16.mxu0 0
      %676 = vmatpush1.bf16.msra.mxu0 %v626
      %677 = vmatprep.subr.bf16.mxu0 0
      %678 = vmatpush1.bf16.msra.mxu0 %v627
      %679 = vmatprep.subr.bf16.mxu0 0
      %680 = vmatpush1.bf16.msra.mxu0 %v628
      %681 = vmatprep.subr.bf16.mxu0 0
      %682 = vmatpush1.bf16.msra.mxu0 %v629
      %683 = vmatprep.subr.bf16.mxu0 0
      %684 = vmatpush1.bf16.msra.mxu0 %v630
      %685 = vmatprep.subr.bf16.mxu0 0
      %686 = vmatpush1.bf16.msra.mxu0 %v631
      %687 = vmatprep.subr.bf16.mxu0 0
      %688 = vmatpush1.bf16.msra.mxu0 %v632
      %689 = vmatprep.subr.bf16.mxu0 0
      %690 = vmatpush1.bf16.msra.mxu0 %v633
      %691 = vmatprep.subr.bf16.mxu0 0
      %692 = vmatpush1.bf16.msra.mxu0 %v634
      %693 = vmatprep.subr.bf16.mxu0 0
      %694 = vmatpush1.bf16.msra.mxu0 %v635
      %695 = vmatprep.subr.bf16.mxu0 0
      %696 = vmatpush1.bf16.msra.mxu0 %v636
      %697 = vmatprep.subr.bf16.mxu0 0
      %698 = vmatpush1.bf16.msra.mxu0 %v637
      %699 = vmatprep.subr.bf16.mxu0 0
      %700 = vmatpush1.bf16.msra.mxu0 %v638
      %701 = vmatprep.subr.bf16.mxu0 0
      %702 = vmatpush1.bf16.msra.mxu0 %v639
      %703 = vmatprep.subr.bf16.mxu0 0
      %704 = vmatpush1.bf16.msra.mxu0 %v640
      %705 = vmatprep.mubr.bf16.mxu0 %v355
      %706 = vmatmul.mubr.bf16.gmra.mrb[0].mxu0 %v303
      %v707 = vpop.f32.mrb[0].mxu0
      %v708 = vadd.f32 0.0, %v707
      %v709 = vpop.f32.mrb[0].mxu0
      %v710 = vpop.f32.mrb[0].mxu0
      %v711 = vadd.f32 0.0, %v710
      %v712 = vpop.f32.mrb[0].mxu0
      %713 = vmatprep.mubr.bf16.mxu0 %v367
      %714 = vmatmul.mubr.bf16.gmra.mrb[0].mxu0 %v304
      %v715 = vpop.f32.mrb[0].mxu0
      %v716 = vadd.f32 0.0, %v715
      %v717 = vpop.f32.mrb[0].mxu0
      %v718 = vpop.f32.mrb[0].mxu0
      %v719 = vadd.f32 0.0, %v718
      %v720 = vpop.f32.mrb[0].mxu0
      %721 = vmatprep.mubr.bf16.mxu0 %v379
      %722 = vmatmul.mubr.bf16.gmra.mrb[0].mxu0 %v305
      %v723 = vpop.f32.mrb[0].mxu0
      %v724 = vadd.f32 0.0, %v723
      %v725 = vpop.f32.mrb[0].mxu0
      %v726 = vpop.f32.mrb[0].mxu0
      %v727 = vadd.f32 0.0, %v726
      %v728 = vpop.f32.mrb[0].mxu0
      %729 = vmatprep.mubr.bf16.mxu0 %v391
      %730 = vmatmul.mubr.bf16.gmra.mrb[0].mxu0 %v306
      %v731 = vpop.f32.mrb[0].mxu0
      %v732 = vadd.f32 0.0, %v731
      %v733 = vpop.f32.mrb[0].mxu0
      %v734 = vpop.f32.mrb[0].mxu0
      %v735 = vadd.f32 0.0, %v734
      %v736 = vpop.f32.mrb[0].mxu0
      %737 = vmatprep.mubr.bf16.mxu0 %v403
      %738 = vmatmul.mubr.bf16.gmra.mrb[0].mxu0 %v307
      %v739 = vpop.f32.mrb[0].mxu0
      %v740 = vadd.f32 0.0, %v739
      %v741 = vpop.f32.mrb[0].mxu0
      %v742 = vpop.f32.mrb[0].mxu0
      %v743 = vadd.f32 0.0, %v742
      %v744 = vpop.f32.mrb[0].mxu0
      %745 = vmatprep.mubr.bf16.mxu0 %v415
      %746 = vmatmul.mubr.bf16.gmra.mrb[0].mxu0 %v308
      %v747 = vpop.f32.mrb[0].mxu0
      %v748 = vadd.f32 0.0, %v747
      %v749 = vpop.f32.mrb[0].mxu0
      %v750 = vpop.f32.mrb[0].mxu0
      %v751 = vadd.f32 0.0, %v750
      %v752 = vpop.f32.mrb[0].mxu0
      %753 = vmatprep.mubr.bf16.mxu0 %v427
      %754 = vmatmul.mubr.bf16.gmra.mrb[0].mxu0 %v309
      %v755 = vpop.f32.mrb[0].mxu0
      %v756 = vadd.f32 0.0, %v755
      %v757 = vpop.f32.mrb[0].mxu0
      %v758 = vpop.f32.mrb[0].mxu0
      %v759 = vadd.f32 0.0, %v758
      %v760 = vpop.f32.mrb[0].mxu0
      %761 = vmatprep.mubr.bf16.mxu0 %v439
      %762 = vmatmul.mubr.bf16.gmra.mrb[0].mxu0 %v310
      %v763 = vpop.f32.mrb[0].mxu0
      %v764 = vadd.f32 0.0, %v763
      %v765 = vpop.f32.mrb[0].mxu0
      %v766 = vpop.f32.mrb[0].mxu0
      %v767 = vadd.f32 0.0, %v766
      %v768 = vpop.f32.mrb[0].mxu0
      %769 = vdwg.mxu0
      %770 = vmatprep.subr.bf16.mxu0 0
      %771 = vmatpush1.bf16.msra.mxu0 %v641
      %772 = vmatprep.subr.bf16.mxu0 0
      %773 = vmatpush1.bf16.msra.mxu0 %v642
      %774 = vmatprep.subr.bf16.mxu0 0
      %775 = vmatpush1.bf16.msra.mxu0 %v643
      %776 = vmatprep.subr.bf16.mxu0 0
      %777 = vmatpush1.bf16.msra.mxu0 %v644
      %778 = vmatprep.subr.bf16.mxu0 0
      %779 = vmatpush1.bf16.msra.mxu0 %v645
      %780 = vmatprep.subr.bf16.mxu0 0
      %781 = vmatpush1.bf16.msra.mxu0 %v646
      %782 = vmatprep.subr.bf16.mxu0 0
      %783 = vmatpush1.bf16.msra.mxu0 %v647
      %784 = vmatprep.subr.bf16.mxu0 0
      %785 = vmatpush1.bf16.msra.mxu0 %v648
      %786 = vmatprep.subr.bf16.mxu0 0
      %787 = vmatpush1.bf16.msra.mxu0 0
      %788 = vmatprep.subr.bf16.mxu0 0
      %789 = vmatpush1.bf16.msra.mxu0 0
      %790 = vmatprep.subr.bf16.mxu0 0
      %791 = vmatpush1.bf16.msra.mxu0 0
      %792 = vmatprep.subr.bf16.mxu0 0
      %793 = vmatpush1.bf16.msra.mxu0 0
      %794 = vmatprep.subr.bf16.mxu0 0
      %795 = vmatpush1.bf16.msra.mxu0 0
      %796 = vmatprep.subr.bf16.mxu0 0
      %797 = vmatpush1.bf16.msra.mxu0 0
      %798 = vmatprep.subr.bf16.mxu0 0
      %799 = vmatpush1.bf16.msra.mxu0 0
      %800 = vmatprep.subr.bf16.mxu0 0
      %801 = vmatpush1.bf16.msra.mxu0 0
      %802 = vmatprep.mubr.bf16.mxu0 0
      %803 = vmatmul.mubr.bf16.gmra.mrb[0].mxu0 %v451
      %v804 = vpop.f32.mrb[0].mxu0
      %v805 = vadd.f32 %v708, %v804
      %v806 = vpop.f32.mrb[0].mxu0
      %v807 = vpop.f32.mrb[0].mxu0
      %v808 = vadd.f32 %v711, %v807
      %v809 = vpop.f32.mrb[0].mxu0
      %810 = vmatprep.mubr.bf16.mxu0 0
      %811 = vmatmul.mubr.bf16.gmra.mrb[0].mxu0 %v454
      %v812 = vpop.f32.mrb[0].mxu0
      %v813 = vadd.f32 %v716, %v812
      %v814 = vpop.f32.mrb[0].mxu0
      %v815 = vpop.f32.mrb[0].mxu0
      %v816 = vadd.f32 %v719, %v815
      %v817 = vpop.f32.mrb[0].mxu0
      %818 = vmatprep.mubr.bf16.mxu0 0
      %819 = vmatmul.mubr.bf16.gmra.mrb[0].mxu0 %v457
      %v820 = vpop.f32.mrb[0].mxu0
      %v821 = vadd.f32 %v724, %v820
      %v822 = vpop.f32.mrb[0].mxu0
      %v823 = vpop.f32.mrb[0].mxu0
      %v824 = vadd.f32 %v727, %v823
      %v825 = vpop.f32.mrb[0].mxu0
      %826 = vmatprep.mubr.bf16.mxu0 0
      %827 = vmatmul.mubr.bf16.gmra.mrb[0].mxu0 %v460
      %v828 = vpop.f32.mrb[0].mxu0
      %v829 = vadd.f32 %v732, %v828
      %v830 = vpop.f32.mrb[0].mxu0
      %v831 = vpop.f32.mrb[0].mxu0
      %v832 = vadd.f32 %v735, %v831
      %v833 = vpop.f32.mrb[0].mxu0
      %834 = vmatprep.mubr.bf16.mxu0 0
      %835 = vmatmul.mubr.bf16.gmra.mrb[0].mxu0 %v463
      %v836 = vpop.f32.mrb[0].mxu0
      %v837 = vadd.f32 %v740, %v836
      %v838 = vpop.f32.mrb[0].mxu0
      %v839 = vpop.f32.mrb[0].mxu0
      %v840 = vadd.f32 %v743, %v839
      %v841 = vpop.f32.mrb[0].mxu0
      %842 = vmatprep.mubr.bf16.mxu0 0
      %843 = vmatmul.mubr.bf16.gmra.mrb[0].mxu0 %v466
      %v844 = vpop.f32.mrb[0].mxu0
      %v845 = vadd.f32 %v748, %v844
      %v846 = vpop.f32.mrb[0].mxu0
      %v847 = vpop.f32.mrb[0].mxu0
      %v848 = vadd.f32 %v751, %v847
      %v849 = vpop.f32.mrb[0].mxu0
      %850 = vmatprep.mubr.bf16.mxu0 0
      %851 = vmatmul.mubr.bf16.gmra.mrb[0].mxu0 %v469
      %v852 = vpop.f32.mrb[0].mxu0
      %v853 = vadd.f32 %v756, %v852
      %v854 = vpop.f32.mrb[0].mxu0
      %v855 = vpop.f32.mrb[0].mxu0
      %v856 = vadd.f32 %v759, %v855
      %v857 = vpop.f32.mrb[0].mxu0
      %858 = vmatprep.mubr.bf16.mxu0 0
      %859 = vmatmul.mubr.bf16.gmra.mrb[0].mxu0 %v472
      %v860 = vpop.f32.mrb[0].mxu0
      %v861 = vadd.f32 %v764, %v860
      %v862 = vpop.f32.mrb[0].mxu0
      %v863 = vpop.f32.mrb[0].mxu0
      %v864 = vadd.f32 %v767, %v863
      %v865 = vpop.f32.mrb[0].mxu0
      %866 = vdwg.mxu0
      %867 = vst [vmem:[#allocation2] sm:$0xff] %v805
      %868 = vst [vmem:[#allocation2 + $0x8] sm:$0xff] %v808
      %869 = vst [vmem:[#allocation2 + $0x10] sm:$0xff] %v813
      %870 = vst [vmem:[#allocation2 + $0x18] sm:$0xff] %v816
      %871 = vst [vmem:[#allocation2 + $0x20] sm:$0xff] %v821
      %872 = vst [vmem:[#allocation2 + $0x28] sm:$0xff] %v824
      %873 = vst [vmem:[#allocation2 + $0x30] sm:$0xff] %v829
      %874 = vst [vmem:[#allocation2 + $0x38] sm:$0xff] %v832
      %875 = vst [vmem:[#allocation2 + $0x40] sm:$0xff] %v837
      %876 = vst [vmem:[#allocation2 + $0x48] sm:$0xff] %v840
      %877 = vst [vmem:[#allocation2 + $0x50] sm:$0xff] %v845
      %878 = vst [vmem:[#allocation2 + $0x58] sm:$0xff] %v848
      %879 = vst [vmem:[#allocation2 + $0x60] sm:$0xff] %v853
      %880 = vst [vmem:[#allocation2 + $0x68] sm:$0xff] %v856
      %881 = vst [vmem:[#allocation2 + $0x70] sm:$0xff] %v861
      %882 = vst [vmem:[#allocation2 + $0x78] sm:$0xff] %v864
      %s883 = sadd.s32 %s243, 1
      %s884 = smul.u32 %s883, 3
      %s885 = smul.addr %s884, 4
      %s886 = scalar_lea.vmem %s220, %s885
      %v887 = vld [vmem:[%s886] sm:$0xf]
      %v888 = vld [vmem:[%s886 + $0x4] sm:$0xf]
      %v889 = vld [vmem:[%s886 + $0x8] sm:$0x1]
      %v890 = vld [vmem:[%s886 + $0xc] sm:$0xf]
      %v891 = vld [vmem:[%s886 + $0x10] sm:$0xf]
      %v892 = vld [vmem:[%s886 + $0x14] sm:$0x1]
      %v893 = vld [vmem:[%s886 + $0x18] sm:$0xf]
      %v894 = vld [vmem:[%s886 + $0x1c] sm:$0xf]
      %v895 = vld [vmem:[%s886 + $0x20] sm:$0x1]
      %v896 = vld [vmem:[%s886 + $0x24] sm:$0xf]
      %v897 = vld [vmem:[%s886 + $0x28] sm:$0xf]
      %v898 = vld [vmem:[%s886 + $0x2c] sm:$0x1]
      %v899 = vld [vmem:[%s886 + $0x30] sm:$0xf]
      %v900 = vld [vmem:[%s886 + $0x34] sm:$0xf]
      %v901 = vld [vmem:[%s886 + $0x38] sm:$0x1]
      %v902 = vld [vmem:[%s886 + $0x3c] sm:$0xf]
      %v903 = vld [vmem:[%s886 + $0x40] sm:$0xf]
      %v904 = vld [vmem:[%s886 + $0x44] sm:$0x1]
      %v905 = vld [vmem:[%s886 + $0x48] sm:$0xf]
      %v906 = vld [vmem:[%s886 + $0x4c] sm:$0xf]
      %v907 = vld [vmem:[%s886 + $0x50] sm:$0x1]
      %v908 = vld [vmem:[%s886 + $0x54] sm:$0xf]
      %v909 = vld [vmem:[%s886 + $0x58] sm:$0xf]
      %v910 = vld [vmem:[%s886 + $0x5c] sm:$0x1]
      %v927 = vunpack.c.l.b16 %v887
      %v928 = vunpack.c.l.b16 %v888
      %v929 = vunpack.c.l.b16 %v890
      %v930 = vunpack.c.l.b16 %v891
      %v931 = vunpack.c.l.b16 %v893
      %v932 = vunpack.c.l.b16 %v894
      %v933 = vunpack.c.l.b16 %v896
      %v934 = vunpack.c.l.b16 %v897
      %v935 = vunpack.c.l.b16 %v899
      %v936 = vunpack.c.l.b16 %v900
      %v937 = vunpack.c.l.b16 %v902
      %v938 = vunpack.c.l.b16 %v903
      %v939 = vunpack.c.l.b16 %v905
      %v940 = vunpack.c.l.b16 %v906
      %v941 = vunpack.c.l.b16 %v908
      %v942 = vunpack.c.l.b16 %v909
      %v943 = vpack.c.b16 %v928, %v927
      %v944 = vpack.c.b16 %v930, %v929
      %v945 = vpack.c.b16 %v932, %v931
      %v946 = vpack.c.b16 %v934, %v933
      %v947 = vpack.c.b16 %v936, %v935
      %v948 = vpack.c.b16 %v938, %v937
      %v949 = vpack.c.b16 %v940, %v939
      %v950 = vpack.c.b16 %v942, %v941
      %v967 = vunpack.c.l.b16 %v889
      %v968 = vunpack.c.l.b16 %v892
      %v969 = vunpack.c.l.b16 %v895
      %v970 = vunpack.c.l.b16 %v898
      %v971 = vunpack.c.l.b16 %v901
      %v972 = vunpack.c.l.b16 %v904
      %v973 = vunpack.c.l.b16 %v907
      %v974 = vunpack.c.l.b16 %v910
      %v975 = vpack.c.b16 %v967, %v967
      %v976 = vpack.c.b16 %v968, %v968
      %v977 = vpack.c.b16 %v969, %v969
      %v978 = vpack.c.b16 %v970, %v970
      %v979 = vpack.c.b16 %v971, %v971
      %v980 = vpack.c.b16 %v972, %v972
      %v981 = vpack.c.b16 %v973, %v973
      %v982 = vpack.c.b16 %v974, %v974
      %v984 = vshrl.u32 %v943, 16
      %v986 = vshll.u32 %v943, 16
      %v988 = vrot.slane %v986, 1
      %v989 = vor.u32 %v984, %v988
      %v991 = vshll.u32 %v975, 16
      %v993 = vrot.slane %v991, 1
      %v994 = vsel %vm343, %v989, %v993
      %v996 = vshrl.u32 %v944, 16
      %v998 = vshll.u32 %v944, 16
      %v1000 = vrot.slane %v998, 1
      %v1001 = vor.u32 %v996, %v1000
      %v1003 = vshll.u32 %v976, 16
      %v1005 = vrot.slane %v1003, 1
      %v1006 = vsel %vm343, %v1001, %v1005
      %v1008 = vshrl.u32 %v945, 16
      %v1010 = vshll.u32 %v945, 16
      %v1012 = vrot.slane %v1010, 1
      %v1013 = vor.u32 %v1008, %v1012
      %v1015 = vshll.u32 %v977, 16
      %v1017 = vrot.slane %v1015, 1
      %v1018 = vsel %vm343, %v1013, %v1017
      %v1020 = vshrl.u32 %v946, 16
      %v1022 = vshll.u32 %v946, 16
      %v1024 = vrot.slane %v1022, 1
      %v1025 = vor.u32 %v1020, %v1024
      %v1027 = vshll.u32 %v978, 16
      %v1029 = vrot.slane %v1027, 1
      %v1030 = vsel %vm343, %v1025, %v1029
      %v1032 = vshrl.u32 %v947, 16
      %v1034 = vshll.u32 %v947, 16
      %v1036 = vrot.slane %v1034, 1
      %v1037 = vor.u32 %v1032, %v1036
      %v1039 = vshll.u32 %v979, 16
      %v1041 = vrot.slane %v1039, 1
      %v1042 = vsel %vm343, %v1037, %v1041
      %v1044 = vshrl.u32 %v948, 16
      %v1046 = vshll.u32 %v948, 16
      %v1048 = vrot.slane %v1046, 1
      %v1049 = vor.u32 %v1044, %v1048
      %v1051 = vshll.u32 %v980, 16
      %v1053 = vrot.slane %v1051, 1
      %v1054 = vsel %vm343, %v1049, %v1053
      %v1056 = vshrl.u32 %v949, 16
      %v1058 = vshll.u32 %v949, 16
      %v1060 = vrot.slane %v1058, 1
      %v1061 = vor.u32 %v1056, %v1060
      %v1063 = vshll.u32 %v981, 16
      %v1065 = vrot.slane %v1063, 1
      %v1066 = vsel %vm343, %v1061, %v1065
      %v1068 = vshrl.u32 %v950, 16
      %v1070 = vshll.u32 %v950, 16
      %v1072 = vrot.slane %v1070, 1
      %v1073 = vor.u32 %v1068, %v1072
      %v1075 = vshll.u32 %v982, 16
      %v1077 = vrot.slane %v1075, 1
      %v1078 = vsel %vm343, %v1073, %v1077
      %v1087 = vrot.slane %v943, 1
      %v1088 = vrot.slane %v975, 1
      %v1089 = vsel %vm448, %v1087, %v1088
      %v1090 = vrot.slane %v944, 1
      %v1091 = vrot.slane %v976, 1
      %v1092 = vsel %vm448, %v1090, %v1091
      %v1093 = vrot.slane %v945, 1
      %v1094 = vrot.slane %v977, 1
      %v1095 = vsel %vm448, %v1093, %v1094
      %v1096 = vrot.slane %v946, 1
      %v1097 = vrot.slane %v978, 1
      %v1098 = vsel %vm448, %v1096, %v1097
      %v1099 = vrot.slane %v947, 1
      %v1100 = vrot.slane %v979, 1
      %v1101 = vsel %vm448, %v1099, %v1100
      %v1102 = vrot.slane %v948, 1
      %v1103 = vrot.slane %v980, 1
      %v1104 = vsel %vm448, %v1102, %v1103
      %v1105 = vrot.slane %v949, 1
      %v1106 = vrot.slane %v981, 1
      %v1107 = vsel %vm448, %v1105, %v1106
      %v1108 = vrot.slane %v950, 1
      %v1109 = vrot.slane %v982, 1
      %v1110 = vsel %vm448, %v1108, %v1109
      %s1119 = scalar_lea.vmem %s224, 192
      %v1120 = vld [vmem:[%s1119] sm:$0xf]
      %v1121 = vld [vmem:[%s1119 + $0x4] sm:$0xf]
      %v1122 = vld [vmem:[%s1119 + $0x8] sm:$0xf]
      %v1123 = vld [vmem:[%s1119 + $0xc] sm:$0xf]
      %v1124 = vld [vmem:[%s1119 + $0x10] sm:$0xf]
      %v1125 = vld [vmem:[%s1119 + $0x14] sm:$0xf]
      %v1126 = vld [vmem:[%s1119 + $0x18] sm:$0xf]
      %v1127 = vld [vmem:[%s1119 + $0x1c] sm:$0xf]
      %v1128 = vld [vmem:[%s1119 + $0x20] sm:$0xf]
      %v1129 = vld [vmem:[%s1119 + $0x24] sm:$0xf]
      %v1130 = vld [vmem:[%s1119 + $0x28] sm:$0xf]
      %v1131 = vld [vmem:[%s1119 + $0x2c] sm:$0xf]
      %v1132 = vld [vmem:[%s1119 + $0x30] sm:$0xf]
      %v1133 = vld [vmem:[%s1119 + $0x34] sm:$0xf]
      %v1134 = vld [vmem:[%s1119 + $0x38] sm:$0xf]
      %v1135 = vld [vmem:[%s1119 + $0x3c] sm:$0xf]
      %v1136 = vld [vmem:[%s1119 + $0x40] sm:$0xf]
      %v1137 = vld [vmem:[%s1119 + $0x44] sm:$0xf]
      %v1138 = vld [vmem:[%s1119 + $0x48] sm:$0xf]
      %v1139 = vld [vmem:[%s1119 + $0x4c] sm:$0xf]
      %v1140 = vld [vmem:[%s1119 + $0x50] sm:$0xf]
      %v1141 = vld [vmem:[%s1119 + $0x54] sm:$0xf]
      %v1142 = vld [vmem:[%s1119 + $0x58] sm:$0xf]
      %v1143 = vld [vmem:[%s1119 + $0x5c] sm:$0xf]
      %v1144 = vld [vmem:[%s1119 + $0x60] sm:$0xf]
      %v1145 = vld [vmem:[%s1119 + $0x64] sm:$0xf]
      %v1146 = vld [vmem:[%s1119 + $0x68] sm:$0xf]
      %v1147 = vld [vmem:[%s1119 + $0x6c] sm:$0xf]
      %v1148 = vld [vmem:[%s1119 + $0x70] sm:$0xf]
      %v1149 = vld [vmem:[%s1119 + $0x74] sm:$0xf]
      %v1150 = vld [vmem:[%s1119 + $0x78] sm:$0xf]
      %v1151 = vld [vmem:[%s1119 + $0x7c] sm:$0xf]
      %v1152 = vld [vmem:[%s1119 + $0x80] sm:$0xf]
      %v1153 = vld [vmem:[%s1119 + $0x84] sm:$0xf]
      %v1154 = vld [vmem:[%s1119 + $0x88] sm:$0xf]
      %v1155 = vld [vmem:[%s1119 + $0x8c] sm:$0xf]
      %v1156 = vld [vmem:[%s1119 + $0x90] sm:$0xf]
      %v1157 = vld [vmem:[%s1119 + $0x94] sm:$0xf]
      %v1158 = vld [vmem:[%s1119 + $0x98] sm:$0xf]
      %v1159 = vld [vmem:[%s1119 + $0x9c] sm:$0xf]
      %v1160 = vld [vmem:[%s1119 + $0xa0] sm:$0xf]
      %v1161 = vld [vmem:[%s1119 + $0xa4] sm:$0xf]
      %v1162 = vld [vmem:[%s1119 + $0xa8] sm:$0xf]
      %v1163 = vld [vmem:[%s1119 + $0xac] sm:$0xf]
      %v1164 = vld [vmem:[%s1119 + $0xb0] sm:$0xf]
      %v1165 = vld [vmem:[%s1119 + $0xb4] sm:$0xf]
      %v1166 = vld [vmem:[%s1119 + $0xb8] sm:$0xf]
      %v1167 = vld [vmem:[%s1119 + $0xbc] sm:$0xf]
      %v1216 = vunpack.c.l.b16 %v1120
      %v1217 = vunpack.c.l.b16 %v1121
      %v1218 = vunpack.c.l.b16 %v1122
      %v1219 = vunpack.c.l.b16 %v1123
      %v1220 = vunpack.c.l.b16 %v1124
      %v1221 = vunpack.c.l.b16 %v1125
      %v1222 = vunpack.c.l.b16 %v1126
      %v1223 = vunpack.c.l.b16 %v1127
      %v1224 = vunpack.c.l.b16 %v1128
      %v1225 = vunpack.c.l.b16 %v1129
      %v1226 = vunpack.c.l.b16 %v1130
      %v1227 = vunpack.c.l.b16 %v1131
      %v1228 = vunpack.c.l.b16 %v1132
      %v1229 = vunpack.c.l.b16 %v1133
      %v1230 = vunpack.c.l.b16 %v1134
      %v1231 = vunpack.c.l.b16 %v1135
      %v1232 = vunpack.c.l.b16 %v1136
      %v1233 = vunpack.c.l.b16 %v1137
      %v1234 = vunpack.c.l.b16 %v1138
      %v1235 = vunpack.c.l.b16 %v1139
      %v1236 = vunpack.c.l.b16 %v1140
      %v1237 = vunpack.c.l.b16 %v1141
      %v1238 = vunpack.c.l.b16 %v1142
      %v1239 = vunpack.c.l.b16 %v1143
      %v1240 = vunpack.c.l.b16 %v1144
      %v1241 = vunpack.c.l.b16 %v1145
      %v1242 = vunpack.c.l.b16 %v1146
      %v1243 = vunpack.c.l.b16 %v1147
      %v1244 = vunpack.c.l.b16 %v1148
      %v1245 = vunpack.c.l.b16 %v1149
      %v1246 = vunpack.c.l.b16 %v1150
      %v1247 = vunpack.c.l.b16 %v1151
      %v1248 = vunpack.c.l.b16 %v1152
      %v1249 = vunpack.c.l.b16 %v1153
      %v1250 = vunpack.c.l.b16 %v1154
      %v1251 = vunpack.c.l.b16 %v1155
      %v1252 = vunpack.c.l.b16 %v1156
      %v1253 = vunpack.c.l.b16 %v1157
      %v1254 = vunpack.c.l.b16 %v1158
      %v1255 = vunpack.c.l.b16 %v1159
      %v1256 = vunpack.c.l.b16 %v1160
      %v1257 = vunpack.c.l.b16 %v1161
      %v1258 = vunpack.c.l.b16 %v1162
      %v1259 = vunpack.c.l.b16 %v1163
      %v1260 = vunpack.c.l.b16 %v1164
      %v1261 = vunpack.c.l.b16 %v1165
      %v1262 = vunpack.c.l.b16 %v1166
      %v1263 = vunpack.c.l.b16 %v1167
      %v1264 = vpack.c.b16 %v1217, %v1216
      %v1265 = vpack.c.b16 %v1219, %v1218
      %v1266 = vpack.c.b16 %v1221, %v1220
      %v1267 = vpack.c.b16 %v1223, %v1222
      %v1268 = vpack.c.b16 %v1225, %v1224
      %v1269 = vpack.c.b16 %v1227, %v1226
      %v1270 = vpack.c.b16 %v1229, %v1228
      %v1271 = vpack.c.b16 %v1231, %v1230
      %v1272 = vpack.c.b16 %v1233, %v1232
      %v1273 = vpack.c.b16 %v1235, %v1234
      %v1274 = vpack.c.b16 %v1237, %v1236
      %v1275 = vpack.c.b16 %v1239, %v1238
      %v1276 = vpack.c.b16 %v1241, %v1240
      %v1277 = vpack.c.b16 %v1243, %v1242
      %v1278 = vpack.c.b16 %v1245, %v1244
      %v1279 = vpack.c.b16 %v1247, %v1246
      %v1280 = vpack.c.b16 %v1249, %v1248
      %v1281 = vpack.c.b16 %v1251, %v1250
      %v1282 = vpack.c.b16 %v1253, %v1252
      %v1283 = vpack.c.b16 %v1255, %v1254
      %v1284 = vpack.c.b16 %v1257, %v1256
      %v1285 = vpack.c.b16 %v1259, %v1258
      %v1286 = vpack.c.b16 %v1261, %v1260
      %v1287 = vpack.c.b16 %v1263, %v1262
      %1312 = vmatprep.subr.bf16.mxu0 0
      %1313 = vmatpush1.bf16.msra.mxu0 %v1264
      %1314 = vmatprep.subr.bf16.mxu0 0
      %1315 = vmatpush1.bf16.msra.mxu0 %v1265
      %1316 = vmatprep.subr.bf16.mxu0 0
      %1317 = vmatpush1.bf16.msra.mxu0 %v1266
      %1318 = vmatprep.subr.bf16.mxu0 0
      %1319 = vmatpush1.bf16.msra.mxu0 %v1267
      %1320 = vmatprep.subr.bf16.mxu0 0
      %1321 = vmatpush1.bf16.msra.mxu0 %v1268
      %1322 = vmatprep.subr.bf16.mxu0 0
      %1323 = vmatpush1.bf16.msra.mxu0 %v1269
      %1324 = vmatprep.subr.bf16.mxu0 0
      %1325 = vmatpush1.bf16.msra.mxu0 %v1270
      %1326 = vmatprep.subr.bf16.mxu0 0
      %1327 = vmatpush1.bf16.msra.mxu0 %v1271
      %1328 = vmatprep.subr.bf16.mxu0 0
      %1329 = vmatpush1.bf16.msra.mxu0 %v1272
      %1330 = vmatprep.subr.bf16.mxu0 0
      %1331 = vmatpush1.bf16.msra.mxu0 %v1273
      %1332 = vmatprep.subr.bf16.mxu0 0
      %1333 = vmatpush1.bf16.msra.mxu0 %v1274
      %1334 = vmatprep.subr.bf16.mxu0 0
      %1335 = vmatpush1.bf16.msra.mxu0 %v1275
      %1336 = vmatprep.subr.bf16.mxu0 0
      %1337 = vmatpush1.bf16.msra.mxu0 %v1276
      %1338 = vmatprep.subr.bf16.mxu0 0
      %1339 = vmatpush1.bf16.msra.mxu0 %v1277
      %1340 = vmatprep.subr.bf16.mxu0 0
      %1341 = vmatpush1.bf16.msra.mxu0 %v1278
      %1342 = vmatprep.subr.bf16.mxu0 0
      %1343 = vmatpush1.bf16.msra.mxu0 %v1279
      %1344 = vmatprep.mubr.bf16.mxu0 %v994
      %1345 = vmatmul.mubr.bf16.gmra.mrb[0].mxu0 %v943
      %v1346 = vpop.f32.mrb[0].mxu0
      %v1347 = vadd.f32 0.0, %v1346
      %v1348 = vpop.f32.mrb[0].mxu0
      %v1349 = vpop.f32.mrb[0].mxu0
      %v1350 = vadd.f32 0.0, %v1349
      %v1351 = vpop.f32.mrb[0].mxu0
      %1352 = vmatprep.mubr.bf16.mxu0 %v1006
      %1353 = vmatmul.mubr.bf16.gmra.mrb[0].mxu0 %v944
      %v1354 = vpop.f32.mrb[0].mxu0
      %v1355 = vadd.f32 0.0, %v1354
      %v1356 = vpop.f32.mrb[0].mxu0
      %v1357 = vpop.f32.mrb[0].mxu0
      %v1358 = vadd.f32 0.0, %v1357
      %v1359 = vpop.f32.mrb[0].mxu0
      %1360 = vmatprep.mubr.bf16.mxu0 %v1018
      %1361 = vmatmul.mubr.bf16.gmra.mrb[0].mxu0 %v945
      %v1362 = vpop.f32.mrb[0].mxu0
      %v1363 = vadd.f32 0.0, %v1362
      %v1364 = vpop.f32.mrb[0].mxu0
      %v1365 = vpop.f32.mrb[0].mxu0
      %v1366 = vadd.f32 0.0, %v1365
      %v1367 = vpop.f32.mrb[0].mxu0
      %1368 = vmatprep.mubr.bf16.mxu0 %v1030
      %1369 = vmatmul.mubr.bf16.gmra.mrb[0].mxu0 %v946
      %v1370 = vpop.f32.mrb[0].mxu0
      %v1371 = vadd.f32 0.0, %v1370
      %v1372 = vpop.f32.mrb[0].mxu0
      %v1373 = vpop.f32.mrb[0].mxu0
      %v1374 = vadd.f32 0.0, %v1373
      %v1375 = vpop.f32.mrb[0].mxu0
      %1376 = vmatprep.mubr.bf16.mxu0 %v1042
      %1377 = vmatmul.mubr.bf16.gmra.mrb[0].mxu0 %v947
      %v1378 = vpop.f32.mrb[0].mxu0
      %v1379 = vadd.f32 0.0, %v1378
      %v1380 = vpop.f32.mrb[0].mxu0
      %v1381 = vpop.f32.mrb[0].mxu0
      %v1382 = vadd.f32 0.0, %v1381
      %v1383 = vpop.f32.mrb[0].mxu0
      %1384 = vmatprep.mubr.bf16.mxu0 %v1054
      %1385 = vmatmul.mubr.bf16.gmra.mrb[0].mxu0 %v948
      %v1386 = vpop.f32.mrb[0].mxu0
      %v1387 = vadd.f32 0.0, %v1386
      %v1388 = vpop.f32.mrb[0].mxu0
      %v1389 = vpop.f32.mrb[0].mxu0
      %v1390 = vadd.f32 0.0, %v1389
      %v1391 = vpop.f32.mrb[0].mxu0
      %1392 = vmatprep.mubr.bf16.mxu0 %v1066
      %1393 = vmatmul.mubr.bf16.gmra.mrb[0].mxu0 %v949
      %v1394 = vpop.f32.mrb[0].mxu0
      %v1395 = vadd.f32 0.0, %v1394
      %v1396 = vpop.f32.mrb[0].mxu0
      %v1397 = vpop.f32.mrb[0].mxu0
      %v1398 = vadd.f32 0.0, %v1397
      %v1399 = vpop.f32.mrb[0].mxu0
      %1400 = vmatprep.mubr.bf16.mxu0 %v1078
      %1401 = vmatmul.mubr.bf16.gmra.mrb[0].mxu0 %v950
      %v1402 = vpop.f32.mrb[0].mxu0
      %v1403 = vadd.f32 0.0, %v1402
      %v1404 = vpop.f32.mrb[0].mxu0
      %v1405 = vpop.f32.mrb[0].mxu0
      %v1406 = vadd.f32 0.0, %v1405
      %v1407 = vpop.f32.mrb[0].mxu0
      %1408 = vdwg.mxu0
      %1409 = vmatprep.subr.bf16.mxu0 0
      %1410 = vmatpush1.bf16.msra.mxu0 %v1280
      %1411 = vmatprep.subr.bf16.mxu0 0
      %1412 = vmatpush1.bf16.msra.mxu0 %v1281
      %1413 = vmatprep.subr.bf16.mxu0 0
      %1414 = vmatpush1.bf16.msra.mxu0 %v1282
      %1415 = vmatprep.subr.bf16.mxu0 0
      %1416 = vmatpush1.bf16.msra.mxu0 %v1283
      %1417 = vmatprep.subr.bf16.mxu0 0
      %1418 = vmatpush1.bf16.msra.mxu0 %v1284
      %1419 = vmatprep.subr.bf16.mxu0 0
      %1420 = vmatpush1.bf16.msra.mxu0 %v1285
      %1421 = vmatprep.subr.bf16.mxu0 0
      %1422 = vmatpush1.bf16.msra.mxu0 %v1286
      %1423 = vmatprep.subr.bf16.mxu0 0
      %1424 = vmatpush1.bf16.msra.mxu0 %v1287
      %1425 = vmatprep.subr.bf16.mxu0 0
      %1426 = vmatpush1.bf16.msra.mxu0 0
      %1427 = vmatprep.subr.bf16.mxu0 0
      %1428 = vmatpush1.bf16.msra.mxu0 0
      %1429 = vmatprep.subr.bf16.mxu0 0
      %1430 = vmatpush1.bf16.msra.mxu0 0
      %1431 = vmatprep.subr.bf16.mxu0 0
      %1432 = vmatpush1.bf16.msra.mxu0 0
      %1433 = vmatprep.subr.bf16.mxu0 0
      %1434 = vmatpush1.bf16.msra.mxu0 0
      %1435 = vmatprep.subr.bf16.mxu0 0
      %1436 = vmatpush1.bf16.msra.mxu0 0
      %1437 = vmatprep.subr.bf16.mxu0 0
      %1438 = vmatpush1.bf16.msra.mxu0 0
      %1439 = vmatprep.subr.bf16.mxu0 0
      %1440 = vmatpush1.bf16.msra.mxu0 0
      %1441 = vmatprep.mubr.bf16.mxu0 0
      %1442 = vmatmul.mubr.bf16.gmra.mrb[0].mxu0 %v1089
      %v1443 = vpop.f32.mrb[0].mxu0
      %v1444 = vadd.f32 %v1347, %v1443
      %v1445 = vpop.f32.mrb[0].mxu0
      %v1446 = vpop.f32.mrb[0].mxu0
      %v1447 = vadd.f32 %v1350, %v1446
      %v1448 = vpop.f32.mrb[0].mxu0
      %1449 = vmatprep.mubr.bf16.mxu0 0
      %1450 = vmatmul.mubr.bf16.gmra.mrb[0].mxu0 %v1092
      %v1451 = vpop.f32.mrb[0].mxu0
      %v1452 = vadd.f32 %v1355, %v1451
      %v1453 = vpop.f32.mrb[0].mxu0
      %v1454 = vpop.f32.mrb[0].mxu0
      %v1455 = vadd.f32 %v1358, %v1454
      %v1456 = vpop.f32.mrb[0].mxu0
      %1457 = vmatprep.mubr.bf16.mxu0 0
      %1458 = vmatmul.mubr.bf16.gmra.mrb[0].mxu0 %v1095
      %v1459 = vpop.f32.mrb[0].mxu0
      %v1460 = vadd.f32 %v1363, %v1459
      %v1461 = vpop.f32.mrb[0].mxu0
      %v1462 = vpop.f32.mrb[0].mxu0
      %v1463 = vadd.f32 %v1366, %v1462
      %v1464 = vpop.f32.mrb[0].mxu0
      %1465 = vmatprep.mubr.bf16.mxu0 0
      %1466 = vmatmul.mubr.bf16.gmra.mrb[0].mxu0 %v1098
      %v1467 = vpop.f32.mrb[0].mxu0
      %v1468 = vadd.f32 %v1371, %v1467
      %v1469 = vpop.f32.mrb[0].mxu0
      %v1470 = vpop.f32.mrb[0].mxu0
      %v1471 = vadd.f32 %v1374, %v1470
      %v1472 = vpop.f32.mrb[0].mxu0
      %1473 = vmatprep.mubr.bf16.mxu0 0
      %1474 = vmatmul.mubr.bf16.gmra.mrb[0].mxu0 %v1101
      %v1475 = vpop.f32.mrb[0].mxu0
      %v1476 = vadd.f32 %v1379, %v1475
      %v1477 = vpop.f32.mrb[0].mxu0
      %v1478 = vpop.f32.mrb[0].mxu0
      %v1479 = vadd.f32 %v1382, %v1478
      %v1480 = vpop.f32.mrb[0].mxu0
      %1481 = vmatprep.mubr.bf16.mxu0 0
      %1482 = vmatmul.mubr.bf16.gmra.mrb[0].mxu0 %v1104
      %v1483 = vpop.f32.mrb[0].mxu0
      %v1484 = vadd.f32 %v1387, %v1483
      %v1485 = vpop.f32.mrb[0].mxu0
      %v1486 = vpop.f32.mrb[0].mxu0
      %v1487 = vadd.f32 %v1390, %v1486
      %v1488 = vpop.f32.mrb[0].mxu0
      %1489 = vmatprep.mubr.bf16.mxu0 0
      %1490 = vmatmul.mubr.bf16.gmra.mrb[0].mxu0 %v1107
      %v1491 = vpop.f32.mrb[0].mxu0
      %v1492 = vadd.f32 %v1395, %v1491
      %v1493 = vpop.f32.mrb[0].mxu0
      %v1494 = vpop.f32.mrb[0].mxu0
      %v1495 = vadd.f32 %v1398, %v1494
      %v1496 = vpop.f32.mrb[0].mxu0
      %1497 = vmatprep.mubr.bf16.mxu0 0
      %1498 = vmatmul.mubr.bf16.gmra.mrb[0].mxu0 %v1110
      %v1499 = vpop.f32.mrb[0].mxu0
      %v1500 = vadd.f32 %v1403, %v1499
      %v1501 = vpop.f32.mrb[0].mxu0
      %v1502 = vpop.f32.mrb[0].mxu0
      %v1503 = vadd.f32 %v1406, %v1502
      %v1504 = vpop.f32.mrb[0].mxu0
      %1505 = vdwg.mxu0
      %v1506 = vld [vmem:[#allocation2] sm:$0xff]
      %v1507 = vld [vmem:[#allocation2 + $0x8] sm:$0xff]
      %v1508 = vld [vmem:[#allocation2 + $0x10] sm:$0xff]
      %v1509 = vld [vmem:[#allocation2 + $0x18] sm:$0xff]
      %v1510 = vld [vmem:[#allocation2 + $0x20] sm:$0xff]
      %v1511 = vld [vmem:[#allocation2 + $0x28] sm:$0xff]
      %v1512 = vld [vmem:[#allocation2 + $0x30] sm:$0xff]
      %v1513 = vld [vmem:[#allocation2 + $0x38] sm:$0xff]
      %v1514 = vld [vmem:[#allocation2 + $0x40] sm:$0xff]
      %v1515 = vld [vmem:[#allocation2 + $0x48] sm:$0xff]
      %v1516 = vld [vmem:[#allocation2 + $0x50] sm:$0xff]
      %v1517 = vld [vmem:[#allocation2 + $0x58] sm:$0xff]
      %v1518 = vld [vmem:[#allocation2 + $0x60] sm:$0xff]
      %v1519 = vld [vmem:[#allocation2 + $0x68] sm:$0xff]
      %v1520 = vld [vmem:[#allocation2 + $0x70] sm:$0xff]
      %v1521 = vld [vmem:[#allocation2 + $0x78] sm:$0xff]
      %v1522 = vadd.f32 %v1506, %v1444
      %v1523 = vadd.f32 %v1507, %v1447
      %v1524 = vadd.f32 %v1508, %v1452
      %v1525 = vadd.f32 %v1509, %v1455
      %v1526 = vadd.f32 %v1510, %v1460
      %v1527 = vadd.f32 %v1511, %v1463
      %v1528 = vadd.f32 %v1512, %v1468
      %v1529 = vadd.f32 %v1513, %v1471
      %v1530 = vadd.f32 %v1514, %v1476
      %v1531 = vadd.f32 %v1515, %v1479
      %v1532 = vadd.f32 %v1516, %v1484
      %v1533 = vadd.f32 %v1517, %v1487
      %v1534 = vadd.f32 %v1518, %v1492
      %v1535 = vadd.f32 %v1519, %v1495
      %v1536 = vadd.f32 %v1520, %v1500
      %v1537 = vadd.f32 %v1521, %v1503
      %1538 = vst [vmem:[#allocation2] sm:$0xff] %v1522
      %1539 = vst [vmem:[#allocation2 + $0x8] sm:$0xff] %v1523
      %1540 = vst [vmem:[#allocation2 + $0x10] sm:$0xff] %v1524
      %1541 = vst [vmem:[#allocation2 + $0x18] sm:$0xff] %v1525
      %1542 = vst [vmem:[#allocation2 + $0x20] sm:$0xff] %v1526
      %1543 = vst [vmem:[#allocation2 + $0x28] sm:$0xff] %v1527
      %1544 = vst [vmem:[#allocation2 + $0x30] sm:$0xff] %v1528
      %1545 = vst [vmem:[#allocation2 + $0x38] sm:$0xff] %v1529
      %1546 = vst [vmem:[#allocation2 + $0x40] sm:$0xff] %v1530
      %1547 = vst [vmem:[#allocation2 + $0x48] sm:$0xff] %v1531
      %1548 = vst [vmem:[#allocation2 + $0x50] sm:$0xff] %v1532
      %1549 = vst [vmem:[#allocation2 + $0x58] sm:$0xff] %v1533
      %1550 = vst [vmem:[#allocation2 + $0x60] sm:$0xff] %v1534
      %1551 = vst [vmem:[#allocation2 + $0x68] sm:$0xff] %v1535
      %1552 = vst [vmem:[#allocation2 + $0x70] sm:$0xff] %v1536
      %1553 = vst [vmem:[#allocation2 + $0x78] sm:$0xff] %v1537
      %s1554 = sadd.s32 %s243, 2
      %s1555 = smul.u32 %s1554, 3
      %s1556 = smul.addr %s1555, 4
      %s1557 = scalar_lea.vmem %s220, %s1556
      %v1558 = vld [vmem:[%s1557] sm:$0xf]
      %v1559 = vld [vmem:[%s1557 + $0x4] sm:$0xf]
      %v1560 = vld [vmem:[%s1557 + $0x8] sm:$0x1]
      %v1561 = vld [vmem:[%s1557 + $0xc] sm:$0xf]
      %v1562 = vld [vmem:[%s1557 + $0x10] sm:$0xf]
      %v1563 = vld [vmem:[%s1557 + $0x14] sm:$0x1]
      %v1564 = vld [vmem:[%s1557 + $0x18] sm:$0xf]
      %v1565 = vld [vmem:[%s1557 + $0x1c] sm:$0xf]
      %v1566 = vld [vmem:[%s1557 + $0x20] sm:$0x1]
      %v1567 = vld [vmem:[%s1557 + $0x24] sm:$0xf]
      %v1568 = vld [vmem:[%s1557 + $0x28] sm:$0xf]
      %v1569 = vld [vmem:[%s1557 + $0x2c] sm:$0x1]
      %v1570 = vld [vmem:[%s1557 + $0x30] sm:$0xf]
      %v1571 = vld [vmem:[%s1557 + $0x34] sm:$0xf]
      %v1572 = vld [vmem:[%s1557 + $0x38] sm:$0x1]
      %v1573 = vld [vmem:[%s1557 + $0x3c] sm:$0xf]
      %v1574 = vld [vmem:[%s1557 + $0x40] sm:$0xf]
      %v1575 = vld [vmem:[%s1557 + $0x44] sm:$0x1]
      %v1576 = vld [vmem:[%s1557 + $0x48] sm:$0xf]
      %v1577 = vld [vmem:[%s1557 + $0x4c] sm:$0xf]
      %v1578 = vld [vmem:[%s1557 + $0x50] sm:$0x1]
      %v1579 = vld [vmem:[%s1557 + $0x54] sm:$0xf]
      %v1580 = vld [vmem:[%s1557 + $0x58] sm:$0xf]
      %v1581 = vld [vmem:[%s1557 + $0x5c] sm:$0x1]
      %v1598 = vunpack.c.l.b16 %v1558
      %v1599 = vunpack.c.l.b16 %v1559
      %v1600 = vunpack.c.l.b16 %v1561
      %v1601 = vunpack.c.l.b16 %v1562
      %v1602 = vunpack.c.l.b16 %v1564
      %v1603 = vunpack.c.l.b16 %v1565
      %v1604 = vunpack.c.l.b16 %v1567
      %v1605 = vunpack.c.l.b16 %v1568
      %v1606 = vunpack.c.l.b16 %v1570
      %v1607 = vunpack.c.l.b16 %v1571
      %v1608 = vunpack.c.l.b16 %v1573
      %v1609 = vunpack.c.l.b16 %v1574
      %v1610 = vunpack.c.l.b16 %v1576
      %v1611 = vunpack.c.l.b16 %v1577
      %v1612 = vunpack.c.l.b16 %v1579
      %v1613 = vunpack.c.l.b16 %v1580
      %v1614 = vpack.c.b16 %v1599, %v1598
      %v1615 = vpack.c.b16 %v1601, %v1600
      %v1616 = vpack.c.b16 %v1603, %v1602
      %v1617 = vpack.c.b16 %v1605, %v1604
      %v1618 = vpack.c.b16 %v1607, %v1606
      %v1619 = vpack.c.b16 %v1609, %v1608
      %v1620 = vpack.c.b16 %v1611, %v1610
      %v1621 = vpack.c.b16 %v1613, %v1612
      %v1638 = vunpack.c.l.b16 %v1560
      %v1639 = vunpack.c.l.b16 %v1563
      %v1640 = vunpack.c.l.b16 %v1566
      %v1641 = vunpack.c.l.b16 %v1569
      %v1642 = vunpack.c.l.b16 %v1572
      %v1643 = vunpack.c.l.b16 %v1575
      %v1644 = vunpack.c.l.b16 %v1578
      %v1645 = vunpack.c.l.b16 %v1581
      %v1646 = vpack.c.b16 %v1638, %v1638
      %v1647 = vpack.c.b16 %v1639, %v1639
      %v1648 = vpack.c.b16 %v1640, %v1640
      %v1649 = vpack.c.b16 %v1641, %v1641
      %v1650 = vpack.c.b16 %v1642, %v1642
      %v1651 = vpack.c.b16 %v1643, %v1643
      %v1652 = vpack.c.b16 %v1644, %v1644
      %v1653 = vpack.c.b16 %v1645, %v1645
      %v1655 = vshrl.u32 %v1614, 16
      %v1657 = vshll.u32 %v1614, 16
      %v1659 = vrot.slane %v1657, 1
      %v1660 = vor.u32 %v1655, %v1659
      %v1662 = vshll.u32 %v1646, 16
      %v1664 = vrot.slane %v1662, 1
      %v1665 = vsel %vm343, %v1660, %v1664
      %v1667 = vshrl.u32 %v1615, 16
      %v1669 = vshll.u32 %v1615, 16
      %v1671 = vrot.slane %v1669, 1
      %v1672 = vor.u32 %v1667, %v1671
      %v1674 = vshll.u32 %v1647, 16
      %v1676 = vrot.slane %v1674, 1
      %v1677 = vsel %vm343, %v1672, %v1676
      %v1679 = vshrl.u32 %v1616, 16
      %v1681 = vshll.u32 %v1616, 16
      %v1683 = vrot.slane %v1681, 1
      %v1684 = vor.u32 %v1679, %v1683
      %v1686 = vshll.u32 %v1648, 16
      %v1688 = vrot.slane %v1686, 1
      %v1689 = vsel %vm343, %v1684, %v1688
      %v1691 = vshrl.u32 %v1617, 16
      %v1693 = vshll.u32 %v1617, 16
      %v1695 = vrot.slane %v1693, 1
      %v1696 = vor.u32 %v1691, %v1695
      %v1698 = vshll.u32 %v1649, 16
      %v1700 = vrot.slane %v1698, 1
      %v1701 = vsel %vm343, %v1696, %v1700
      %v1703 = vshrl.u32 %v1618, 16
      %v1705 = vshll.u32 %v1618, 16
      %v1707 = vrot.slane %v1705, 1
      %v1708 = vor.u32 %v1703, %v1707
      %v1710 = vshll.u32 %v1650, 16
      %v1712 = vrot.slane %v1710, 1
      %v1713 = vsel %vm343, %v1708, %v1712
      %v1715 = vshrl.u32 %v1619, 16
      %v1717 = vshll.u32 %v1619, 16
      %v1719 = vrot.slane %v1717, 1
      %v1720 = vor.u32 %v1715, %v1719
      %v1722 = vshll.u32 %v1651, 16
      %v1724 = vrot.slane %v1722, 1
      %v1725 = vsel %vm343, %v1720, %v1724
      %v1727 = vshrl.u32 %v1620, 16
      %v1729 = vshll.u32 %v1620, 16
      %v1731 = vrot.slane %v1729, 1
      %v1732 = vor.u32 %v1727, %v1731
      %v1734 = vshll.u32 %v1652, 16
      %v1736 = vrot.slane %v1734, 1
      %v1737 = vsel %vm343, %v1732, %v1736
      %v1739 = vshrl.u32 %v1621, 16
      %v1741 = vshll.u32 %v1621, 16
      %v1743 = vrot.slane %v1741, 1
      %v1744 = vor.u32 %v1739, %v1743
      %v1746 = vshll.u32 %v1653, 16
      %v1748 = vrot.slane %v1746, 1
      %v1749 = vsel %vm343, %v1744, %v1748
      %v1758 = vrot.slane %v1614, 1
      %v1759 = vrot.slane %v1646, 1
      %v1760 = vsel %vm448, %v1758, %v1759
      %v1761 = vrot.slane %v1615, 1
      %v1762 = vrot.slane %v1647, 1
      %v1763 = vsel %vm448, %v1761, %v1762
      %v1764 = vrot.slane %v1616, 1
      %v1765 = vrot.slane %v1648, 1
      %v1766 = vsel %vm448, %v1764, %v1765
      %v1767 = vrot.slane %v1617, 1
      %v1768 = vrot.slane %v1649, 1
      %v1769 = vsel %vm448, %v1767, %v1768
      %v1770 = vrot.slane %v1618, 1
      %v1771 = vrot.slane %v1650, 1
      %v1772 = vsel %vm448, %v1770, %v1771
      %v1773 = vrot.slane %v1619, 1
      %v1774 = vrot.slane %v1651, 1
      %v1775 = vsel %vm448, %v1773, %v1774
      %v1776 = vrot.slane %v1620, 1
      %v1777 = vrot.slane %v1652, 1
      %v1778 = vsel %vm448, %v1776, %v1777
      %v1779 = vrot.slane %v1621, 1
      %v1780 = vrot.slane %v1653, 1
      %v1781 = vsel %vm448, %v1779, %v1780
      %s1790 = scalar_lea.vmem %s224, 384
      %v1791 = vld [vmem:[%s1790] sm:$0xf]
      %v1792 = vld [vmem:[%s1790 + $0x4] sm:$0xf]
      %v1793 = vld [vmem:[%s1790 + $0x8] sm:$0xf]
      %v1794 = vld [vmem:[%s1790 + $0xc] sm:$0xf]
      %v1795 = vld [vmem:[%s1790 + $0x10] sm:$0xf]
      %v1796 = vld [vmem:[%s1790 + $0x14] sm:$0xf]
      %v1797 = vld [vmem:[%s1790 + $0x18] sm:$0xf]
      %v1798 = vld [vmem:[%s1790 + $0x1c] sm:$0xf]
      %v1799 = vld [vmem:[%s1790 + $0x20] sm:$0xf]
      %v1800 = vld [vmem:[%s1790 + $0x24] sm:$0xf]
      %v1801 = vld [vmem:[%s1790 + $0x28] sm:$0xf]
      %v1802 = vld [vmem:[%s1790 + $0x2c] sm:$0xf]
      %v1803 = vld [vmem:[%s1790 + $0x30] sm:$0xf]
      %v1804 = vld [vmem:[%s1790 + $0x34] sm:$0xf]
      %v1805 = vld [vmem:[%s1790 + $0x38] sm:$0xf]
      %v1806 = vld [vmem:[%s1790 + $0x3c] sm:$0xf]
      %v1807 = vld [vmem:[%s1790 + $0x40] sm:$0xf]
      %v1808 = vld [vmem:[%s1790 + $0x44] sm:$0xf]
      %v1809 = vld [vmem:[%s1790 + $0x48] sm:$0xf]
      %v1810 = vld [vmem:[%s1790 + $0x4c] sm:$0xf]
      %v1811 = vld [vmem:[%s1790 + $0x50] sm:$0xf]
      %v1812 = vld [vmem:[%s1790 + $0x54] sm:$0xf]
      %v1813 = vld [vmem:[%s1790 + $0x58] sm:$0xf]
      %v1814 = vld [vmem:[%s1790 + $0x5c] sm:$0xf]
      %v1815 = vld [vmem:[%s1790 + $0x60] sm:$0xf]
      %v1816 = vld [vmem:[%s1790 + $0x64] sm:$0xf]
      %v1817 = vld [vmem:[%s1790 + $0x68] sm:$0xf]
      %v1818 = vld [vmem:[%s1790 + $0x6c] sm:$0xf]
      %v1819 = vld [vmem:[%s1790 + $0x70] sm:$0xf]
      %v1820 = vld [vmem:[%s1790 + $0x74] sm:$0xf]
      %v1821 = vld [vmem:[%s1790 + $0x78] sm:$0xf]
      %v1822 = vld [vmem:[%s1790 + $0x7c] sm:$0xf]
      %v1823 = vld [vmem:[%s1790 + $0x80] sm:$0xf]
      %v1824 = vld [vmem:[%s1790 + $0x84] sm:$0xf]
      %v1825 = vld [vmem:[%s1790 + $0x88] sm:$0xf]
      %v1826 = vld [vmem:[%s1790 + $0x8c] sm:$0xf]
      %v1827 = vld [vmem:[%s1790 + $0x90] sm:$0xf]
      %v1828 = vld [vmem:[%s1790 + $0x94] sm:$0xf]
      %v1829 = vld [vmem:[%s1790 + $0x98] sm:$0xf]
      %v1830 = vld [vmem:[%s1790 + $0x9c] sm:$0xf]
      %v1831 = vld [vmem:[%s1790 + $0xa0] sm:$0xf]
      %v1832 = vld [vmem:[%s1790 + $0xa4] sm:$0xf]
      %v1833 = vld [vmem:[%s1790 + $0xa8] sm:$0xf]
      %v1834 = vld [vmem:[%s1790 + $0xac] sm:$0xf]
      %v1835 = vld [vmem:[%s1790 + $0xb0] sm:$0xf]
      %v1836 = vld [vmem:[%s1790 + $0xb4] sm:$0xf]
      %v1837 = vld [vmem:[%s1790 + $0xb8] sm:$0xf]
      %v1838 = vld [vmem:[%s1790 + $0xbc] sm:$0xf]
      %v1887 = vunpack.c.l.b16 %v1791
      %v1888 = vunpack.c.l.b16 %v1792
      %v1889 = vunpack.c.l.b16 %v1793
      %v1890 = vunpack.c.l.b16 %v1794
      %v1891 = vunpack.c.l.b16 %v1795
      %v1892 = vunpack.c.l.b16 %v1796
      %v1893 = vunpack.c.l.b16 %v1797
      %v1894 = vunpack.c.l.b16 %v1798
      %v1895 = vunpack.c.l.b16 %v1799
      %v1896 = vunpack.c.l.b16 %v1800
      %v1897 = vunpack.c.l.b16 %v1801
      %v1898 = vunpack.c.l.b16 %v1802
      %v1899 = vunpack.c.l.b16 %v1803
      %v1900 = vunpack.c.l.b16 %v1804
      %v1901 = vunpack.c.l.b16 %v1805
      %v1902 = vunpack.c.l.b16 %v1806
      %v1903 = vunpack.c.l.b16 %v1807
      %v1904 = vunpack.c.l.b16 %v1808
      %v1905 = vunpack.c.l.b16 %v1809
      %v1906 = vunpack.c.l.b16 %v1810
      %v1907 = vunpack.c.l.b16 %v1811
      %v1908 = vunpack.c.l.b16 %v1812
      %v1909 = vunpack.c.l.b16 %v1813
      %v1910 = vunpack.c.l.b16 %v1814
      %v1911 = vunpack.c.l.b16 %v1815
      %v1912 = vunpack.c.l.b16 %v1816
      %v1913 = vunpack.c.l.b16 %v1817
      %v1914 = vunpack.c.l.b16 %v1818
      %v1915 = vunpack.c.l.b16 %v1819
      %v1916 = vunpack.c.l.b16 %v1820
      %v1917 = vunpack.c.l.b16 %v1821
      %v1918 = vunpack.c.l.b16 %v1822
      %v1919 = vunpack.c.l.b16 %v1823
      %v1920 = vunpack.c.l.b16 %v1824
      %v1921 = vunpack.c.l.b16 %v1825
      %v1922 = vunpack.c.l.b16 %v1826
      %v1923 = vunpack.c.l.b16 %v1827
      %v1924 = vunpack.c.l.b16 %v1828
      %v1925 = vunpack.c.l.b16 %v1829
      %v1926 = vunpack.c.l.b16 %v1830
      %v1927 = vunpack.c.l.b16 %v1831
      %v1928 = vunpack.c.l.b16 %v1832
      %v1929 = vunpack.c.l.b16 %v1833
      %v1930 = vunpack.c.l.b16 %v1834
      %v1931 = vunpack.c.l.b16 %v1835
      %v1932 = vunpack.c.l.b16 %v1836
      %v1933 = vunpack.c.l.b16 %v1837
      %v1934 = vunpack.c.l.b16 %v1838
      %v1935 = vpack.c.b16 %v1888, %v1887
      %v1936 = vpack.c.b16 %v1890, %v1889
      %v1937 = vpack.c.b16 %v1892, %v1891
      %v1938 = vpack.c.b16 %v1894, %v1893
      %v1939 = vpack.c.b16 %v1896, %v1895
      %v1940 = vpack.c.b16 %v1898, %v1897
      %v1941 = vpack.c.b16 %v1900, %v1899
      %v1942 = vpack.c.b16 %v1902, %v1901
      %v1943 = vpack.c.b16 %v1904, %v1903
      %v1944 = vpack.c.b16 %v1906, %v1905
      %v1945 = vpack.c.b16 %v1908, %v1907
      %v1946 = vpack.c.b16 %v1910, %v1909
      %v1947 = vpack.c.b16 %v1912, %v1911
      %v1948 = vpack.c.b16 %v1914, %v1913
      %v1949 = vpack.c.b16 %v1916, %v1915
      %v1950 = vpack.c.b16 %v1918, %v1917
      %v1951 = vpack.c.b16 %v1920, %v1919
      %v1952 = vpack.c.b16 %v1922, %v1921
      %v1953 = vpack.c.b16 %v1924, %v1923
      %v1954 = vpack.c.b16 %v1926, %v1925
      %v1955 = vpack.c.b16 %v1928, %v1927
      %v1956 = vpack.c.b16 %v1930, %v1929
      %v1957 = vpack.c.b16 %v1932, %v1931
      %v1958 = vpack.c.b16 %v1934, %v1933
      %1983 = vmatprep.subr.bf16.mxu0 0
      %1984 = vmatpush1.bf16.msra.mxu0 %v1935
      %1985 = vmatprep.subr.bf16.mxu0 0
      %1986 = vmatpush1.bf16.msra.mxu0 %v1936
      %1987 = vmatprep.subr.bf16.mxu0 0
      %1988 = vmatpush1.bf16.msra.mxu0 %v1937
      %1989 = vmatprep.subr.bf16.mxu0 0
      %1990 = vmatpush1.bf16.msra.mxu0 %v1938
      %1991 = vmatprep.subr.bf16.mxu0 0
      %1992 = vmatpush1.bf16.msra.mxu0 %v1939
      %1993 = vmatprep.subr.bf16.mxu0 0
      %1994 = vmatpush1.bf16.msra.mxu0 %v1940
      %1995 = vmatprep.subr.bf16.mxu0 0
      %1996 = vmatpush1.bf16.msra.mxu0 %v1941
      %1997 = vmatprep.subr.bf16.mxu0 0
      %1998 = vmatpush1.bf16.msra.mxu0 %v1942
      %1999 = vmatprep.subr.bf16.mxu0 0
      %2000 = vmatpush1.bf16.msra.mxu0 %v1943
      %2001 = vmatprep.subr.bf16.mxu0 0
      %2002 = vmatpush1.bf16.msra.mxu0 %v1944
      %2003 = vmatprep.subr.bf16.mxu0 0
      %2004 = vmatpush1.bf16.msra.mxu0 %v1945
      %2005 = vmatprep.subr.bf16.mxu0 0
      %2006 = vmatpush1.bf16.msra.mxu0 %v1946
      %2007 = vmatprep.subr.bf16.mxu0 0
      %2008 = vmatpush1.bf16.msra.mxu0 %v1947
      %2009 = vmatprep.subr.bf16.mxu0 0
      %2010 = vmatpush1.bf16.msra.mxu0 %v1948
      %2011 = vmatprep.subr.bf16.mxu0 0
      %2012 = vmatpush1.bf16.msra.mxu0 %v1949
      %2013 = vmatprep.subr.bf16.mxu0 0
      %2014 = vmatpush1.bf16.msra.mxu0 %v1950
      %2015 = vmatprep.mubr.bf16.mxu0 %v1665
      %2016 = vmatmul.mubr.bf16.gmra.mrb[0].mxu0 %v1614
      %v2017 = vpop.f32.mrb[0].mxu0
      %v2018 = vadd.f32 0.0, %v2017
      %v2019 = vpop.f32.mrb[0].mxu0
      %v2020 = vpop.f32.mrb[0].mxu0
      %v2021 = vadd.f32 0.0, %v2020
      %v2022 = vpop.f32.mrb[0].mxu0
      %2023 = vmatprep.mubr.bf16.mxu0 %v1677
      %2024 = vmatmul.mubr.bf16.gmra.mrb[0].mxu0 %v1615
      %v2025 = vpop.f32.mrb[0].mxu0
      %v2026 = vadd.f32 0.0, %v2025
      %v2027 = vpop.f32.mrb[0].mxu0
      %v2028 = vpop.f32.mrb[0].mxu0
      %v2029 = vadd.f32 0.0, %v2028
      %v2030 = vpop.f32.mrb[0].mxu0
      %2031 = vmatprep.mubr.bf16.mxu0 %v1689
      %2032 = vmatmul.mubr.bf16.gmra.mrb[0].mxu0 %v1616
      %v2033 = vpop.f32.mrb[0].mxu0
      %v2034 = vadd.f32 0.0, %v2033
      %v2035 = vpop.f32.mrb[0].mxu0
      %v2036 = vpop.f32.mrb[0].mxu0
      %v2037 = vadd.f32 0.0, %v2036
      %v2038 = vpop.f32.mrb[0].mxu0
      %2039 = vmatprep.mubr.bf16.mxu0 %v1701
      %2040 = vmatmul.mubr.bf16.gmra.mrb[0].mxu0 %v1617
      %v2041 = vpop.f32.mrb[0].mxu0
      %v2042 = vadd.f32 0.0, %v2041
      %v2043 = vpop.f32.mrb[0].mxu0
      %v2044 = vpop.f32.mrb[0].mxu0
      %v2045 = vadd.f32 0.0, %v2044
      %v2046 = vpop.f32.mrb[0].mxu0
      %2047 = vmatprep.mubr.bf16.mxu0 %v1713
      %2048 = vmatmul.mubr.bf16.gmra.mrb[0].mxu0 %v1618
      %v2049 = vpop.f32.mrb[0].mxu0
      %v2050 = vadd.f32 0.0, %v2049
      %v2051 = vpop.f32.mrb[0].mxu0
      %v2052 = vpop.f32.mrb[0].mxu0
      %v2053 = vadd.f32 0.0, %v2052
      %v2054 = vpop.f32.mrb[0].mxu0
      %2055 = vmatprep.mubr.bf16.mxu0 %v1725
      %2056 = vmatmul.mubr.bf16.gmra.mrb[0].mxu0 %v1619
      %v2057 = vpop.f32.mrb[0].mxu0
      %v2058 = vadd.f32 0.0, %v2057
      %v2059 = vpop.f32.mrb[0].mxu0
      %v2060 = vpop.f32.mrb[0].mxu0
      %v2061 = vadd.f32 0.0, %v2060
      %v2062 = vpop.f32.mrb[0].mxu0
      %2063 = vmatprep.mubr.bf16.mxu0 %v1737
      %2064 = vmatmul.mubr.bf16.gmra.mrb[0].mxu0 %v1620
      %v2065 = vpop.f32.mrb[0].mxu0
      %v2066 = vadd.f32 0.0, %v2065
      %v2067 = vpop.f32.mrb[0].mxu0
      %v2068 = vpop.f32.mrb[0].mxu0
      %v2069 = vadd.f32 0.0, %v2068
      %v2070 = vpop.f32.mrb[0].mxu0
      %2071 = vmatprep.mubr.bf16.mxu0 %v1749
      %2072 = vmatmul.mubr.bf16.gmra.mrb[0].mxu0 %v1621
      %v2073 = vpop.f32.mrb[0].mxu0
      %v2074 = vadd.f32 0.0, %v2073
      %v2075 = vpop.f32.mrb[0].mxu0
      %v2076 = vpop.f32.mrb[0].mxu0
      %v2077 = vadd.f32 0.0, %v2076
      %v2078 = vpop.f32.mrb[0].mxu0
      %2079 = vdwg.mxu0
      %2080 = vmatprep.subr.bf16.mxu0 0
      %2081 = vmatpush1.bf16.msra.mxu0 %v1951
      %2082 = vmatprep.subr.bf16.mxu0 0
      %2083 = vmatpush1.bf16.msra.mxu0 %v1952
      %2084 = vmatprep.subr.bf16.mxu0 0
      %2085 = vmatpush1.bf16.msra.mxu0 %v1953
      %2086 = vmatprep.subr.bf16.mxu0 0
      %2087 = vmatpush1.bf16.msra.mxu0 %v1954
      %2088 = vmatprep.subr.bf16.mxu0 0
      %2089 = vmatpush1.bf16.msra.mxu0 %v1955
      %2090 = vmatprep.subr.bf16.mxu0 0
      %2091 = vmatpush1.bf16.msra.mxu0 %v1956
      %2092 = vmatprep.subr.bf16.mxu0 0
      %2093 = vmatpush1.bf16.msra.mxu0 %v1957
      %2094 = vmatprep.subr.bf16.mxu0 0
      %2095 = vmatpush1.bf16.msra.mxu0 %v1958
      %2096 = vmatprep.subr.bf16.mxu0 0
      %2097 = vmatpush1.bf16.msra.mxu0 0
      %2098 = vmatprep.subr.bf16.mxu0 0
      %2099 = vmatpush1.bf16.msra.mxu0 0
      %2100 = vmatprep.subr.bf16.mxu0 0
      %2101 = vmatpush1.bf16.msra.mxu0 0
      %2102 = vmatprep.subr.bf16.mxu0 0
      %2103 = vmatpush1.bf16.msra.mxu0 0
      %2104 = vmatprep.subr.bf16.mxu0 0
      %2105 = vmatpush1.bf16.msra.mxu0 0
      %2106 = vmatprep.subr.bf16.mxu0 0
      %2107 = vmatpush1.bf16.msra.mxu0 0
      %2108 = vmatprep.subr.bf16.mxu0 0
      %2109 = vmatpush1.bf16.msra.mxu0 0
      %2110 = vmatprep.subr.bf16.mxu0 0
      %2111 = vmatpush1.bf16.msra.mxu0 0
      %2112 = vmatprep.mubr.bf16.mxu0 0
      %2113 = vmatmul.mubr.bf16.gmra.mrb[0].mxu0 %v1760
      %v2114 = vpop.f32.mrb[0].mxu0
      %v2115 = vadd.f32 %v2018, %v2114
      %v2116 = vpop.f32.mrb[0].mxu0
      %v2117 = vpop.f32.mrb[0].mxu0
      %v2118 = vadd.f32 %v2021, %v2117
      %v2119 = vpop.f32.mrb[0].mxu0
      %2120 = vmatprep.mubr.bf16.mxu0 0
      %2121 = vmatmul.mubr.bf16.gmra.mrb[0].mxu0 %v1763
      %v2122 = vpop.f32.mrb[0].mxu0
      %v2123 = vadd.f32 %v2026, %v2122
      %v2124 = vpop.f32.mrb[0].mxu0
      %v2125 = vpop.f32.mrb[0].mxu0
      %v2126 = vadd.f32 %v2029, %v2125
      %v2127 = vpop.f32.mrb[0].mxu0
      %2128 = vmatprep.mubr.bf16.mxu0 0
      %2129 = vmatmul.mubr.bf16.gmra.mrb[0].mxu0 %v1766
      %v2130 = vpop.f32.mrb[0].mxu0
      %v2131 = vadd.f32 %v2034, %v2130
      %v2132 = vpop.f32.mrb[0].mxu0
      %v2133 = vpop.f32.mrb[0].mxu0
      %v2134 = vadd.f32 %v2037, %v2133
      %v2135 = vpop.f32.mrb[0].mxu0
      %2136 = vmatprep.mubr.bf16.mxu0 0
      %2137 = vmatmul.mubr.bf16.gmra.mrb[0].mxu0 %v1769
      %v2138 = vpop.f32.mrb[0].mxu0
      %v2139 = vadd.f32 %v2042, %v2138
      %v2140 = vpop.f32.mrb[0].mxu0
      %v2141 = vpop.f32.mrb[0].mxu0
      %v2142 = vadd.f32 %v2045, %v2141
      %v2143 = vpop.f32.mrb[0].mxu0
      %2144 = vmatprep.mubr.bf16.mxu0 0
      %2145 = vmatmul.mubr.bf16.gmra.mrb[0].mxu0 %v1772
      %v2146 = vpop.f32.mrb[0].mxu0
      %v2147 = vadd.f32 %v2050, %v2146
      %v2148 = vpop.f32.mrb[0].mxu0
      %v2149 = vpop.f32.mrb[0].mxu0
      %v2150 = vadd.f32 %v2053, %v2149
      %v2151 = vpop.f32.mrb[0].mxu0
      %2152 = vmatprep.mubr.bf16.mxu0 0
      %2153 = vmatmul.mubr.bf16.gmra.mrb[0].mxu0 %v1775
      %v2154 = vpop.f32.mrb[0].mxu0
      %v2155 = vadd.f32 %v2058, %v2154
      %v2156 = vpop.f32.mrb[0].mxu0
      %v2157 = vpop.f32.mrb[0].mxu0
      %v2158 = vadd.f32 %v2061, %v2157
      %v2159 = vpop.f32.mrb[0].mxu0
      %2160 = vmatprep.mubr.bf16.mxu0 0
      %2161 = vmatmul.mubr.bf16.gmra.mrb[0].mxu0 %v1778
      %v2162 = vpop.f32.mrb[0].mxu0
      %v2163 = vadd.f32 %v2066, %v2162
      %v2164 = vpop.f32.mrb[0].mxu0
      %v2165 = vpop.f32.mrb[0].mxu0
      %v2166 = vadd.f32 %v2069, %v2165
      %v2167 = vpop.f32.mrb[0].mxu0
      %2168 = vmatprep.mubr.bf16.mxu0 0
      %2169 = vmatmul.mubr.bf16.gmra.mrb[0].mxu0 %v1781
      %v2170 = vpop.f32.mrb[0].mxu0
      %v2171 = vadd.f32 %v2074, %v2170
      %v2172 = vpop.f32.mrb[0].mxu0
      %v2173 = vpop.f32.mrb[0].mxu0
      %v2174 = vadd.f32 %v2077, %v2173
      %v2175 = vpop.f32.mrb[0].mxu0
      %2176 = vdwg.mxu0
      %v2177 = vld [vmem:[#allocation2] sm:$0xff]
      %v2178 = vld [vmem:[#allocation2 + $0x8] sm:$0xff]
      %v2179 = vld [vmem:[#allocation2 + $0x10] sm:$0xff]
      %v2180 = vld [vmem:[#allocation2 + $0x18] sm:$0xff]
      %v2181 = vld [vmem:[#allocation2 + $0x20] sm:$0xff]
      %v2182 = vld [vmem:[#allocation2 + $0x28] sm:$0xff]
      %v2183 = vld [vmem:[#allocation2 + $0x30] sm:$0xff]
      %v2184 = vld [vmem:[#allocation2 + $0x38] sm:$0xff]
      %v2185 = vld [vmem:[#allocation2 + $0x40] sm:$0xff]
      %v2186 = vld [vmem:[#allocation2 + $0x48] sm:$0xff]
      %v2187 = vld [vmem:[#allocation2 + $0x50] sm:$0xff]
      %v2188 = vld [vmem:[#allocation2 + $0x58] sm:$0xff]
      %v2189 = vld [vmem:[#allocation2 + $0x60] sm:$0xff]
      %v2190 = vld [vmem:[#allocation2 + $0x68] sm:$0xff]
      %v2191 = vld [vmem:[#allocation2 + $0x70] sm:$0xff]
      %v2192 = vld [vmem:[#allocation2 + $0x78] sm:$0xff]
      %v2193 = vadd.f32 %v2177, %v2115
      %v2194 = vadd.f32 %v2178, %v2118
      %v2195 = vadd.f32 %v2179, %v2123
      %v2196 = vadd.f32 %v2180, %v2126
      %v2197 = vadd.f32 %v2181, %v2131
      %v2198 = vadd.f32 %v2182, %v2134
      %v2199 = vadd.f32 %v2183, %v2139
      %v2200 = vadd.f32 %v2184, %v2142
      %v2201 = vadd.f32 %v2185, %v2147
      %v2202 = vadd.f32 %v2186, %v2150
      %v2203 = vadd.f32 %v2187, %v2155
      %v2204 = vadd.f32 %v2188, %v2158
      %v2205 = vadd.f32 %v2189, %v2163
      %v2206 = vadd.f32 %v2190, %v2166
      %v2207 = vadd.f32 %v2191, %v2171
      %v2208 = vadd.f32 %v2192, %v2174
      %2209 = vst [vmem:[#allocation2] sm:$0xff] %v2193
      %2210 = vst [vmem:[#allocation2 + $0x8] sm:$0xff] %v2194
      %2211 = vst [vmem:[#allocation2 + $0x10] sm:$0xff] %v2195
      %2212 = vst [vmem:[#allocation2 + $0x18] sm:$0xff] %v2196
      %2213 = vst [vmem:[#allocation2 + $0x20] sm:$0xff] %v2197
      %2214 = vst [vmem:[#allocation2 + $0x28] sm:$0xff] %v2198
      %2215 = vst [vmem:[#allocation2 + $0x30] sm:$0xff] %v2199
      %2216 = vst [vmem:[#allocation2 + $0x38] sm:$0xff] %v2200
      %2217 = vst [vmem:[#allocation2 + $0x40] sm:$0xff] %v2201
      %2218 = vst [vmem:[#allocation2 + $0x48] sm:$0xff] %v2202
      %2219 = vst [vmem:[#allocation2 + $0x50] sm:$0xff] %v2203
      %2220 = vst [vmem:[#allocation2 + $0x58] sm:$0xff] %v2204
      %2221 = vst [vmem:[#allocation2 + $0x60] sm:$0xff] %v2205
      %2222 = vst [vmem:[#allocation2 + $0x68] sm:$0xff] %v2206
      %2223 = vst [vmem:[#allocation2 + $0x70] sm:$0xff] %v2207
      %2224 = vst [vmem:[#allocation2 + $0x78] sm:$0xff] %v2208
      %v2225 = vld [vmem:[#allocation2] sm:$0xff]
      %v2226 = vld [vmem:[#allocation2 + $0x8] sm:$0xff]
      %v2227 = vld [vmem:[#allocation2 + $0x10] sm:$0xff]
      %v2228 = vld [vmem:[#allocation2 + $0x18] sm:$0xff]
      %v2229 = vld [vmem:[#allocation2 + $0x20] sm:$0xff]
      %v2230 = vld [vmem:[#allocation2 + $0x28] sm:$0xff]
      %v2231 = vld [vmem:[#allocation2 + $0x30] sm:$0xff]
      %v2232 = vld [vmem:[#allocation2 + $0x38] sm:$0xff]
      %v2233 = vld [vmem:[#allocation2 + $0x40] sm:$0xff]
      %v2234 = vld [vmem:[#allocation2 + $0x48] sm:$0xff]
      %v2235 = vld [vmem:[#allocation2 + $0x50] sm:$0xff]
      %v2236 = vld [vmem:[#allocation2 + $0x58] sm:$0xff]
      %v2237 = vld [vmem:[#allocation2 + $0x60] sm:$0xff]
      %v2238 = vld [vmem:[#allocation2 + $0x68] sm:$0xff]
      %v2239 = vld [vmem:[#allocation2 + $0x70] sm:$0xff]
      %v2240 = vld [vmem:[#allocation2 + $0x78] sm:$0xff]
      %v2241 = vld [vmem:[%s227] sm:$0x1]
      %v2243 = vlaneseq
      %v2244 = vshrl.u32 %v2243, 7
      %v2245 = vsub.s32 0, %v2244
      %v2246 = vrot.slane %v2241, %v2245
      %v2248 = vadd.f32 %v2225, %v2246
      %v2249 = vadd.f32 %v2226, %v2246
      %v2250 = vadd.f32 %v2227, %v2246
      %v2251 = vadd.f32 %v2228, %v2246
      %v2252 = vadd.f32 %v2229, %v2246
      %v2253 = vadd.f32 %v2230, %v2246
      %v2254 = vadd.f32 %v2231, %v2246
      %v2255 = vadd.f32 %v2232, %v2246
      %v2256 = vadd.f32 %v2233, %v2246
      %v2257 = vadd.f32 %v2234, %v2246
      %v2258 = vadd.f32 %v2235, %v2246
      %v2259 = vadd.f32 %v2236, %v2246
      %v2260 = vadd.f32 %v2237, %v2246
      %v2261 = vadd.f32 %v2238, %v2246
      %v2262 = vadd.f32 %v2239, %v2246
      %v2263 = vadd.f32 %v2240, %v2246
      %v2264 = vmax.f32 %v2248, 0.0
      %v2265 = vmax.f32 %v2249, 0.0
      %v2266 = vmax.f32 %v2250, 0.0
      %v2267 = vmax.f32 %v2251, 0.0
      %v2268 = vmax.f32 %v2252, 0.0
      %v2269 = vmax.f32 %v2253, 0.0
      %v2270 = vmax.f32 %v2254, 0.0
      %v2271 = vmax.f32 %v2255, 0.0
      %v2272 = vmax.f32 %v2256, 0.0
      %v2273 = vmax.f32 %v2257, 0.0
      %v2274 = vmax.f32 %v2258, 0.0
      %v2275 = vmax.f32 %v2259, 0.0
      %v2276 = vmax.f32 %v2260, 0.0
      %v2277 = vmax.f32 %v2261, 0.0
      %v2278 = vmax.f32 %v2262, 0.0
      %v2279 = vmax.f32 %v2263, 0.0
      %v2280 = vpack.c.bf16 %v2265, %v2264
      %v2281 = vpack.c.bf16 %v2267, %v2266
      %v2282 = vpack.c.bf16 %v2269, %v2268
      %v2283 = vpack.c.bf16 %v2271, %v2270
      %v2284 = vpack.c.bf16 %v2273, %v2272
      %v2285 = vpack.c.bf16 %v2275, %v2274
      %v2286 = vpack.c.bf16 %v2277, %v2276
      %v2287 = vpack.c.bf16 %v2279, %v2278
      %v2296 = vunpack.c.l.b16 %v2280
      %v2297 = vunpack.c.h.b16 %v2280
      %v2298 = vunpack.c.l.b16 %v2281
      %v2299 = vunpack.c.h.b16 %v2281
      %v2300 = vunpack.c.l.b16 %v2282
      %v2301 = vunpack.c.h.b16 %v2282
      %v2302 = vunpack.c.l.b16 %v2283
      %v2303 = vunpack.c.h.b16 %v2283
      %v2304 = vunpack.c.l.b16 %v2284
      %v2305 = vunpack.c.h.b16 %v2284
      %v2306 = vunpack.c.l.b16 %v2285
      %v2307 = vunpack.c.h.b16 %v2285
      %v2308 = vunpack.c.l.b16 %v2286
      %v2309 = vunpack.c.h.b16 %v2286
      %v2310 = vunpack.c.l.b16 %v2287
      %v2311 = vunpack.c.h.b16 %v2287
      %v2312 = vpack.c.b16 %v2296, %v2296
      %v2313 = vpack.c.b16 %v2297, %v2297
      %v2314 = vpack.c.b16 %v2298, %v2298
      %v2315 = vpack.c.b16 %v2299, %v2299
      %v2316 = vpack.c.b16 %v2300, %v2300
      %v2317 = vpack.c.b16 %v2301, %v2301
      %v2318 = vpack.c.b16 %v2302, %v2302
      %v2319 = vpack.c.b16 %v2303, %v2303
      %v2320 = vpack.c.b16 %v2304, %v2304
      %v2321 = vpack.c.b16 %v2305, %v2305
      %v2322 = vpack.c.b16 %v2306, %v2306
      %v2323 = vpack.c.b16 %v2307, %v2307
      %v2324 = vpack.c.b16 %v2308, %v2308
      %v2325 = vpack.c.b16 %v2309, %v2309
      %v2326 = vpack.c.b16 %v2310, %v2310
      %v2327 = vpack.c.b16 %v2311, %v2311
      %2344 = vst [vmem:[%s240] sm:$0xf] %v2312
      %2345 = vst [vmem:[%s240 + $0x4] sm:$0xf] %v2313
      %2346 = vst [vmem:[%s240 + $0x8] sm:$0xf] %v2314
      %2347 = vst [vmem:[%s240 + $0xc] sm:$0xf] %v2315
      %2348 = vst [vmem:[%s240 + $0x10] sm:$0xf] %v2316
      %2349 = vst [vmem:[%s240 + $0x14] sm:$0xf] %v2317
      %2350 = vst [vmem:[%s240 + $0x18] sm:$0xf] %v2318
      %2351 = vst [vmem:[%s240 + $0x1c] sm:$0xf] %v2319
      %2352 = vst [vmem:[%s240 + $0x20] sm:$0xf] %v2320
      %2353 = vst [vmem:[%s240 + $0x24] sm:$0xf] %v2321
      %2354 = vst [vmem:[%s240 + $0x28] sm:$0xf] %v2322
      %2355 = vst [vmem:[%s240 + $0x2c] sm:$0xf] %v2323
      %2356 = vst [vmem:[%s240 + $0x30] sm:$0xf] %v2324
      %2357 = vst [vmem:[%s240 + $0x34] sm:$0xf] %v2325
      %2358 = vst [vmem:[%s240 + $0x38] sm:$0xf] %v2326
      %2359 = vst [vmem:[%s240 + $0x3c] sm:$0xf] %v2327
      %s2360 = smul.u32 8, %s21
      %p2361 = scmp.lt.s32.totalorder %s19, 1
      %s2362 = scalar_select %p2361, %s19, 1
      %p2363 = scmp.lt.s32.totalorder %s2360, 15
      %s2364 = scalar_select %p2363, %s2360, 15
      %p2365 = scmp.lt.s32.totalorder %s20, 0
      %s2366 = scalar_select %p2365, %s20, 0
      %s2367 = smul.addr %s2364, 2
      %s2368 = sadd.s32 %s2366, %s2367
      %s2369 = smul.addr %s2362, 32
      %s2370 = sadd.s32 %s2368, %s2369
      %s2371 = smul.addr %s2370, 4
      %s2372 = scalar_lea.vmem %s3, %s2371
      // Predicated region
      $region33: #{bottleneck_forward.4} parent=31 // pred_check
        %p2373 = pneg %p133
      $region34: #{bottleneck_forward.4} parent=31 // pred_check_branch
        %2375 = sbr.rel (%p2373) target = $region36
      $region35: #{bottleneck_forward.4} parent=31 // pred_region
        %s2376 = smul.u32 8, %s21
      $region36: #{bottleneck_forward.4} parent=31 // pred_fallthru
        _
    $region32: #{bottleneck_forward.4} parent=5 // pred_fallthru
      _
    %p2377 = scmp.le.s32.totalorder 2, %s9
    // Predicated region
    $region37: #{bottleneck_forward.4} parent=5 // pred_check
      %p2378 = pneg %p2377
    $region38: #{bottleneck_forward.4} parent=5 // pred_check_branch
      %2380 = sbr.rel (%p2378) target = $region40
    $region39: #{bottleneck_forward.4} parent=5 // pred_region
      %s2381 = ssub.s32 %s9, 2
      // Predicated region
      $region41: #{bottleneck_forward.4} parent=39 // pred_check
        %p2382 = pneg %p139
      $region42: #{bottleneck_forward.4} parent=39 // pred_check_branch
        %2384 = sbr.rel (%p2382) target = $region44
      $region43: #{bottleneck_forward.4} parent=39 // pred_region
        %s2385 = smul.u32 8, %s24
        %p2386 = scmp.lt.s32.totalorder %s22, 1
        %s2387 = scalar_select %p2386, %s22, 1
        %p2388 = scmp.lt.s32.totalorder %s2385, 15
        %s2389 = scalar_select %p2388, %s2385, 15
        %p2390 = scmp.lt.s32.totalorder %s23, 0
        %s2391 = scalar_select %p2390, %s23, 0
        %s2392 = smul.addr %s2389, 2
        %s2393 = sadd.s32 %s2391, %s2392
        %s2394 = smul.addr %s2387, 32
        %s2395 = sadd.s32 %s2393, %s2394
        %s2396 = smul.addr %s2395, 4
        %s2397 = scalar_lea.vmem %s3, %s2396
      $region44: #{bottleneck_forward.4} parent=39 // pred_fallthru
        _
    $region40: #{bottleneck_forward.4} parent=5 // pred_fallthru
      _
  $region6: #{bottleneck_forward.4} parent=0 // loop_footer
    %s13 = sadd.s32 1, %s9
  $region7: #{bottleneck_forward.4} parent=0 // loop_footer_branch
    %8 = sbr.rel target = $region3
  $region8: #{bottleneck_forward.4} parent=0 // loop_exit
    _

</llo_original>
